<compile_context>
chip_gen: v5e
topology: v5e:2x2
jax: 0.10.0
libtpu: 0.0.40
codegen_flags: <defaults>
</compile_context>

<pallas_src>
import functools
from itertools import combinations_with_replacement
from math import comb

import jax
import jax.numpy as jnp
from jax.experimental import pallas as pl
from jax.experimental.pallas import tpu as pltpu


def library_size(latent_dim, poly_order, include_sine):
    """Number of columns in the SINDy feature library (with constant term)."""
    l = 0
    for k in range(poly_order + 1):
        l += comb(latent_dim + k - 1, k)
    if include_sine:
        l += latent_dim
    return l


def _poly_combos(latent_dim, poly_order):
    """Index tuples (i <= j <= k <= ...) for polynomial terms of order >= 2,
    in ascending order length (matches the canonical sindy_library ordering)."""
    combos = []
    for order in range(2, poly_order + 1):
        combos.extend(combinations_with_replacement(range(latent_dim), order))
    return combos


def _round_up(x, m):
    return ((x + m - 1) // m) * m


def _e_sindy_kernel(cm_ref, h_ref, o_ref, *, num_rep, latent_dim, poly_order,
                    include_sine, library_dim):
    """One grid step processes a (R, L, TILE_S, 128) tile of latent states.

    cm_ref: (R * library_dim * latent_dim,) f32 in SMEM -- pre-masked
            coefficients with dt folded in, flattened as (r, term, l).
    h_ref:  (R, L, TILE_S, 128) latent states (dense sublane/lane tiles).
    o_ref:  (R, L, TILE_S, 128) updated latent states.
    """
    combos = _poly_combos(latent_dim, poly_order)

    def cm(r, t, l):
        # Scalar read from SMEM; broadcasts into vector ops via the scalar path.
        return cm_ref[(r * library_dim + t) * latent_dim + l]

    for r in range(num_rep):                             # static unroll (small R)
        zi = [h_ref[r, i].astype(jnp.float32) for i in range(latent_dim)]

        # out[l] = z_l + sum_t cm_dt[r, t, l] * theta_t(z); constant term first
        out = [zi[l] + cm(r, 0, l) for l in range(latent_dim)]
        t = 1
        # linear terms
        for i in range(latent_dim):
            for l in range(latent_dim):
                out[l] = out[l] + cm(r, t, l) * zi[i]
            t += 1
        # polynomial terms (order >= 2), reusing lower-order partial products
        cache = {(i,): zi[i] for i in range(latent_dim)}
        for combo in combos:                             # ascending order length
            term = cache[combo[:-1]] * zi[combo[-1]]
            cache[combo] = term
            for l in range(latent_dim):
                out[l] = out[l] + cm(r, t, l) * term
            t += 1
        # sine terms (EUP slot, overlaps with VALU work)
        if include_sine:
            for i in range(latent_dim):
                s = jnp.sin(zi[i])
                for l in range(latent_dim):
                    out[l] = out[l] + cm(r, t, l) * s
                t += 1
        assert t == library_dim                          # trace-time sanity check

        # Full (TILE_S, 128) tile-aligned stores -> unmasked vst.
        for l in range(latent_dim):
            o_ref[r, l] = out[l].astype(o_ref.dtype)


def e_sindy_forward(h_replicates, coefficients, coefficient_mask, dt,
                    poly_order, include_sine, *, max_tile_s=128):
    """Pallas implementation of E_SINDy.forward.

    h_replicates:     (num_data, num_replicates, latent_dim)
    coefficients:     (num_replicates, library_dim, latent_dim)
    coefficient_mask: (num_replicates, library_dim, latent_dim)
    returns:          (num_data, num_replicates, latent_dim)

    max_tile_s: number of 128-wide sublane rows per grid step (128 -> 16K
    points/step, ~3 MB working set: safe on v5e/v6e and on v7x's 64 MiB VMEM).
    """
    num_data, num_rep, latent_dim = h_replicates.shape
    library_dim = coefficients.shape[1]
    expected = library_size(latent_dim, poly_order, include_sine)
    if library_dim != expected:
        raise ValueError(
            f"library_dim={library_dim} inconsistent with latent_dim="
            f"{latent_dim}, poly_order={poly_order}, include_sine="
            f"{include_sine} (expected {expected})")

    # Pre-mask the (tiny) coefficients, fold in dt, flatten for SMEM scalars.
    cm_flat = ((coefficients * coefficient_mask) * dt).astype(
        jnp.float32).reshape(-1)

    # num_data tiling: lane axis = 128, sublane rows tiled by tile_s (mult. of 8).
    ns = pl.cdiv(num_data, 128)
    tile_s = min(_round_up(ns, 8), max_tile_s)
    # Keep >= 2 grid steps for large-enough inputs (v7x megacore sharding).
    if ns >= 16 and _round_up(ns, tile_s) // tile_s < 2:
        tile_s = _round_up(pl.cdiv(ns, 2), 8)
    ns_pad = _round_up(ns, tile_s)
    n_pad = ns_pad * 128

    # (N, R, L) -> (R, L, N) -> pad -> (R, L, ns_pad, 128): dense lane+sublane.
    hT = jnp.transpose(h_replicates, (1, 2, 0))
    if n_pad != num_data:
        hT = jnp.pad(hT, ((0, 0), (0, 0), (0, n_pad - num_data)))
    h4 = hT.reshape(num_rep, latent_dim, ns_pad, 128)

    kernel = functools.partial(
        _e_sindy_kernel, num_rep=num_rep, latent_dim=latent_dim,
        poly_order=poly_order, include_sine=include_sine,
        library_dim=library_dim)

    out4 = pl.pallas_call(
        kernel,
        out_shape=jax.ShapeDtypeStruct(
            (num_rep, latent_dim, ns_pad, 128), h_replicates.dtype),
        grid=(ns_pad // tile_s,),
        in_specs=[
            # Flat coefficients live in SMEM for cheap scalar reads.
            pl.BlockSpec(memory_space=pltpu.MemorySpace.SMEM),
            pl.BlockSpec((num_rep, latent_dim, tile_s, 128),
                         lambda s: (0, 0, s, 0)),
        ],
        out_specs=pl.BlockSpec((num_rep, latent_dim, tile_s, 128),
                               lambda s: (0, 0, s, 0)),
        compiler_params=pltpu.CompilerParams(
            dimension_semantics=("parallel",),
            vmem_limit_bytes=32 * 1024 * 1024),
    )(cm_flat, h4)

    out = out4.reshape(num_rep, latent_dim, n_pad)[:, :, :num_data]
    return jnp.transpose(out, (2, 0, 1))                 # back to (N, R, L)


# ----------------------------- pure-JAX reference -----------------------------
def _sindy_library_ref(z, latent_dim, poly_order, include_sine):
    """Reference library builder, (num_rows, latent_dim) -> (num_rows, lib)."""
    n = z.shape[0]
    cols = [jnp.ones((n, 1), z.dtype)]
    for i in range(latent_dim):
        cols.append(z[:, i:i + 1])
    for combo in _poly_combos(latent_dim, poly_order):
        col = z[:, combo[0]:combo[0] + 1]
        for c in combo[1:]:
            col = col * z[:, c:c + 1]
        cols.append(col)
    if include_sine:
        for i in range(latent_dim):
            cols.append(jnp.sin(z[:, i:i + 1]))
    return jnp.concatenate(cols, axis=1)


def e_sindy_forward_ref(h_replicates, coefficients, coefficient_mask, dt,
                        poly_order, include_sine):
    """Mirrors the PyTorch forward exactly."""
    num_data, num_rep, latent_dim = h_replicates.shape
    z = h_replicates.reshape(num_data * num_rep, latent_dim)
    theta = _sindy_library_ref(z, latent_dim, poly_order, include_sine)
    theta = theta.reshape(num_data, num_rep, -1)
    upd = jnp.einsum('ijk,jkl->ijl', theta, coefficients * coefficient_mask)
    return h_replicates + upd * dt


if __name__ == "__main__":
    # Small, deterministic setup consistent with the module's __init__.
    num_replicates = 4
    latent_dim = 3
    poly_order = 3
    include_sine = True
    library_dim = library_size(latent_dim, poly_order, include_sine)  # 23
    num_data = 200            # non-multiple of 128 -> exercises padding path
    dt = 0.01

    key = jax.random.PRNGKey(0)
    k_coef, k_h = jax.random.split(key)

    # coefficients ~ Normal(0, 0.001), mask = ones (as in __init__)
    coefficients = (jax.random.normal(
        k_coef, (num_replicates, library_dim, latent_dim), jnp.float32) * 0.001)
    coefficient_mask = jnp.ones(
        (num_replicates, library_dim, latent_dim), jnp.float32)
    h_replicates = jax.random.normal(
        k_h, (num_data, num_replicates, latent_dim), jnp.float32)

    out = e_sindy_forward(h_replicates, coefficients, coefficient_mask, dt,
                          poly_order, include_sine)
    out = jax.block_until_ready(out)

    ref = e_sindy_forward_ref(h_replicates, coefficients, coefficient_mask, dt,
                              poly_order, include_sine)
    assert out.shape == (num_data, num_replicates, latent_dim)
    assert jnp.allclose(out, ref, atol=1e-5, rtol=1e-5), "mismatch vs reference"

    print("KERNEL_OK")
</pallas_src>

<mosaic_0001>
module attributes {stable_mosaic.version = 11 : i64} {
  func.func @_e_sindy_kernel(%arg0: i32, %arg1: memref<276xf32, #tpu.memory_space<smem>>, %arg2: memref<4x3x8x128xf32, #tpu.memory_space<vmem>>, %arg3: memref<4x3x8x128xf32, #tpu.memory_space<vmem>>) attributes {dimension_semantics = [#tpu.dimension_semantics<parallel>], iteration_bounds = array<i64: 1>, scalar_prefetch = 0 : i64, scratch_operands = 0 : i64, tpu.core_type = #tpu.core_type<tc>, window_params = [{transform_indices = @transform_0, window_bounds = array<i64: 276>}, {transform_indices = @transform_1, window_bounds = array<i64: 4, 3, 8, 128>}, {transform_indices = @transform_2, window_bounds = array<i64: 4, 3, 8, 128>}]} {
    %c0 = arith.constant 0 : index
    %c0_0 = arith.constant 0 : index
    %c0_1 = arith.constant 0 : index
    %c0_2 = arith.constant 0 : index
    %0 = vector.load %arg2[%c0, %c0_0, %c0_1, %c0_2] : memref<4x3x8x128xf32, #tpu.memory_space<vmem>>, vector<1x1x8x128xf32>
    %1 = vector.shape_cast %0 : vector<1x1x8x128xf32> to vector<8x128xf32>
    %c0_3 = arith.constant 0 : index
    %c1 = arith.constant 1 : index
    %c0_4 = arith.constant 0 : index
    %c0_5 = arith.constant 0 : index
    %2 = vector.load %arg2[%c0_3, %c1, %c0_4, %c0_5] : memref<4x3x8x128xf32, #tpu.memory_space<vmem>>, vector<1x1x8x128xf32>
    %3 = vector.shape_cast %2 : vector<1x1x8x128xf32> to vector<8x128xf32>
    %c0_6 = arith.constant 0 : index
    %c2 = arith.constant 2 : index
    %c0_7 = arith.constant 0 : index
    %c0_8 = arith.constant 0 : index
    %4 = vector.load %arg2[%c0_6, %c2, %c0_7, %c0_8] : memref<4x3x8x128xf32, #tpu.memory_space<vmem>>, vector<1x1x8x128xf32>
    %5 = vector.shape_cast %4 : vector<1x1x8x128xf32> to vector<8x128xf32>
    %c0_9 = arith.constant 0 : index
    %6 = memref.load %arg1[%c0_9] : memref<276xf32, #tpu.memory_space<smem>>
    %7 = vector.broadcast %6 : f32 to vector<8x128xf32>
    %8 = arith.addf %1, %7 : vector<8x128xf32>
    %c1_10 = arith.constant 1 : index
    %9 = memref.load %arg1[%c1_10] : memref<276xf32, #tpu.memory_space<smem>>
    %10 = vector.broadcast %9 : f32 to vector<8x128xf32>
    %11 = arith.addf %3, %10 : vector<8x128xf32>
    %c2_11 = arith.constant 2 : index
    %12 = memref.load %arg1[%c2_11] : memref<276xf32, #tpu.memory_space<smem>>
    %13 = vector.broadcast %12 : f32 to vector<8x128xf32>
    %14 = arith.addf %5, %13 : vector<8x128xf32>
    %c3 = arith.constant 3 : index
    %15 = memref.load %arg1[%c3] : memref<276xf32, #tpu.memory_space<smem>>
    %16 = vector.broadcast %15 : f32 to vector<8x128xf32>
    %17 = arith.mulf %16, %1 : vector<8x128xf32>
    %18 = arith.addf %8, %17 : vector<8x128xf32>
    %c4 = arith.constant 4 : index
    %19 = memref.load %arg1[%c4] : memref<276xf32, #tpu.memory_space<smem>>
    %20 = vector.broadcast %19 : f32 to vector<8x128xf32>
    %21 = arith.mulf %20, %1 : vector<8x128xf32>
    %22 = arith.addf %11, %21 : vector<8x128xf32>
    %c5 = arith.constant 5 : index
    %23 = memref.load %arg1[%c5] : memref<276xf32, #tpu.memory_space<smem>>
    %24 = vector.broadcast %23 : f32 to vector<8x128xf32>
    %25 = arith.mulf %24, %1 : vector<8x128xf32>
    %26 = arith.addf %14, %25 : vector<8x128xf32>
    %c6 = arith.constant 6 : index
    %27 = memref.load %arg1[%c6] : memref<276xf32, #tpu.memory_space<smem>>
    %28 = vector.broadcast %27 : f32 to vector<8x128xf32>
    %29 = arith.mulf %28, %3 : vector<8x128xf32>
    %30 = arith.addf %18, %29 : vector<8x128xf32>
    %c7 = arith.constant 7 : index
    %31 = memref.load %arg1[%c7] : memref<276xf32, #tpu.memory_space<smem>>
    %32 = vector.broadcast %31 : f32 to vector<8x128xf32>
    %33 = arith.mulf %32, %3 : vector<8x128xf32>
    %34 = arith.addf %22, %33 : vector<8x128xf32>
    %c8 = arith.constant 8 : index
    %35 = memref.load %arg1[%c8] : memref<276xf32, #tpu.memory_space<smem>>
    %36 = vector.broadcast %35 : f32 to vector<8x128xf32>
    %37 = arith.mulf %36, %3 : vector<8x128xf32>
    %38 = arith.addf %26, %37 : vector<8x128xf32>
    %c9 = arith.constant 9 : index
    %39 = memref.load %arg1[%c9] : memref<276xf32, #tpu.memory_space<smem>>
    %40 = vector.broadcast %39 : f32 to vector<8x128xf32>
    %41 = arith.mulf %40, %5 : vector<8x128xf32>
    %42 = arith.addf %30, %41 : vector<8x128xf32>
    %c10 = arith.constant 10 : index
    %43 = memref.load %arg1[%c10] : memref<276xf32, #tpu.memory_space<smem>>
    %44 = vector.broadcast %43 : f32 to vector<8x128xf32>
    %45 = arith.mulf %44, %5 : vector<8x128xf32>
    %46 = arith.addf %34, %45 : vector<8x128xf32>
    %c11 = arith.constant 11 : index
    %47 = memref.load %arg1[%c11] : memref<276xf32, #tpu.memory_space<smem>>
    %48 = vector.broadcast %47 : f32 to vector<8x128xf32>
    %49 = arith.mulf %48, %5 : vector<8x128xf32>
    %50 = arith.addf %38, %49 : vector<8x128xf32>
    %51 = arith.mulf %1, %1 : vector<8x128xf32>
    %c12 = arith.constant 12 : index
    %52 = memref.load %arg1[%c12] : memref<276xf32, #tpu.memory_space<smem>>
    %53 = vector.broadcast %52 : f32 to vector<8x128xf32>
    %54 = arith.mulf %53, %51 : vector<8x128xf32>
    %55 = arith.addf %42, %54 : vector<8x128xf32>
    %c13 = arith.constant 13 : index
    %56 = memref.load %arg1[%c13] : memref<276xf32, #tpu.memory_space<smem>>
    %57 = vector.broadcast %56 : f32 to vector<8x128xf32>
    %58 = arith.mulf %57, %51 : vector<8x128xf32>
    %59 = arith.addf %46, %58 : vector<8x128xf32>
    %c14 = arith.constant 14 : index
    %60 = memref.load %arg1[%c14] : memref<276xf32, #tpu.memory_space<smem>>
    %61 = vector.broadcast %60 : f32 to vector<8x128xf32>
    %62 = arith.mulf %61, %51 : vector<8x128xf32>
    %63 = arith.addf %50, %62 : vector<8x128xf32>
    %64 = arith.mulf %1, %3 : vector<8x128xf32>
    %c15 = arith.constant 15 : index
    %65 = memref.load %arg1[%c15] : memref<276xf32, #tpu.memory_space<smem>>
    %66 = vector.broadcast %65 : f32 to vector<8x128xf32>
    %67 = arith.mulf %66, %64 : vector<8x128xf32>
    %68 = arith.addf %55, %67 : vector<8x128xf32>
    %c16 = arith.constant 16 : index
    %69 = memref.load %arg1[%c16] : memref<276xf32, #tpu.memory_space<smem>>
    %70 = vector.broadcast %69 : f32 to vector<8x128xf32>
    %71 = arith.mulf %70, %64 : vector<8x128xf32>
    %72 = arith.addf %59, %71 : vector<8x128xf32>
    %c17 = arith.constant 17 : index
    %73 = memref.load %arg1[%c17] : memref<276xf32, #tpu.memory_space<smem>>
    %74 = vector.broadcast %73 : f32 to vector<8x128xf32>
    %75 = arith.mulf %74, %64 : vector<8x128xf32>
    %76 = arith.addf %63, %75 : vector<8x128xf32>
    %77 = arith.mulf %1, %5 : vector<8x128xf32>
    %c18 = arith.constant 18 : index
    %78 = memref.load %arg1[%c18] : memref<276xf32, #tpu.memory_space<smem>>
    %79 = vector.broadcast %78 : f32 to vector<8x128xf32>
    %80 = arith.mulf %79, %77 : vector<8x128xf32>
    %81 = arith.addf %68, %80 : vector<8x128xf32>
    %c19 = arith.constant 19 : index
    %82 = memref.load %arg1[%c19] : memref<276xf32, #tpu.memory_space<smem>>
    %83 = vector.broadcast %82 : f32 to vector<8x128xf32>
    %84 = arith.mulf %83, %77 : vector<8x128xf32>
    %85 = arith.addf %72, %84 : vector<8x128xf32>
    %c20 = arith.constant 20 : index
    %86 = memref.load %arg1[%c20] : memref<276xf32, #tpu.memory_space<smem>>
    %87 = vector.broadcast %86 : f32 to vector<8x128xf32>
    %88 = arith.mulf %87, %77 : vector<8x128xf32>
    %89 = arith.addf %76, %88 : vector<8x128xf32>
    %90 = arith.mulf %3, %3 : vector<8x128xf32>
    %c21 = arith.constant 21 : index
    %91 = memref.load %arg1[%c21] : memref<276xf32, #tpu.memory_space<smem>>
    %92 = vector.broadcast %91 : f32 to vector<8x128xf32>
    %93 = arith.mulf %92, %90 : vector<8x128xf32>
    %94 = arith.addf %81, %93 : vector<8x128xf32>
    %c22 = arith.constant 22 : index
    %95 = memref.load %arg1[%c22] : memref<276xf32, #tpu.memory_space<smem>>
    %96 = vector.broadcast %95 : f32 to vector<8x128xf32>
    %97 = arith.mulf %96, %90 : vector<8x128xf32>
    %98 = arith.addf %85, %97 : vector<8x128xf32>
    %c23 = arith.constant 23 : index
    %99 = memref.load %arg1[%c23] : memref<276xf32, #tpu.memory_space<smem>>
    %100 = vector.broadcast %99 : f32 to vector<8x128xf32>
    %101 = arith.mulf %100, %90 : vector<8x128xf32>
    %102 = arith.addf %89, %101 : vector<8x128xf32>
    %103 = arith.mulf %3, %5 : vector<8x128xf32>
    %c24 = arith.constant 24 : index
    %104 = memref.load %arg1[%c24] : memref<276xf32, #tpu.memory_space<smem>>
    %105 = vector.broadcast %104 : f32 to vector<8x128xf32>
    %106 = arith.mulf %105, %103 : vector<8x128xf32>
    %107 = arith.addf %94, %106 : vector<8x128xf32>
    %c25 = arith.constant 25 : index
    %108 = memref.load %arg1[%c25] : memref<276xf32, #tpu.memory_space<smem>>
    %109 = vector.broadcast %108 : f32 to vector<8x128xf32>
    %110 = arith.mulf %109, %103 : vector<8x128xf32>
    %111 = arith.addf %98, %110 : vector<8x128xf32>
    %c26 = arith.constant 26 : index
    %112 = memref.load %arg1[%c26] : memref<276xf32, #tpu.memory_space<smem>>
    %113 = vector.broadcast %112 : f32 to vector<8x128xf32>
    %114 = arith.mulf %113, %103 : vector<8x128xf32>
    %115 = arith.addf %102, %114 : vector<8x128xf32>
    %116 = arith.mulf %5, %5 : vector<8x128xf32>
    %c27 = arith.constant 27 : index
    %117 = memref.load %arg1[%c27] : memref<276xf32, #tpu.memory_space<smem>>
    %118 = vector.broadcast %117 : f32 to vector<8x128xf32>
    %119 = arith.mulf %118, %116 : vector<8x128xf32>
    %120 = arith.addf %107, %119 : vector<8x128xf32>
    %c28 = arith.constant 28 : index
    %121 = memref.load %arg1[%c28] : memref<276xf32, #tpu.memory_space<smem>>
    %122 = vector.broadcast %121 : f32 to vector<8x128xf32>
    %123 = arith.mulf %122, %116 : vector<8x128xf32>
    %124 = arith.addf %111, %123 : vector<8x128xf32>
    %c29 = arith.constant 29 : index
    %125 = memref.load %arg1[%c29] : memref<276xf32, #tpu.memory_space<smem>>
    %126 = vector.broadcast %125 : f32 to vector<8x128xf32>
    %127 = arith.mulf %126, %116 : vector<8x128xf32>
    %128 = arith.addf %115, %127 : vector<8x128xf32>
    %129 = arith.mulf %51, %1 : vector<8x128xf32>
    %c30 = arith.constant 30 : index
    %130 = memref.load %arg1[%c30] : memref<276xf32, #tpu.memory_space<smem>>
    %131 = vector.broadcast %130 : f32 to vector<8x128xf32>
    %132 = arith.mulf %131, %129 : vector<8x128xf32>
    %133 = arith.addf %120, %132 : vector<8x128xf32>
    %c31 = arith.constant 31 : index
    %134 = memref.load %arg1[%c31] : memref<276xf32, #tpu.memory_space<smem>>
    %135 = vector.broadcast %134 : f32 to vector<8x128xf32>
    %136 = arith.mulf %135, %129 : vector<8x128xf32>
    %137 = arith.addf %124, %136 : vector<8x128xf32>
    %c32 = arith.constant 32 : index
    %138 = memref.load %arg1[%c32] : memref<276xf32, #tpu.memory_space<smem>>
    %139 = vector.broadcast %138 : f32 to vector<8x128xf32>
    %140 = arith.mulf %139, %129 : vector<8x128xf32>
    %141 = arith.addf %128, %140 : vector<8x128xf32>
    %142 = arith.mulf %51, %3 : vector<8x128xf32>
    %c33 = arith.constant 33 : index
    %143 = memref.load %arg1[%c33] : memref<276xf32, #tpu.memory_space<smem>>
    %144 = vector.broadcast %143 : f32 to vector<8x128xf32>
    %145 = arith.mulf %144, %142 : vector<8x128xf32>
    %146 = arith.addf %133, %145 : vector<8x128xf32>
    %c34 = arith.constant 34 : index
    %147 = memref.load %arg1[%c34] : memref<276xf32, #tpu.memory_space<smem>>
    %148 = vector.broadcast %147 : f32 to vector<8x128xf32>
    %149 = arith.mulf %148, %142 : vector<8x128xf32>
    %150 = arith.addf %137, %149 : vector<8x128xf32>
    %c35 = arith.constant 35 : index
    %151 = memref.load %arg1[%c35] : memref<276xf32, #tpu.memory_space<smem>>
    %152 = vector.broadcast %151 : f32 to vector<8x128xf32>
    %153 = arith.mulf %152, %142 : vector<8x128xf32>
    %154 = arith.addf %141, %153 : vector<8x128xf32>
    %155 = arith.mulf %51, %5 : vector<8x128xf32>
    %c36 = arith.constant 36 : index
    %156 = memref.load %arg1[%c36] : memref<276xf32, #tpu.memory_space<smem>>
    %157 = vector.broadcast %156 : f32 to vector<8x128xf32>
    %158 = arith.mulf %157, %155 : vector<8x128xf32>
    %159 = arith.addf %146, %158 : vector<8x128xf32>
    %c37 = arith.constant 37 : index
    %160 = memref.load %arg1[%c37] : memref<276xf32, #tpu.memory_space<smem>>
    %161 = vector.broadcast %160 : f32 to vector<8x128xf32>
    %162 = arith.mulf %161, %155 : vector<8x128xf32>
    %163 = arith.addf %150, %162 : vector<8x128xf32>
    %c38 = arith.constant 38 : index
    %164 = memref.load %arg1[%c38] : memref<276xf32, #tpu.memory_space<smem>>
    %165 = vector.broadcast %164 : f32 to vector<8x128xf32>
    %166 = arith.mulf %165, %155 : vector<8x128xf32>
    %167 = arith.addf %154, %166 : vector<8x128xf32>
    %168 = arith.mulf %64, %3 : vector<8x128xf32>
    %c39 = arith.constant 39 : index
    %169 = memref.load %arg1[%c39] : memref<276xf32, #tpu.memory_space<smem>>
    %170 = vector.broadcast %169 : f32 to vector<8x128xf32>
    %171 = arith.mulf %170, %168 : vector<8x128xf32>
    %172 = arith.addf %159, %171 : vector<8x128xf32>
    %c40 = arith.constant 40 : index
    %173 = memref.load %arg1[%c40] : memref<276xf32, #tpu.memory_space<smem>>
    %174 = vector.broadcast %173 : f32 to vector<8x128xf32>
    %175 = arith.mulf %174, %168 : vector<8x128xf32>
    %176 = arith.addf %163, %175 : vector<8x128xf32>
    %c41 = arith.constant 41 : index
    %177 = memref.load %arg1[%c41] : memref<276xf32, #tpu.memory_space<smem>>
    %178 = vector.broadcast %177 : f32 to vector<8x128xf32>
    %179 = arith.mulf %178, %168 : vector<8x128xf32>
    %180 = arith.addf %167, %179 : vector<8x128xf32>
    %181 = arith.mulf %64, %5 : vector<8x128xf32>
    %c42 = arith.constant 42 : index
    %182 = memref.load %arg1[%c42] : memref<276xf32, #tpu.memory_space<smem>>
    %183 = vector.broadcast %182 : f32 to vector<8x128xf32>
    %184 = arith.mulf %183, %181 : vector<8x128xf32>
    %185 = arith.addf %172, %184 : vector<8x128xf32>
    %c43 = arith.constant 43 : index
    %186 = memref.load %arg1[%c43] : memref<276xf32, #tpu.memory_space<smem>>
    %187 = vector.broadcast %186 : f32 to vector<8x128xf32>
    %188 = arith.mulf %187, %181 : vector<8x128xf32>
    %189 = arith.addf %176, %188 : vector<8x128xf32>
    %c44 = arith.constant 44 : index
    %190 = memref.load %arg1[%c44] : memref<276xf32, #tpu.memory_space<smem>>
    %191 = vector.broadcast %190 : f32 to vector<8x128xf32>
    %192 = arith.mulf %191, %181 : vector<8x128xf32>
    %193 = arith.addf %180, %192 : vector<8x128xf32>
    %194 = arith.mulf %77, %5 : vector<8x128xf32>
    %c45 = arith.constant 45 : index
    %195 = memref.load %arg1[%c45] : memref<276xf32, #tpu.memory_space<smem>>
    %196 = vector.broadcast %195 : f32 to vector<8x128xf32>
    %197 = arith.mulf %196, %194 : vector<8x128xf32>
    %198 = arith.addf %185, %197 : vector<8x128xf32>
    %c46 = arith.constant 46 : index
    %199 = memref.load %arg1[%c46] : memref<276xf32, #tpu.memory_space<smem>>
    %200 = vector.broadcast %199 : f32 to vector<8x128xf32>
    %201 = arith.mulf %200, %194 : vector<8x128xf32>
    %202 = arith.addf %189, %201 : vector<8x128xf32>
    %c47 = arith.constant 47 : index
    %203 = memref.load %arg1[%c47] : memref<276xf32, #tpu.memory_space<smem>>
    %204 = vector.broadcast %203 : f32 to vector<8x128xf32>
    %205 = arith.mulf %204, %194 : vector<8x128xf32>
    %206 = arith.addf %193, %205 : vector<8x128xf32>
    %207 = arith.mulf %90, %3 : vector<8x128xf32>
    %c48 = arith.constant 48 : index
    %208 = memref.load %arg1[%c48] : memref<276xf32, #tpu.memory_space<smem>>
    %209 = vector.broadcast %208 : f32 to vector<8x128xf32>
    %210 = arith.mulf %209, %207 : vector<8x128xf32>
    %211 = arith.addf %198, %210 : vector<8x128xf32>
    %c49 = arith.constant 49 : index
    %212 = memref.load %arg1[%c49] : memref<276xf32, #tpu.memory_space<smem>>
    %213 = vector.broadcast %212 : f32 to vector<8x128xf32>
    %214 = arith.mulf %213, %207 : vector<8x128xf32>
    %215 = arith.addf %202, %214 : vector<8x128xf32>
    %c50 = arith.constant 50 : index
    %216 = memref.load %arg1[%c50] : memref<276xf32, #tpu.memory_space<smem>>
    %217 = vector.broadcast %216 : f32 to vector<8x128xf32>
    %218 = arith.mulf %217, %207 : vector<8x128xf32>
    %219 = arith.addf %206, %218 : vector<8x128xf32>
    %220 = arith.mulf %90, %5 : vector<8x128xf32>
    %c51 = arith.constant 51 : index
    %221 = memref.load %arg1[%c51] : memref<276xf32, #tpu.memory_space<smem>>
    %222 = vector.broadcast %221 : f32 to vector<8x128xf32>
    %223 = arith.mulf %222, %220 : vector<8x128xf32>
    %224 = arith.addf %211, %223 : vector<8x128xf32>
    %c52 = arith.constant 52 : index
    %225 = memref.load %arg1[%c52] : memref<276xf32, #tpu.memory_space<smem>>
    %226 = vector.broadcast %225 : f32 to vector<8x128xf32>
    %227 = arith.mulf %226, %220 : vector<8x128xf32>
    %228 = arith.addf %215, %227 : vector<8x128xf32>
    %c53 = arith.constant 53 : index
    %229 = memref.load %arg1[%c53] : memref<276xf32, #tpu.memory_space<smem>>
    %230 = vector.broadcast %229 : f32 to vector<8x128xf32>
    %231 = arith.mulf %230, %220 : vector<8x128xf32>
    %232 = arith.addf %219, %231 : vector<8x128xf32>
    %233 = arith.mulf %103, %5 : vector<8x128xf32>
    %c54 = arith.constant 54 : index
    %234 = memref.load %arg1[%c54] : memref<276xf32, #tpu.memory_space<smem>>
    %235 = vector.broadcast %234 : f32 to vector<8x128xf32>
    %236 = arith.mulf %235, %233 : vector<8x128xf32>
    %237 = arith.addf %224, %236 : vector<8x128xf32>
    %c55 = arith.constant 55 : index
    %238 = memref.load %arg1[%c55] : memref<276xf32, #tpu.memory_space<smem>>
    %239 = vector.broadcast %238 : f32 to vector<8x128xf32>
    %240 = arith.mulf %239, %233 : vector<8x128xf32>
    %241 = arith.addf %228, %240 : vector<8x128xf32>
    %c56 = arith.constant 56 : index
    %242 = memref.load %arg1[%c56] : memref<276xf32, #tpu.memory_space<smem>>
    %243 = vector.broadcast %242 : f32 to vector<8x128xf32>
    %244 = arith.mulf %243, %233 : vector<8x128xf32>
    %245 = arith.addf %232, %244 : vector<8x128xf32>
    %246 = arith.mulf %116, %5 : vector<8x128xf32>
    %c57 = arith.constant 57 : index
    %247 = memref.load %arg1[%c57] : memref<276xf32, #tpu.memory_space<smem>>
    %248 = vector.broadcast %247 : f32 to vector<8x128xf32>
    %249 = arith.mulf %248, %246 : vector<8x128xf32>
    %250 = arith.addf %237, %249 : vector<8x128xf32>
    %c58 = arith.constant 58 : index
    %251 = memref.load %arg1[%c58] : memref<276xf32, #tpu.memory_space<smem>>
    %252 = vector.broadcast %251 : f32 to vector<8x128xf32>
    %253 = arith.mulf %252, %246 : vector<8x128xf32>
    %254 = arith.addf %241, %253 : vector<8x128xf32>
    %c59 = arith.constant 59 : index
    %255 = memref.load %arg1[%c59] : memref<276xf32, #tpu.memory_space<smem>>
    %256 = vector.broadcast %255 : f32 to vector<8x128xf32>
    %257 = arith.mulf %256, %246 : vector<8x128xf32>
    %258 = arith.addf %245, %257 : vector<8x128xf32>
    %259 = math.sin %1 : vector<8x128xf32>
    %c60 = arith.constant 60 : index
    %260 = memref.load %arg1[%c60] : memref<276xf32, #tpu.memory_space<smem>>
    %261 = vector.broadcast %260 : f32 to vector<8x128xf32>
    %262 = arith.mulf %261, %259 : vector<8x128xf32>
    %263 = arith.addf %250, %262 : vector<8x128xf32>
    %c61 = arith.constant 61 : index
    %264 = memref.load %arg1[%c61] : memref<276xf32, #tpu.memory_space<smem>>
    %265 = vector.broadcast %264 : f32 to vector<8x128xf32>
    %266 = arith.mulf %265, %259 : vector<8x128xf32>
    %267 = arith.addf %254, %266 : vector<8x128xf32>
    %c62 = arith.constant 62 : index
    %268 = memref.load %arg1[%c62] : memref<276xf32, #tpu.memory_space<smem>>
    %269 = vector.broadcast %268 : f32 to vector<8x128xf32>
    %270 = arith.mulf %269, %259 : vector<8x128xf32>
    %271 = arith.addf %258, %270 : vector<8x128xf32>
    %272 = math.sin %3 : vector<8x128xf32>
    %c63 = arith.constant 63 : index
    %273 = memref.load %arg1[%c63] : memref<276xf32, #tpu.memory_space<smem>>
    %274 = vector.broadcast %273 : f32 to vector<8x128xf32>
    %275 = arith.mulf %274, %272 : vector<8x128xf32>
    %276 = arith.addf %263, %275 : vector<8x128xf32>
    %c64 = arith.constant 64 : index
    %277 = memref.load %arg1[%c64] : memref<276xf32, #tpu.memory_space<smem>>
    %278 = vector.broadcast %277 : f32 to vector<8x128xf32>
    %279 = arith.mulf %278, %272 : vector<8x128xf32>
    %280 = arith.addf %267, %279 : vector<8x128xf32>
    %c65 = arith.constant 65 : index
    %281 = memref.load %arg1[%c65] : memref<276xf32, #tpu.memory_space<smem>>
    %282 = vector.broadcast %281 : f32 to vector<8x128xf32>
    %283 = arith.mulf %282, %272 : vector<8x128xf32>
    %284 = arith.addf %271, %283 : vector<8x128xf32>
    %285 = math.sin %5 : vector<8x128xf32>
    %c66 = arith.constant 66 : index
    %286 = memref.load %arg1[%c66] : memref<276xf32, #tpu.memory_space<smem>>
    %287 = vector.broadcast %286 : f32 to vector<8x128xf32>
    %288 = arith.mulf %287, %285 : vector<8x128xf32>
    %289 = arith.addf %276, %288 : vector<8x128xf32>
    %c67 = arith.constant 67 : index
    %290 = memref.load %arg1[%c67] : memref<276xf32, #tpu.memory_space<smem>>
    %291 = vector.broadcast %290 : f32 to vector<8x128xf32>
    %292 = arith.mulf %291, %285 : vector<8x128xf32>
    %293 = arith.addf %280, %292 : vector<8x128xf32>
    %c68 = arith.constant 68 : index
    %294 = memref.load %arg1[%c68] : memref<276xf32, #tpu.memory_space<smem>>
    %295 = vector.broadcast %294 : f32 to vector<8x128xf32>
    %296 = arith.mulf %295, %285 : vector<8x128xf32>
    %297 = arith.addf %284, %296 : vector<8x128xf32>
    %c0_12 = arith.constant 0 : index
    %c0_13 = arith.constant 0 : index
    %c0_14 = arith.constant 0 : index
    %c0_15 = arith.constant 0 : index
    %298 = vector.load %arg3[%c0_12, %c0_13, %c0_14, %c0_15] : memref<4x3x8x128xf32, #tpu.memory_space<vmem>>, vector<1x1x8x128xf32>
    %299 = vector.shape_cast %298 : vector<1x1x8x128xf32> to vector<8x128xf32>
    %300 = vector.shape_cast %289 : vector<8x128xf32> to vector<1x1x8x128xf32>
    tpu.vector_store %arg3[%c0_12, %c0_13, %c0_14, %c0_15], %300 {strides = array<i32>} : memref<4x3x8x128xf32, #tpu.memory_space<vmem>>, vector<1x1x8x128xf32>,
    %c0_16 = arith.constant 0 : index
    %c1_17 = arith.constant 1 : index
    %c0_18 = arith.constant 0 : index
    %c0_19 = arith.constant 0 : index
    %301 = vector.load %arg3[%c0_16, %c1_17, %c0_18, %c0_19] : memref<4x3x8x128xf32, #tpu.memory_space<vmem>>, vector<1x1x8x128xf32>
    %302 = vector.shape_cast %301 : vector<1x1x8x128xf32> to vector<8x128xf32>
    %303 = vector.shape_cast %293 : vector<8x128xf32> to vector<1x1x8x128xf32>
    tpu.vector_store %arg3[%c0_16, %c1_17, %c0_18, %c0_19], %303 {strides = array<i32>} : memref<4x3x8x128xf32, #tpu.memory_space<vmem>>, vector<1x1x8x128xf32>,
    %c0_20 = arith.constant 0 : index
    %c2_21 = arith.constant 2 : index
    %c0_22 = arith.constant 0 : index
    %c0_23 = arith.constant 0 : index
    %304 = vector.load %arg3[%c0_20, %c2_21, %c0_22, %c0_23] : memref<4x3x8x128xf32, #tpu.memory_space<vmem>>, vector<1x1x8x128xf32>
    %305 = vector.shape_cast %304 : vector<1x1x8x128xf32> to vector<8x128xf32>
    %306 = vector.shape_cast %297 : vector<8x128xf32> to vector<1x1x8x128xf32>
    tpu.vector_store %arg3[%c0_20, %c2_21, %c0_22, %c0_23], %306 {strides = array<i32>} : memref<4x3x8x128xf32, #tpu.memory_space<vmem>>, vector<1x1x8x128xf32>,
    %c1_24 = arith.constant 1 : index
    %c0_25 = arith.constant 0 : index
    %c0_26 = arith.constant 0 : index
    %c0_27 = arith.constant 0 : index
    %307 = vector.load %arg2[%c1_24, %c0_25, %c0_26, %c0_27] : memref<4x3x8x128xf32, #tpu.memory_space<vmem>>, vector<1x1x8x128xf32>
    %308 = vector.shape_cast %307 : vector<1x1x8x128xf32> to vector<8x128xf32>
    %c1_28 = arith.constant 1 : index
    %c1_29 = arith.constant 1 : index
    %c0_30 = arith.constant 0 : index
    %c0_31 = arith.constant 0 : index
    %309 = vector.load %arg2[%c1_28, %c1_29, %c0_30, %c0_31] : memref<4x3x8x128xf32, #tpu.memory_space<vmem>>, vector<1x1x8x128xf32>
    %310 = vector.shape_cast %309 : vector<1x1x8x128xf32> to vector<8x128xf32>
    %c1_32 = arith.constant 1 : index
    %c2_33 = arith.constant 2 : index
    %c0_34 = arith.constant 0 : index
    %c0_35 = arith.constant 0 : index
    %311 = vector.load %arg2[%c1_32, %c2_33, %c0_34, %c0_35] : memref<4x3x8x128xf32, #tpu.memory_space<vmem>>, vector<1x1x8x128xf32>
    %312 = vector.shape_cast %311 : vector<1x1x8x128xf32> to vector<8x128xf32>
    %c69 = arith.constant 69 : index
    %313 = memref.load %arg1[%c69] : memref<276xf32, #tpu.memory_space<smem>>
    %314 = vector.broadcast %313 : f32 to vector<8x128xf32>
    %315 = arith.addf %308, %314 : vector<8x128xf32>
    %c70 = arith.constant 70 : index
    %316 = memref.load %arg1[%c70] : memref<276xf32, #tpu.memory_space<smem>>
    %317 = vector.broadcast %316 : f32 to vector<8x128xf32>
    %318 = arith.addf %310, %317 : vector<8x128xf32>
    %c71 = arith.constant 71 : index
    %319 = memref.load %arg1[%c71] : memref<276xf32, #tpu.memory_space<smem>>
    %320 = vector.broadcast %319 : f32 to vector<8x128xf32>
    %321 = arith.addf %312, %320 : vector<8x128xf32>
    %c72 = arith.constant 72 : index
    %322 = memref.load %arg1[%c72] : memref<276xf32, #tpu.memory_space<smem>>
    %323 = vector.broadcast %322 : f32 to vector<8x128xf32>
    %324 = arith.mulf %323, %308 : vector<8x128xf32>
    %325 = arith.addf %315, %324 : vector<8x128xf32>
    %c73 = arith.constant 73 : index
    %326 = memref.load %arg1[%c73] : memref<276xf32, #tpu.memory_space<smem>>
    %327 = vector.broadcast %326 : f32 to vector<8x128xf32>
    %328 = arith.mulf %327, %308 : vector<8x128xf32>
    %329 = arith.addf %318, %328 : vector<8x128xf32>
    %c74 = arith.constant 74 : index
    %330 = memref.load %arg1[%c74] : memref<276xf32, #tpu.memory_space<smem>>
    %331 = vector.broadcast %330 : f32 to vector<8x128xf32>
    %332 = arith.mulf %331, %308 : vector<8x128xf32>
    %333 = arith.addf %321, %332 : vector<8x128xf32>
    %c75 = arith.constant 75 : index
    %334 = memref.load %arg1[%c75] : memref<276xf32, #tpu.memory_space<smem>>
    %335 = vector.broadcast %334 : f32 to vector<8x128xf32>
    %336 = arith.mulf %335, %310 : vector<8x128xf32>
    %337 = arith.addf %325, %336 : vector<8x128xf32>
    %c76 = arith.constant 76 : index
    %338 = memref.load %arg1[%c76] : memref<276xf32, #tpu.memory_space<smem>>
    %339 = vector.broadcast %338 : f32 to vector<8x128xf32>
    %340 = arith.mulf %339, %310 : vector<8x128xf32>
    %341 = arith.addf %329, %340 : vector<8x128xf32>
    %c77 = arith.constant 77 : index
    %342 = memref.load %arg1[%c77] : memref<276xf32, #tpu.memory_space<smem>>
    %343 = vector.broadcast %342 : f32 to vector<8x128xf32>
    %344 = arith.mulf %343, %310 : vector<8x128xf32>
    %345 = arith.addf %333, %344 : vector<8x128xf32>
    %c78 = arith.constant 78 : index
    %346 = memref.load %arg1[%c78] : memref<276xf32, #tpu.memory_space<smem>>
    %347 = vector.broadcast %346 : f32 to vector<8x128xf32>
    %348 = arith.mulf %347, %312 : vector<8x128xf32>
    %349 = arith.addf %337, %348 : vector<8x128xf32>
    %c79 = arith.constant 79 : index
    %350 = memref.load %arg1[%c79] : memref<276xf32, #tpu.memory_space<smem>>
    %351 = vector.broadcast %350 : f32 to vector<8x128xf32>
    %352 = arith.mulf %351, %312 : vector<8x128xf32>
    %353 = arith.addf %341, %352 : vector<8x128xf32>
    %c80 = arith.constant 80 : index
    %354 = memref.load %arg1[%c80] : memref<276xf32, #tpu.memory_space<smem>>
    %355 = vector.broadcast %354 : f32 to vector<8x128xf32>
    %356 = arith.mulf %355, %312 : vector<8x128xf32>
    %357 = arith.addf %345, %356 : vector<8x128xf32>
    %358 = arith.mulf %308, %308 : vector<8x128xf32>
    %c81 = arith.constant 81 : index
    %359 = memref.load %arg1[%c81] : memref<276xf32, #tpu.memory_space<smem>>
    %360 = vector.broadcast %359 : f32 to vector<8x128xf32>
    %361 = arith.mulf %360, %358 : vector<8x128xf32>
    %362 = arith.addf %349, %361 : vector<8x128xf32>
    %c82 = arith.constant 82 : index
    %363 = memref.load %arg1[%c82] : memref<276xf32, #tpu.memory_space<smem>>
    %364 = vector.broadcast %363 : f32 to vector<8x128xf32>
    %365 = arith.mulf %364, %358 : vector<8x128xf32>
    %366 = arith.addf %353, %365 : vector<8x128xf32>
    %c83 = arith.constant 83 : index
    %367 = memref.load %arg1[%c83] : memref<276xf32, #tpu.memory_space<smem>>
    %368 = vector.broadcast %367 : f32 to vector<8x128xf32>
    %369 = arith.mulf %368, %358 : vector<8x128xf32>
    %370 = arith.addf %357, %369 : vector<8x128xf32>
    %371 = arith.mulf %308, %310 : vector<8x128xf32>
    %c84 = arith.constant 84 : index
    %372 = memref.load %arg1[%c84] : memref<276xf32, #tpu.memory_space<smem>>
    %373 = vector.broadcast %372 : f32 to vector<8x128xf32>
    %374 = arith.mulf %373, %371 : vector<8x128xf32>
    %375 = arith.addf %362, %374 : vector<8x128xf32>
    %c85 = arith.constant 85 : index
    %376 = memref.load %arg1[%c85] : memref<276xf32, #tpu.memory_space<smem>>
    %377 = vector.broadcast %376 : f32 to vector<8x128xf32>
    %378 = arith.mulf %377, %371 : vector<8x128xf32>
    %379 = arith.addf %366, %378 : vector<8x128xf32>
    %c86 = arith.constant 86 : index
    %380 = memref.load %arg1[%c86] : memref<276xf32, #tpu.memory_space<smem>>
    %381 = vector.broadcast %380 : f32 to vector<8x128xf32>
    %382 = arith.mulf %381, %371 : vector<8x128xf32>
    %383 = arith.addf %370, %382 : vector<8x128xf32>
    %384 = arith.mulf %308, %312 : vector<8x128xf32>
    %c87 = arith.constant 87 : index
    %385 = memref.load %arg1[%c87] : memref<276xf32, #tpu.memory_space<smem>>
    %386 = vector.broadcast %385 : f32 to vector<8x128xf32>
    %387 = arith.mulf %386, %384 : vector<8x128xf32>
    %388 = arith.addf %375, %387 : vector<8x128xf32>
    %c88 = arith.constant 88 : index
    %389 = memref.load %arg1[%c88] : memref<276xf32, #tpu.memory_space<smem>>
    %390 = vector.broadcast %389 : f32 to vector<8x128xf32>
    %391 = arith.mulf %390, %384 : vector<8x128xf32>
    %392 = arith.addf %379, %391 : vector<8x128xf32>
    %c89 = arith.constant 89 : index
    %393 = memref.load %arg1[%c89] : memref<276xf32, #tpu.memory_space<smem>>
    %394 = vector.broadcast %393 : f32 to vector<8x128xf32>
    %395 = arith.mulf %394, %384 : vector<8x128xf32>
    %396 = arith.addf %383, %395 : vector<8x128xf32>
    %397 = arith.mulf %310, %310 : vector<8x128xf32>
    %c90 = arith.constant 90 : index
    %398 = memref.load %arg1[%c90] : memref<276xf32, #tpu.memory_space<smem>>
    %399 = vector.broadcast %398 : f32 to vector<8x128xf32>
    %400 = arith.mulf %399, %397 : vector<8x128xf32>
    %401 = arith.addf %388, %400 : vector<8x128xf32>
    %c91 = arith.constant 91 : index
    %402 = memref.load %arg1[%c91] : memref<276xf32, #tpu.memory_space<smem>>
    %403 = vector.broadcast %402 : f32 to vector<8x128xf32>
    %404 = arith.mulf %403, %397 : vector<8x128xf32>
    %405 = arith.addf %392, %404 : vector<8x128xf32>
    %c92 = arith.constant 92 : index
    %406 = memref.load %arg1[%c92] : memref<276xf32, #tpu.memory_space<smem>>
    %407 = vector.broadcast %406 : f32 to vector<8x128xf32>
    %408 = arith.mulf %407, %397 : vector<8x128xf32>
    %409 = arith.addf %396, %408 : vector<8x128xf32>
    %410 = arith.mulf %310, %312 : vector<8x128xf32>
    %c93 = arith.constant 93 : index
    %411 = memref.load %arg1[%c93] : memref<276xf32, #tpu.memory_space<smem>>
    %412 = vector.broadcast %411 : f32 to vector<8x128xf32>
    %413 = arith.mulf %412, %410 : vector<8x128xf32>
    %414 = arith.addf %401, %413 : vector<8x128xf32>
    %c94 = arith.constant 94 : index
    %415 = memref.load %arg1[%c94] : memref<276xf32, #tpu.memory_space<smem>>
    %416 = vector.broadcast %415 : f32 to vector<8x128xf32>
    %417 = arith.mulf %416, %410 : vector<8x128xf32>
    %418 = arith.addf %405, %417 : vector<8x128xf32>
    %c95 = arith.constant 95 : index
    %419 = memref.load %arg1[%c95] : memref<276xf32, #tpu.memory_space<smem>>
    %420 = vector.broadcast %419 : f32 to vector<8x128xf32>
    %421 = arith.mulf %420, %410 : vector<8x128xf32>
    %422 = arith.addf %409, %421 : vector<8x128xf32>
    %423 = arith.mulf %312, %312 : vector<8x128xf32>
    %c96 = arith.constant 96 : index
    %424 = memref.load %arg1[%c96] : memref<276xf32, #tpu.memory_space<smem>>
    %425 = vector.broadcast %424 : f32 to vector<8x128xf32>
    %426 = arith.mulf %425, %423 : vector<8x128xf32>
    %427 = arith.addf %414, %426 : vector<8x128xf32>
    %c97 = arith.constant 97 : index
    %428 = memref.load %arg1[%c97] : memref<276xf32, #tpu.memory_space<smem>>
    %429 = vector.broadcast %428 : f32 to vector<8x128xf32>
    %430 = arith.mulf %429, %423 : vector<8x128xf32>
    %431 = arith.addf %418, %430 : vector<8x128xf32>
    %c98 = arith.constant 98 : index
    %432 = memref.load %arg1[%c98] : memref<276xf32, #tpu.memory_space<smem>>
    %433 = vector.broadcast %432 : f32 to vector<8x128xf32>
    %434 = arith.mulf %433, %423 : vector<8x128xf32>
    %435 = arith.addf %422, %434 : vector<8x128xf32>
    %436 = arith.mulf %358, %308 : vector<8x128xf32>
    %c99 = arith.constant 99 : index
    %437 = memref.load %arg1[%c99] : memref<276xf32, #tpu.memory_space<smem>>
    %438 = vector.broadcast %437 : f32 to vector<8x128xf32>
    %439 = arith.mulf %438, %436 : vector<8x128xf32>
    %440 = arith.addf %427, %439 : vector<8x128xf32>
    %c100 = arith.constant 100 : index
    %441 = memref.load %arg1[%c100] : memref<276xf32, #tpu.memory_space<smem>>
    %442 = vector.broadcast %441 : f32 to vector<8x128xf32>
    %443 = arith.mulf %442, %436 : vector<8x128xf32>
    %444 = arith.addf %431, %443 : vector<8x128xf32>
    %c101 = arith.constant 101 : index
    %445 = memref.load %arg1[%c101] : memref<276xf32, #tpu.memory_space<smem>>
    %446 = vector.broadcast %445 : f32 to vector<8x128xf32>
    %447 = arith.mulf %446, %436 : vector<8x128xf32>
    %448 = arith.addf %435, %447 : vector<8x128xf32>
    %449 = arith.mulf %358, %310 : vector<8x128xf32>
    %c102 = arith.constant 102 : index
    %450 = memref.load %arg1[%c102] : memref<276xf32, #tpu.memory_space<smem>>
    %451 = vector.broadcast %450 : f32 to vector<8x128xf32>
    %452 = arith.mulf %451, %449 : vector<8x128xf32>
    %453 = arith.addf %440, %452 : vector<8x128xf32>
    %c103 = arith.constant 103 : index
    %454 = memref.load %arg1[%c103] : memref<276xf32, #tpu.memory_space<smem>>
    %455 = vector.broadcast %454 : f32 to vector<8x128xf32>
    %456 = arith.mulf %455, %449 : vector<8x128xf32>
    %457 = arith.addf %444, %456 : vector<8x128xf32>
    %c104 = arith.constant 104 : index
    %458 = memref.load %arg1[%c104] : memref<276xf32, #tpu.memory_space<smem>>
    %459 = vector.broadcast %458 : f32 to vector<8x128xf32>
    %460 = arith.mulf %459, %449 : vector<8x128xf32>
    %461 = arith.addf %448, %460 : vector<8x128xf32>
    %462 = arith.mulf %358, %312 : vector<8x128xf32>
    %c105 = arith.constant 105 : index
    %463 = memref.load %arg1[%c105] : memref<276xf32, #tpu.memory_space<smem>>
    %464 = vector.broadcast %463 : f32 to vector<8x128xf32>
    %465 = arith.mulf %464, %462 : vector<8x128xf32>
    %466 = arith.addf %453, %465 : vector<8x128xf32>
    %c106 = arith.constant 106 : index
    %467 = memref.load %arg1[%c106] : memref<276xf32, #tpu.memory_space<smem>>
    %468 = vector.broadcast %467 : f32 to vector<8x128xf32>
    %469 = arith.mulf %468, %462 : vector<8x128xf32>
    %470 = arith.addf %457, %469 : vector<8x128xf32>
    %c107 = arith.constant 107 : index
    %471 = memref.load %arg1[%c107] : memref<276xf32, #tpu.memory_space<smem>>
    %472 = vector.broadcast %471 : f32 to vector<8x128xf32>
    %473 = arith.mulf %472, %462 : vector<8x128xf32>
    %474 = arith.addf %461, %473 : vector<8x128xf32>
    %475 = arith.mulf %371, %310 : vector<8x128xf32>
    %c108 = arith.constant 108 : index
    %476 = memref.load %arg1[%c108] : memref<276xf32, #tpu.memory_space<smem>>
    %477 = vector.broadcast %476 : f32 to vector<8x128xf32>
    %478 = arith.mulf %477, %475 : vector<8x128xf32>
    %479 = arith.addf %466, %478 : vector<8x128xf32>
    %c109 = arith.constant 109 : index
    %480 = memref.load %arg1[%c109] : memref<276xf32, #tpu.memory_space<smem>>
    %481 = vector.broadcast %480 : f32 to vector<8x128xf32>
    %482 = arith.mulf %481, %475 : vector<8x128xf32>
    %483 = arith.addf %470, %482 : vector<8x128xf32>
    %c110 = arith.constant 110 : index
    %484 = memref.load %arg1[%c110] : memref<276xf32, #tpu.memory_space<smem>>
    %485 = vector.broadcast %484 : f32 to vector<8x128xf32>
    %486 = arith.mulf %485, %475 : vector<8x128xf32>
    %487 = arith.addf %474, %486 : vector<8x128xf32>
    %488 = arith.mulf %371, %312 : vector<8x128xf32>
    %c111 = arith.constant 111 : index
    %489 = memref.load %arg1[%c111] : memref<276xf32, #tpu.memory_space<smem>>
    %490 = vector.broadcast %489 : f32 to vector<8x128xf32>
    %491 = arith.mulf %490, %488 : vector<8x128xf32>
    %492 = arith.addf %479, %491 : vector<8x128xf32>
    %c112 = arith.constant 112 : index
    %493 = memref.load %arg1[%c112] : memref<276xf32, #tpu.memory_space<smem>>
    %494 = vector.broadcast %493 : f32 to vector<8x128xf32>
    %495 = arith.mulf %494, %488 : vector<8x128xf32>
    %496 = arith.addf %483, %495 : vector<8x128xf32>
    %c113 = arith.constant 113 : index
    %497 = memref.load %arg1[%c113] : memref<276xf32, #tpu.memory_space<smem>>
    %498 = vector.broadcast %497 : f32 to vector<8x128xf32>
    %499 = arith.mulf %498, %488 : vector<8x128xf32>
    %500 = arith.addf %487, %499 : vector<8x128xf32>
    %501 = arith.mulf %384, %312 : vector<8x128xf32>
    %c114 = arith.constant 114 : index
    %502 = memref.load %arg1[%c114] : memref<276xf32, #tpu.memory_space<smem>>
    %503 = vector.broadcast %502 : f32 to vector<8x128xf32>
    %504 = arith.mulf %503, %501 : vector<8x128xf32>
    %505 = arith.addf %492, %504 : vector<8x128xf32>
    %c115 = arith.constant 115 : index
    %506 = memref.load %arg1[%c115] : memref<276xf32, #tpu.memory_space<smem>>
    %507 = vector.broadcast %506 : f32 to vector<8x128xf32>
    %508 = arith.mulf %507, %501 : vector<8x128xf32>
    %509 = arith.addf %496, %508 : vector<8x128xf32>
    %c116 = arith.constant 116 : index
    %510 = memref.load %arg1[%c116] : memref<276xf32, #tpu.memory_space<smem>>
    %511 = vector.broadcast %510 : f32 to vector<8x128xf32>
    %512 = arith.mulf %511, %501 : vector<8x128xf32>
    %513 = arith.addf %500, %512 : vector<8x128xf32>
    %514 = arith.mulf %397, %310 : vector<8x128xf32>
    %c117 = arith.constant 117 : index
    %515 = memref.load %arg1[%c117] : memref<276xf32, #tpu.memory_space<smem>>
    %516 = vector.broadcast %515 : f32 to vector<8x128xf32>
    %517 = arith.mulf %516, %514 : vector<8x128xf32>
    %518 = arith.addf %505, %517 : vector<8x128xf32>
    %c118 = arith.constant 118 : index
    %519 = memref.load %arg1[%c118] : memref<276xf32, #tpu.memory_space<smem>>
    %520 = vector.broadcast %519 : f32 to vector<8x128xf32>
    %521 = arith.mulf %520, %514 : vector<8x128xf32>
    %522 = arith.addf %509, %521 : vector<8x128xf32>
    %c119 = arith.constant 119 : index
    %523 = memref.load %arg1[%c119] : memref<276xf32, #tpu.memory_space<smem>>
    %524 = vector.broadcast %523 : f32 to vector<8x128xf32>
    %525 = arith.mulf %524, %514 : vector<8x128xf32>
    %526 = arith.addf %513, %525 : vector<8x128xf32>
    %527 = arith.mulf %397, %312 : vector<8x128xf32>
    %c120 = arith.constant 120 : index
    %528 = memref.load %arg1[%c120] : memref<276xf32, #tpu.memory_space<smem>>
    %529 = vector.broadcast %528 : f32 to vector<8x128xf32>
    %530 = arith.mulf %529, %527 : vector<8x128xf32>
    %531 = arith.addf %518, %530 : vector<8x128xf32>
    %c121 = arith.constant 121 : index
    %532 = memref.load %arg1[%c121] : memref<276xf32, #tpu.memory_space<smem>>
    %533 = vector.broadcast %532 : f32 to vector<8x128xf32>
    %534 = arith.mulf %533, %527 : vector<8x128xf32>
    %535 = arith.addf %522, %534 : vector<8x128xf32>
    %c122 = arith.constant 122 : index
    %536 = memref.load %arg1[%c122] : memref<276xf32, #tpu.memory_space<smem>>
    %537 = vector.broadcast %536 : f32 to vector<8x128xf32>
    %538 = arith.mulf %537, %527 : vector<8x128xf32>
    %539 = arith.addf %526, %538 : vector<8x128xf32>
    %540 = arith.mulf %410, %312 : vector<8x128xf32>
    %c123 = arith.constant 123 : index
    %541 = memref.load %arg1[%c123] : memref<276xf32, #tpu.memory_space<smem>>
    %542 = vector.broadcast %541 : f32 to vector<8x128xf32>
    %543 = arith.mulf %542, %540 : vector<8x128xf32>
    %544 = arith.addf %531, %543 : vector<8x128xf32>
    %c124 = arith.constant 124 : index
    %545 = memref.load %arg1[%c124] : memref<276xf32, #tpu.memory_space<smem>>
    %546 = vector.broadcast %545 : f32 to vector<8x128xf32>
    %547 = arith.mulf %546, %540 : vector<8x128xf32>
    %548 = arith.addf %535, %547 : vector<8x128xf32>
    %c125 = arith.constant 125 : index
    %549 = memref.load %arg1[%c125] : memref<276xf32, #tpu.memory_space<smem>>
    %550 = vector.broadcast %549 : f32 to vector<8x128xf32>
    %551 = arith.mulf %550, %540 : vector<8x128xf32>
    %552 = arith.addf %539, %551 : vector<8x128xf32>
    %553 = arith.mulf %423, %312 : vector<8x128xf32>
    %c126 = arith.constant 126 : index
    %554 = memref.load %arg1[%c126] : memref<276xf32, #tpu.memory_space<smem>>
    %555 = vector.broadcast %554 : f32 to vector<8x128xf32>
    %556 = arith.mulf %555, %553 : vector<8x128xf32>
    %557 = arith.addf %544, %556 : vector<8x128xf32>
    %c127 = arith.constant 127 : index
    %558 = memref.load %arg1[%c127] : memref<276xf32, #tpu.memory_space<smem>>
    %559 = vector.broadcast %558 : f32 to vector<8x128xf32>
    %560 = arith.mulf %559, %553 : vector<8x128xf32>
    %561 = arith.addf %548, %560 : vector<8x128xf32>
    %c128 = arith.constant 128 : index
    %562 = memref.load %arg1[%c128] : memref<276xf32, #tpu.memory_space<smem>>
    %563 = vector.broadcast %562 : f32 to vector<8x128xf32>
    %564 = arith.mulf %563, %553 : vector<8x128xf32>
    %565 = arith.addf %552, %564 : vector<8x128xf32>
    %566 = math.sin %308 : vector<8x128xf32>
    %c129 = arith.constant 129 : index
    %567 = memref.load %arg1[%c129] : memref<276xf32, #tpu.memory_space<smem>>
    %568 = vector.broadcast %567 : f32 to vector<8x128xf32>
    %569 = arith.mulf %568, %566 : vector<8x128xf32>
    %570 = arith.addf %557, %569 : vector<8x128xf32>
    %c130 = arith.constant 130 : index
    %571 = memref.load %arg1[%c130] : memref<276xf32, #tpu.memory_space<smem>>
    %572 = vector.broadcast %571 : f32 to vector<8x128xf32>
    %573 = arith.mulf %572, %566 : vector<8x128xf32>
    %574 = arith.addf %561, %573 : vector<8x128xf32>
    %c131 = arith.constant 131 : index
    %575 = memref.load %arg1[%c131] : memref<276xf32, #tpu.memory_space<smem>>
    %576 = vector.broadcast %575 : f32 to vector<8x128xf32>
    %577 = arith.mulf %576, %566 : vector<8x128xf32>
    %578 = arith.addf %565, %577 : vector<8x128xf32>
    %579 = math.sin %310 : vector<8x128xf32>
    %c132 = arith.constant 132 : index
    %580 = memref.load %arg1[%c132] : memref<276xf32, #tpu.memory_space<smem>>
    %581 = vector.broadcast %580 : f32 to vector<8x128xf32>
    %582 = arith.mulf %581, %579 : vector<8x128xf32>
    %583 = arith.addf %570, %582 : vector<8x128xf32>
    %c133 = arith.constant 133 : index
    %584 = memref.load %arg1[%c133] : memref<276xf32, #tpu.memory_space<smem>>
    %585 = vector.broadcast %584 : f32 to vector<8x128xf32>
    %586 = arith.mulf %585, %579 : vector<8x128xf32>
    %587 = arith.addf %574, %586 : vector<8x128xf32>
    %c134 = arith.constant 134 : index
    %588 = memref.load %arg1[%c134] : memref<276xf32, #tpu.memory_space<smem>>
    %589 = vector.broadcast %588 : f32 to vector<8x128xf32>
    %590 = arith.mulf %589, %579 : vector<8x128xf32>
    %591 = arith.addf %578, %590 : vector<8x128xf32>
    %592 = math.sin %312 : vector<8x128xf32>
    %c135 = arith.constant 135 : index
    %593 = memref.load %arg1[%c135] : memref<276xf32, #tpu.memory_space<smem>>
    %594 = vector.broadcast %593 : f32 to vector<8x128xf32>
    %595 = arith.mulf %594, %592 : vector<8x128xf32>
    %596 = arith.addf %583, %595 : vector<8x128xf32>
    %c136 = arith.constant 136 : index
    %597 = memref.load %arg1[%c136] : memref<276xf32, #tpu.memory_space<smem>>
    %598 = vector.broadcast %597 : f32 to vector<8x128xf32>
    %599 = arith.mulf %598, %592 : vector<8x128xf32>
    %600 = arith.addf %587, %599 : vector<8x128xf32>
    %c137 = arith.constant 137 : index
    %601 = memref.load %arg1[%c137] : memref<276xf32, #tpu.memory_space<smem>>
    %602 = vector.broadcast %601 : f32 to vector<8x128xf32>
    %603 = arith.mulf %602, %592 : vector<8x128xf32>
    %604 = arith.addf %591, %603 : vector<8x128xf32>
    %c1_36 = arith.constant 1 : index
    %c0_37 = arith.constant 0 : index
    %c0_38 = arith.constant 0 : index
    %c0_39 = arith.constant 0 : index
    %605 = vector.load %arg3[%c1_36, %c0_37, %c0_38, %c0_39] : memref<4x3x8x128xf32, #tpu.memory_space<vmem>>, vector<1x1x8x128xf32>
    %606 = vector.shape_cast %605 : vector<1x1x8x128xf32> to vector<8x128xf32>
    %607 = vector.shape_cast %596 : vector<8x128xf32> to vector<1x1x8x128xf32>
    tpu.vector_store %arg3[%c1_36, %c0_37, %c0_38, %c0_39], %607 {strides = array<i32>} : memref<4x3x8x128xf32, #tpu.memory_space<vmem>>, vector<1x1x8x128xf32>,
    %c1_40 = arith.constant 1 : index
    %c1_41 = arith.constant 1 : index
    %c0_42 = arith.constant 0 : index
    %c0_43 = arith.constant 0 : index
    %608 = vector.load %arg3[%c1_40, %c1_41, %c0_42, %c0_43] : memref<4x3x8x128xf32, #tpu.memory_space<vmem>>, vector<1x1x8x128xf32>
    %609 = vector.shape_cast %608 : vector<1x1x8x128xf32> to vector<8x128xf32>
    %610 = vector.shape_cast %600 : vector<8x128xf32> to vector<1x1x8x128xf32>
    tpu.vector_store %arg3[%c1_40, %c1_41, %c0_42, %c0_43], %610 {strides = array<i32>} : memref<4x3x8x128xf32, #tpu.memory_space<vmem>>, vector<1x1x8x128xf32>,
    %c1_44 = arith.constant 1 : index
    %c2_45 = arith.constant 2 : index
    %c0_46 = arith.constant 0 : index
    %c0_47 = arith.constant 0 : index
    %611 = vector.load %arg3[%c1_44, %c2_45, %c0_46, %c0_47] : memref<4x3x8x128xf32, #tpu.memory_space<vmem>>, vector<1x1x8x128xf32>
    %612 = vector.shape_cast %611 : vector<1x1x8x128xf32> to vector<8x128xf32>
    %613 = vector.shape_cast %604 : vector<8x128xf32> to vector<1x1x8x128xf32>
    tpu.vector_store %arg3[%c1_44, %c2_45, %c0_46, %c0_47], %613 {strides = array<i32>} : memref<4x3x8x128xf32, #tpu.memory_space<vmem>>, vector<1x1x8x128xf32>,
    %c2_48 = arith.constant 2 : index
    %c0_49 = arith.constant 0 : index
    %c0_50 = arith.constant 0 : index
    %c0_51 = arith.constant 0 : index
    %614 = vector.load %arg2[%c2_48, %c0_49, %c0_50, %c0_51] : memref<4x3x8x128xf32, #tpu.memory_space<vmem>>, vector<1x1x8x128xf32>
    %615 = vector.shape_cast %614 : vector<1x1x8x128xf32> to vector<8x128xf32>
    %c2_52 = arith.constant 2 : index
    %c1_53 = arith.constant 1 : index
    %c0_54 = arith.constant 0 : index
    %c0_55 = arith.constant 0 : index
    %616 = vector.load %arg2[%c2_52, %c1_53, %c0_54, %c0_55] : memref<4x3x8x128xf32, #tpu.memory_space<vmem>>, vector<1x1x8x128xf32>
    %617 = vector.shape_cast %616 : vector<1x1x8x128xf32> to vector<8x128xf32>
    %c2_56 = arith.constant 2 : index
    %c2_57 = arith.constant 2 : index
    %c0_58 = arith.constant 0 : index
    %c0_59 = arith.constant 0 : index
    %618 = vector.load %arg2[%c2_56, %c2_57, %c0_58, %c0_59] : memref<4x3x8x128xf32, #tpu.memory_space<vmem>>, vector<1x1x8x128xf32>
    %619 = vector.shape_cast %618 : vector<1x1x8x128xf32> to vector<8x128xf32>
    %c138 = arith.constant 138 : index
    %620 = memref.load %arg1[%c138] : memref<276xf32, #tpu.memory_space<smem>>
    %621 = vector.broadcast %620 : f32 to vector<8x128xf32>
    %622 = arith.addf %615, %621 : vector<8x128xf32>
    %c139 = arith.constant 139 : index
    %623 = memref.load %arg1[%c139] : memref<276xf32, #tpu.memory_space<smem>>
    %624 = vector.broadcast %623 : f32 to vector<8x128xf32>
    %625 = arith.addf %617, %624 : vector<8x128xf32>
    %c140 = arith.constant 140 : index
    %626 = memref.load %arg1[%c140] : memref<276xf32, #tpu.memory_space<smem>>
    %627 = vector.broadcast %626 : f32 to vector<8x128xf32>
    %628 = arith.addf %619, %627 : vector<8x128xf32>
    %c141 = arith.constant 141 : index
    %629 = memref.load %arg1[%c141] : memref<276xf32, #tpu.memory_space<smem>>
    %630 = vector.broadcast %629 : f32 to vector<8x128xf32>
    %631 = arith.mulf %630, %615 : vector<8x128xf32>
    %632 = arith.addf %622, %631 : vector<8x128xf32>
    %c142 = arith.constant 142 : index
    %633 = memref.load %arg1[%c142] : memref<276xf32, #tpu.memory_space<smem>>
    %634 = vector.broadcast %633 : f32 to vector<8x128xf32>
    %635 = arith.mulf %634, %615 : vector<8x128xf32>
    %636 = arith.addf %625, %635 : vector<8x128xf32>
    %c143 = arith.constant 143 : index
    %637 = memref.load %arg1[%c143] : memref<276xf32, #tpu.memory_space<smem>>
    %638 = vector.broadcast %637 : f32 to vector<8x128xf32>
    %639 = arith.mulf %638, %615 : vector<8x128xf32>
    %640 = arith.addf %628, %639 : vector<8x128xf32>
    %c144 = arith.constant 144 : index
    %641 = memref.load %arg1[%c144] : memref<276xf32, #tpu.memory_space<smem>>
    %642 = vector.broadcast %641 : f32 to vector<8x128xf32>
    %643 = arith.mulf %642, %617 : vector<8x128xf32>
    %644 = arith.addf %632, %643 : vector<8x128xf32>
    %c145 = arith.constant 145 : index
    %645 = memref.load %arg1[%c145] : memref<276xf32, #tpu.memory_space<smem>>
    %646 = vector.broadcast %645 : f32 to vector<8x128xf32>
    %647 = arith.mulf %646, %617 : vector<8x128xf32>
    %648 = arith.addf %636, %647 : vector<8x128xf32>
    %c146 = arith.constant 146 : index
    %649 = memref.load %arg1[%c146] : memref<276xf32, #tpu.memory_space<smem>>
    %650 = vector.broadcast %649 : f32 to vector<8x128xf32>
    %651 = arith.mulf %650, %617 : vector<8x128xf32>
    %652 = arith.addf %640, %651 : vector<8x128xf32>
    %c147 = arith.constant 147 : index
    %653 = memref.load %arg1[%c147] : memref<276xf32, #tpu.memory_space<smem>>
    %654 = vector.broadcast %653 : f32 to vector<8x128xf32>
    %655 = arith.mulf %654, %619 : vector<8x128xf32>
    %656 = arith.addf %644, %655 : vector<8x128xf32>
    %c148 = arith.constant 148 : index
    %657 = memref.load %arg1[%c148] : memref<276xf32, #tpu.memory_space<smem>>
    %658 = vector.broadcast %657 : f32 to vector<8x128xf32>
    %659 = arith.mulf %658, %619 : vector<8x128xf32>
    %660 = arith.addf %648, %659 : vector<8x128xf32>
    %c149 = arith.constant 149 : index
    %661 = memref.load %arg1[%c149] : memref<276xf32, #tpu.memory_space<smem>>
    %662 = vector.broadcast %661 : f32 to vector<8x128xf32>
    %663 = arith.mulf %662, %619 : vector<8x128xf32>
    %664 = arith.addf %652, %663 : vector<8x128xf32>
    %665 = arith.mulf %615, %615 : vector<8x128xf32>
    %c150 = arith.constant 150 : index
    %666 = memref.load %arg1[%c150] : memref<276xf32, #tpu.memory_space<smem>>
    %667 = vector.broadcast %666 : f32 to vector<8x128xf32>
    %668 = arith.mulf %667, %665 : vector<8x128xf32>
    %669 = arith.addf %656, %668 : vector<8x128xf32>
    %c151 = arith.constant 151 : index
    %670 = memref.load %arg1[%c151] : memref<276xf32, #tpu.memory_space<smem>>
    %671 = vector.broadcast %670 : f32 to vector<8x128xf32>
    %672 = arith.mulf %671, %665 : vector<8x128xf32>
    %673 = arith.addf %660, %672 : vector<8x128xf32>
    %c152 = arith.constant 152 : index
    %674 = memref.load %arg1[%c152] : memref<276xf32, #tpu.memory_space<smem>>
    %675 = vector.broadcast %674 : f32 to vector<8x128xf32>
    %676 = arith.mulf %675, %665 : vector<8x128xf32>
    %677 = arith.addf %664, %676 : vector<8x128xf32>
    %678 = arith.mulf %615, %617 : vector<8x128xf32>
    %c153 = arith.constant 153 : index
    %679 = memref.load %arg1[%c153] : memref<276xf32, #tpu.memory_space<smem>>
    %680 = vector.broadcast %679 : f32 to vector<8x128xf32>
    %681 = arith.mulf %680, %678 : vector<8x128xf32>
    %682 = arith.addf %669, %681 : vector<8x128xf32>
    %c154 = arith.constant 154 : index
    %683 = memref.load %arg1[%c154] : memref<276xf32, #tpu.memory_space<smem>>
    %684 = vector.broadcast %683 : f32 to vector<8x128xf32>
    %685 = arith.mulf %684, %678 : vector<8x128xf32>
    %686 = arith.addf %673, %685 : vector<8x128xf32>
    %c155 = arith.constant 155 : index
    %687 = memref.load %arg1[%c155] : memref<276xf32, #tpu.memory_space<smem>>
    %688 = vector.broadcast %687 : f32 to vector<8x128xf32>
    %689 = arith.mulf %688, %678 : vector<8x128xf32>
    %690 = arith.addf %677, %689 : vector<8x128xf32>
    %691 = arith.mulf %615, %619 : vector<8x128xf32>
    %c156 = arith.constant 156 : index
    %692 = memref.load %arg1[%c156] : memref<276xf32, #tpu.memory_space<smem>>
    %693 = vector.broadcast %692 : f32 to vector<8x128xf32>
    %694 = arith.mulf %693, %691 : vector<8x128xf32>
    %695 = arith.addf %682, %694 : vector<8x128xf32>
    %c157 = arith.constant 157 : index
    %696 = memref.load %arg1[%c157] : memref<276xf32, #tpu.memory_space<smem>>
    %697 = vector.broadcast %696 : f32 to vector<8x128xf32>
    %698 = arith.mulf %697, %691 : vector<8x128xf32>
    %699 = arith.addf %686, %698 : vector<8x128xf32>
    %c158 = arith.constant 158 : index
    %700 = memref.load %arg1[%c158] : memref<276xf32, #tpu.memory_space<smem>>
    %701 = vector.broadcast %700 : f32 to vector<8x128xf32>
    %702 = arith.mulf %701, %691 : vector<8x128xf32>
    %703 = arith.addf %690, %702 : vector<8x128xf32>
    %704 = arith.mulf %617, %617 : vector<8x128xf32>
    %c159 = arith.constant 159 : index
    %705 = memref.load %arg1[%c159] : memref<276xf32, #tpu.memory_space<smem>>
    %706 = vector.broadcast %705 : f32 to vector<8x128xf32>
    %707 = arith.mulf %706, %704 : vector<8x128xf32>
    %708 = arith.addf %695, %707 : vector<8x128xf32>
    %c160 = arith.constant 160 : index
    %709 = memref.load %arg1[%c160] : memref<276xf32, #tpu.memory_space<smem>>
    %710 = vector.broadcast %709 : f32 to vector<8x128xf32>
    %711 = arith.mulf %710, %704 : vector<8x128xf32>
    %712 = arith.addf %699, %711 : vector<8x128xf32>
    %c161 = arith.constant 161 : index
    %713 = memref.load %arg1[%c161] : memref<276xf32, #tpu.memory_space<smem>>
    %714 = vector.broadcast %713 : f32 to vector<8x128xf32>
    %715 = arith.mulf %714, %704 : vector<8x128xf32>
    %716 = arith.addf %703, %715 : vector<8x128xf32>
    %717 = arith.mulf %617, %619 : vector<8x128xf32>
    %c162 = arith.constant 162 : index
    %718 = memref.load %arg1[%c162] : memref<276xf32, #tpu.memory_space<smem>>
    %719 = vector.broadcast %718 : f32 to vector<8x128xf32>
    %720 = arith.mulf %719, %717 : vector<8x128xf32>
    %721 = arith.addf %708, %720 : vector<8x128xf32>
    %c163 = arith.constant 163 : index
    %722 = memref.load %arg1[%c163] : memref<276xf32, #tpu.memory_space<smem>>
    %723 = vector.broadcast %722 : f32 to vector<8x128xf32>
    %724 = arith.mulf %723, %717 : vector<8x128xf32>
    %725 = arith.addf %712, %724 : vector<8x128xf32>
    %c164 = arith.constant 164 : index
    %726 = memref.load %arg1[%c164] : memref<276xf32, #tpu.memory_space<smem>>
    %727 = vector.broadcast %726 : f32 to vector<8x128xf32>
    %728 = arith.mulf %727, %717 : vector<8x128xf32>
    %729 = arith.addf %716, %728 : vector<8x128xf32>
    %730 = arith.mulf %619, %619 : vector<8x128xf32>
    %c165 = arith.constant 165 : index
    %731 = memref.load %arg1[%c165] : memref<276xf32, #tpu.memory_space<smem>>
    %732 = vector.broadcast %731 : f32 to vector<8x128xf32>
    %733 = arith.mulf %732, %730 : vector<8x128xf32>
    %734 = arith.addf %721, %733 : vector<8x128xf32>
    %c166 = arith.constant 166 : index
    %735 = memref.load %arg1[%c166] : memref<276xf32, #tpu.memory_space<smem>>
    %736 = vector.broadcast %735 : f32 to vector<8x128xf32>
    %737 = arith.mulf %736, %730 : vector<8x128xf32>
    %738 = arith.addf %725, %737 : vector<8x128xf32>
    %c167 = arith.constant 167 : index
    %739 = memref.load %arg1[%c167] : memref<276xf32, #tpu.memory_space<smem>>
    %740 = vector.broadcast %739 : f32 to vector<8x128xf32>
    %741 = arith.mulf %740, %730 : vector<8x128xf32>
    %742 = arith.addf %729, %741 : vector<8x128xf32>
    %743 = arith.mulf %665, %615 : vector<8x128xf32>
    %c168 = arith.constant 168 : index
    %744 = memref.load %arg1[%c168] : memref<276xf32, #tpu.memory_space<smem>>
    %745 = vector.broadcast %744 : f32 to vector<8x128xf32>
    %746 = arith.mulf %745, %743 : vector<8x128xf32>
    %747 = arith.addf %734, %746 : vector<8x128xf32>
    %c169 = arith.constant 169 : index
    %748 = memref.load %arg1[%c169] : memref<276xf32, #tpu.memory_space<smem>>
    %749 = vector.broadcast %748 : f32 to vector<8x128xf32>
    %750 = arith.mulf %749, %743 : vector<8x128xf32>
    %751 = arith.addf %738, %750 : vector<8x128xf32>
    %c170 = arith.constant 170 : index
    %752 = memref.load %arg1[%c170] : memref<276xf32, #tpu.memory_space<smem>>
    %753 = vector.broadcast %752 : f32 to vector<8x128xf32>
    %754 = arith.mulf %753, %743 : vector<8x128xf32>
    %755 = arith.addf %742, %754 : vector<8x128xf32>
    %756 = arith.mulf %665, %617 : vector<8x128xf32>
    %c171 = arith.constant 171 : index
    %757 = memref.load %arg1[%c171] : memref<276xf32, #tpu.memory_space<smem>>
    %758 = vector.broadcast %757 : f32 to vector<8x128xf32>
    %759 = arith.mulf %758, %756 : vector<8x128xf32>
    %760 = arith.addf %747, %759 : vector<8x128xf32>
    %c172 = arith.constant 172 : index
    %761 = memref.load %arg1[%c172] : memref<276xf32, #tpu.memory_space<smem>>
    %762 = vector.broadcast %761 : f32 to vector<8x128xf32>
    %763 = arith.mulf %762, %756 : vector<8x128xf32>
    %764 = arith.addf %751, %763 : vector<8x128xf32>
    %c173 = arith.constant 173 : index
    %765 = memref.load %arg1[%c173] : memref<276xf32, #tpu.memory_space<smem>>
    %766 = vector.broadcast %765 : f32 to vector<8x128xf32>
    %767 = arith.mulf %766, %756 : vector<8x128xf32>
    %768 = arith.addf %755, %767 : vector<8x128xf32>
    %769 = arith.mulf %665, %619 : vector<8x128xf32>
    %c174 = arith.constant 174 : index
    %770 = memref.load %arg1[%c174] : memref<276xf32, #tpu.memory_space<smem>>
    %771 = vector.broadcast %770 : f32 to vector<8x128xf32>
    %772 = arith.mulf %771, %769 : vector<8x128xf32>
    %773 = arith.addf %760, %772 : vector<8x128xf32>
    %c175 = arith.constant 175 : index
    %774 = memref.load %arg1[%c175] : memref<276xf32, #tpu.memory_space<smem>>
    %775 = vector.broadcast %774 : f32 to vector<8x128xf32>
    %776 = arith.mulf %775, %769 : vector<8x128xf32>
    %777 = arith.addf %764, %776 : vector<8x128xf32>
    %c176 = arith.constant 176 : index
    %778 = memref.load %arg1[%c176] : memref<276xf32, #tpu.memory_space<smem>>
    %779 = vector.broadcast %778 : f32 to vector<8x128xf32>
    %780 = arith.mulf %779, %769 : vector<8x128xf32>
    %781 = arith.addf %768, %780 : vector<8x128xf32>
    %782 = arith.mulf %678, %617 : vector<8x128xf32>
    %c177 = arith.constant 177 : index
    %783 = memref.load %arg1[%c177] : memref<276xf32, #tpu.memory_space<smem>>
    %784 = vector.broadcast %783 : f32 to vector<8x128xf32>
    %785 = arith.mulf %784, %782 : vector<8x128xf32>
    %786 = arith.addf %773, %785 : vector<8x128xf32>
    %c178 = arith.constant 178 : index
    %787 = memref.load %arg1[%c178] : memref<276xf32, #tpu.memory_space<smem>>
    %788 = vector.broadcast %787 : f32 to vector<8x128xf32>
    %789 = arith.mulf %788, %782 : vector<8x128xf32>
    %790 = arith.addf %777, %789 : vector<8x128xf32>
    %c179 = arith.constant 179 : index
    %791 = memref.load %arg1[%c179] : memref<276xf32, #tpu.memory_space<smem>>
    %792 = vector.broadcast %791 : f32 to vector<8x128xf32>
    %793 = arith.mulf %792, %782 : vector<8x128xf32>
    %794 = arith.addf %781, %793 : vector<8x128xf32>
    %795 = arith.mulf %678, %619 : vector<8x128xf32>
    %c180 = arith.constant 180 : index
    %796 = memref.load %arg1[%c180] : memref<276xf32, #tpu.memory_space<smem>>
    %797 = vector.broadcast %796 : f32 to vector<8x128xf32>
    %798 = arith.mulf %797, %795 : vector<8x128xf32>
    %799 = arith.addf %786, %798 : vector<8x128xf32>
    %c181 = arith.constant 181 : index
    %800 = memref.load %arg1[%c181] : memref<276xf32, #tpu.memory_space<smem>>
    %801 = vector.broadcast %800 : f32 to vector<8x128xf32>
    %802 = arith.mulf %801, %795 : vector<8x128xf32>
    %803 = arith.addf %790, %802 : vector<8x128xf32>
    %c182 = arith.constant 182 : index
    %804 = memref.load %arg1[%c182] : memref<276xf32, #tpu.memory_space<smem>>
    %805 = vector.broadcast %804 : f32 to vector<8x128xf32>
    %806 = arith.mulf %805, %795 : vector<8x128xf32>
    %807 = arith.addf %794, %806 : vector<8x128xf32>
    %808 = arith.mulf %691, %619 : vector<8x128xf32>
    %c183 = arith.constant 183 : index
    %809 = memref.load %arg1[%c183] : memref<276xf32, #tpu.memory_space<smem>>
    %810 = vector.broadcast %809 : f32 to vector<8x128xf32>
    %811 = arith.mulf %810, %808 : vector<8x128xf32>
    %812 = arith.addf %799, %811 : vector<8x128xf32>
    %c184 = arith.constant 184 : index
    %813 = memref.load %arg1[%c184] : memref<276xf32, #tpu.memory_space<smem>>
    %814 = vector.broadcast %813 : f32 to vector<8x128xf32>
    %815 = arith.mulf %814, %808 : vector<8x128xf32>
    %816 = arith.addf %803, %815 : vector<8x128xf32>
    %c185 = arith.constant 185 : index
    %817 = memref.load %arg1[%c185] : memref<276xf32, #tpu.memory_space<smem>>
    %818 = vector.broadcast %817 : f32 to vector<8x128xf32>
    %819 = arith.mulf %818, %808 : vector<8x128xf32>
    %820 = arith.addf %807, %819 : vector<8x128xf32>
    %821 = arith.mulf %704, %617 : vector<8x128xf32>
    %c186 = arith.constant 186 : index
    %822 = memref.load %arg1[%c186] : memref<276xf32, #tpu.memory_space<smem>>
    %823 = vector.broadcast %822 : f32 to vector<8x128xf32>
    %824 = arith.mulf %823, %821 : vector<8x128xf32>
    %825 = arith.addf %812, %824 : vector<8x128xf32>
    %c187 = arith.constant 187 : index
    %826 = memref.load %arg1[%c187] : memref<276xf32, #tpu.memory_space<smem>>
    %827 = vector.broadcast %826 : f32 to vector<8x128xf32>
    %828 = arith.mulf %827, %821 : vector<8x128xf32>
    %829 = arith.addf %816, %828 : vector<8x128xf32>
    %c188 = arith.constant 188 : index
    %830 = memref.load %arg1[%c188] : memref<276xf32, #tpu.memory_space<smem>>
    %831 = vector.broadcast %830 : f32 to vector<8x128xf32>
    %832 = arith.mulf %831, %821 : vector<8x128xf32>
    %833 = arith.addf %820, %832 : vector<8x128xf32>
    %834 = arith.mulf %704, %619 : vector<8x128xf32>
    %c189 = arith.constant 189 : index
    %835 = memref.load %arg1[%c189] : memref<276xf32, #tpu.memory_space<smem>>
    %836 = vector.broadcast %835 : f32 to vector<8x128xf32>
    %837 = arith.mulf %836, %834 : vector<8x128xf32>
    %838 = arith.addf %825, %837 : vector<8x128xf32>
    %c190 = arith.constant 190 : index
    %839 = memref.load %arg1[%c190] : memref<276xf32, #tpu.memory_space<smem>>
    %840 = vector.broadcast %839 : f32 to vector<8x128xf32>
    %841 = arith.mulf %840, %834 : vector<8x128xf32>
    %842 = arith.addf %829, %841 : vector<8x128xf32>
    %c191 = arith.constant 191 : index
    %843 = memref.load %arg1[%c191] : memref<276xf32, #tpu.memory_space<smem>>
    %844 = vector.broadcast %843 : f32 to vector<8x128xf32>
    %845 = arith.mulf %844, %834 : vector<8x128xf32>
    %846 = arith.addf %833, %845 : vector<8x128xf32>
    %847 = arith.mulf %717, %619 : vector<8x128xf32>
    %c192 = arith.constant 192 : index
    %848 = memref.load %arg1[%c192] : memref<276xf32, #tpu.memory_space<smem>>
    %849 = vector.broadcast %848 : f32 to vector<8x128xf32>
    %850 = arith.mulf %849, %847 : vector<8x128xf32>
    %851 = arith.addf %838, %850 : vector<8x128xf32>
    %c193 = arith.constant 193 : index
    %852 = memref.load %arg1[%c193] : memref<276xf32, #tpu.memory_space<smem>>
    %853 = vector.broadcast %852 : f32 to vector<8x128xf32>
    %854 = arith.mulf %853, %847 : vector<8x128xf32>
    %855 = arith.addf %842, %854 : vector<8x128xf32>
    %c194 = arith.constant 194 : index
    %856 = memref.load %arg1[%c194] : memref<276xf32, #tpu.memory_space<smem>>
    %857 = vector.broadcast %856 : f32 to vector<8x128xf32>
    %858 = arith.mulf %857, %847 : vector<8x128xf32>
    %859 = arith.addf %846, %858 : vector<8x128xf32>
    %860 = arith.mulf %730, %619 : vector<8x128xf32>
    %c195 = arith.constant 195 : index
    %861 = memref.load %arg1[%c195] : memref<276xf32, #tpu.memory_space<smem>>
    %862 = vector.broadcast %861 : f32 to vector<8x128xf32>
    %863 = arith.mulf %862, %860 : vector<8x128xf32>
    %864 = arith.addf %851, %863 : vector<8x128xf32>
    %c196 = arith.constant 196 : index
    %865 = memref.load %arg1[%c196] : memref<276xf32, #tpu.memory_space<smem>>
    %866 = vector.broadcast %865 : f32 to vector<8x128xf32>
    %867 = arith.mulf %866, %860 : vector<8x128xf32>
    %868 = arith.addf %855, %867 : vector<8x128xf32>
    %c197 = arith.constant 197 : index
    %869 = memref.load %arg1[%c197] : memref<276xf32, #tpu.memory_space<smem>>
    %870 = vector.broadcast %869 : f32 to vector<8x128xf32>
    %871 = arith.mulf %870, %860 : vector<8x128xf32>
    %872 = arith.addf %859, %871 : vector<8x128xf32>
    %873 = math.sin %615 : vector<8x128xf32>
    %c198 = arith.constant 198 : index
    %874 = memref.load %arg1[%c198] : memref<276xf32, #tpu.memory_space<smem>>
    %875 = vector.broadcast %874 : f32 to vector<8x128xf32>
    %876 = arith.mulf %875, %873 : vector<8x128xf32>
    %877 = arith.addf %864, %876 : vector<8x128xf32>
    %c199 = arith.constant 199 : index
    %878 = memref.load %arg1[%c199] : memref<276xf32, #tpu.memory_space<smem>>
    %879 = vector.broadcast %878 : f32 to vector<8x128xf32>
    %880 = arith.mulf %879, %873 : vector<8x128xf32>
    %881 = arith.addf %868, %880 : vector<8x128xf32>
    %c200 = arith.constant 200 : index
    %882 = memref.load %arg1[%c200] : memref<276xf32, #tpu.memory_space<smem>>
    %883 = vector.broadcast %882 : f32 to vector<8x128xf32>
    %884 = arith.mulf %883, %873 : vector<8x128xf32>
    %885 = arith.addf %872, %884 : vector<8x128xf32>
    %886 = math.sin %617 : vector<8x128xf32>
    %c201 = arith.constant 201 : index
    %887 = memref.load %arg1[%c201] : memref<276xf32, #tpu.memory_space<smem>>
    %888 = vector.broadcast %887 : f32 to vector<8x128xf32>
    %889 = arith.mulf %888, %886 : vector<8x128xf32>
    %890 = arith.addf %877, %889 : vector<8x128xf32>
    %c202 = arith.constant 202 : index
    %891 = memref.load %arg1[%c202] : memref<276xf32, #tpu.memory_space<smem>>
    %892 = vector.broadcast %891 : f32 to vector<8x128xf32>
    %893 = arith.mulf %892, %886 : vector<8x128xf32>
    %894 = arith.addf %881, %893 : vector<8x128xf32>
    %c203 = arith.constant 203 : index
    %895 = memref.load %arg1[%c203] : memref<276xf32, #tpu.memory_space<smem>>
    %896 = vector.broadcast %895 : f32 to vector<8x128xf32>
    %897 = arith.mulf %896, %886 : vector<8x128xf32>
    %898 = arith.addf %885, %897 : vector<8x128xf32>
    %899 = math.sin %619 : vector<8x128xf32>
    %c204 = arith.constant 204 : index
    %900 = memref.load %arg1[%c204] : memref<276xf32, #tpu.memory_space<smem>>
    %901 = vector.broadcast %900 : f32 to vector<8x128xf32>
    %902 = arith.mulf %901, %899 : vector<8x128xf32>
    %903 = arith.addf %890, %902 : vector<8x128xf32>
    %c205 = arith.constant 205 : index
    %904 = memref.load %arg1[%c205] : memref<276xf32, #tpu.memory_space<smem>>
    %905 = vector.broadcast %904 : f32 to vector<8x128xf32>
    %906 = arith.mulf %905, %899 : vector<8x128xf32>
    %907 = arith.addf %894, %906 : vector<8x128xf32>
    %c206 = arith.constant 206 : index
    %908 = memref.load %arg1[%c206] : memref<276xf32, #tpu.memory_space<smem>>
    %909 = vector.broadcast %908 : f32 to vector<8x128xf32>
    %910 = arith.mulf %909, %899 : vector<8x128xf32>
    %911 = arith.addf %898, %910 : vector<8x128xf32>
    %c2_60 = arith.constant 2 : index
    %c0_61 = arith.constant 0 : index
    %c0_62 = arith.constant 0 : index
    %c0_63 = arith.constant 0 : index
    %912 = vector.load %arg3[%c2_60, %c0_61, %c0_62, %c0_63] : memref<4x3x8x128xf32, #tpu.memory_space<vmem>>, vector<1x1x8x128xf32>
    %913 = vector.shape_cast %912 : vector<1x1x8x128xf32> to vector<8x128xf32>
    %914 = vector.shape_cast %903 : vector<8x128xf32> to vector<1x1x8x128xf32>
    tpu.vector_store %arg3[%c2_60, %c0_61, %c0_62, %c0_63], %914 {strides = array<i32>} : memref<4x3x8x128xf32, #tpu.memory_space<vmem>>, vector<1x1x8x128xf32>,
    %c2_64 = arith.constant 2 : index
    %c1_65 = arith.constant 1 : index
    %c0_66 = arith.constant 0 : index
    %c0_67 = arith.constant 0 : index
    %915 = vector.load %arg3[%c2_64, %c1_65, %c0_66, %c0_67] : memref<4x3x8x128xf32, #tpu.memory_space<vmem>>, vector<1x1x8x128xf32>
    %916 = vector.shape_cast %915 : vector<1x1x8x128xf32> to vector<8x128xf32>
    %917 = vector.shape_cast %907 : vector<8x128xf32> to vector<1x1x8x128xf32>
    tpu.vector_store %arg3[%c2_64, %c1_65, %c0_66, %c0_67], %917 {strides = array<i32>} : memref<4x3x8x128xf32, #tpu.memory_space<vmem>>, vector<1x1x8x128xf32>,
    %c2_68 = arith.constant 2 : index
    %c2_69 = arith.constant 2 : index
    %c0_70 = arith.constant 0 : index
    %c0_71 = arith.constant 0 : index
    %918 = vector.load %arg3[%c2_68, %c2_69, %c0_70, %c0_71] : memref<4x3x8x128xf32, #tpu.memory_space<vmem>>, vector<1x1x8x128xf32>
    %919 = vector.shape_cast %918 : vector<1x1x8x128xf32> to vector<8x128xf32>
    %920 = vector.shape_cast %911 : vector<8x128xf32> to vector<1x1x8x128xf32>
    tpu.vector_store %arg3[%c2_68, %c2_69, %c0_70, %c0_71], %920 {strides = array<i32>} : memref<4x3x8x128xf32, #tpu.memory_space<vmem>>, vector<1x1x8x128xf32>,
    %c3_72 = arith.constant 3 : index
    %c0_73 = arith.constant 0 : index
    %c0_74 = arith.constant 0 : index
    %c0_75 = arith.constant 0 : index
    %921 = vector.load %arg2[%c3_72, %c0_73, %c0_74, %c0_75] : memref<4x3x8x128xf32, #tpu.memory_space<vmem>>, vector<1x1x8x128xf32>
    %922 = vector.shape_cast %921 : vector<1x1x8x128xf32> to vector<8x128xf32>
    %c3_76 = arith.constant 3 : index
    %c1_77 = arith.constant 1 : index
    %c0_78 = arith.constant 0 : index
    %c0_79 = arith.constant 0 : index
    %923 = vector.load %arg2[%c3_76, %c1_77, %c0_78, %c0_79] : memref<4x3x8x128xf32, #tpu.memory_space<vmem>>, vector<1x1x8x128xf32>
    %924 = vector.shape_cast %923 : vector<1x1x8x128xf32> to vector<8x128xf32>
    %c3_80 = arith.constant 3 : index
    %c2_81 = arith.constant 2 : index
    %c0_82 = arith.constant 0 : index
    %c0_83 = arith.constant 0 : index
    %925 = vector.load %arg2[%c3_80, %c2_81, %c0_82, %c0_83] : memref<4x3x8x128xf32, #tpu.memory_space<vmem>>, vector<1x1x8x128xf32>
    %926 = vector.shape_cast %925 : vector<1x1x8x128xf32> to vector<8x128xf32>
    %c207 = arith.constant 207 : index
    %927 = memref.load %arg1[%c207] : memref<276xf32, #tpu.memory_space<smem>>
    %928 = vector.broadcast %927 : f32 to vector<8x128xf32>
    %929 = arith.addf %922, %928 : vector<8x128xf32>
    %c208 = arith.constant 208 : index
    %930 = memref.load %arg1[%c208] : memref<276xf32, #tpu.memory_space<smem>>
    %931 = vector.broadcast %930 : f32 to vector<8x128xf32>
    %932 = arith.addf %924, %931 : vector<8x128xf32>
    %c209 = arith.constant 209 : index
    %933 = memref.load %arg1[%c209] : memref<276xf32, #tpu.memory_space<smem>>
    %934 = vector.broadcast %933 : f32 to vector<8x128xf32>
    %935 = arith.addf %926, %934 : vector<8x128xf32>
    %c210 = arith.constant 210 : index
    %936 = memref.load %arg1[%c210] : memref<276xf32, #tpu.memory_space<smem>>
    %937 = vector.broadcast %936 : f32 to vector<8x128xf32>
    %938 = arith.mulf %937, %922 : vector<8x128xf32>
    %939 = arith.addf %929, %938 : vector<8x128xf32>
    %c211 = arith.constant 211 : index
    %940 = memref.load %arg1[%c211] : memref<276xf32, #tpu.memory_space<smem>>
    %941 = vector.broadcast %940 : f32 to vector<8x128xf32>
    %942 = arith.mulf %941, %922 : vector<8x128xf32>
    %943 = arith.addf %932, %942 : vector<8x128xf32>
    %c212 = arith.constant 212 : index
    %944 = memref.load %arg1[%c212] : memref<276xf32, #tpu.memory_space<smem>>
    %945 = vector.broadcast %944 : f32 to vector<8x128xf32>
    %946 = arith.mulf %945, %922 : vector<8x128xf32>
    %947 = arith.addf %935, %946 : vector<8x128xf32>
    %c213 = arith.constant 213 : index
    %948 = memref.load %arg1[%c213] : memref<276xf32, #tpu.memory_space<smem>>
    %949 = vector.broadcast %948 : f32 to vector<8x128xf32>
    %950 = arith.mulf %949, %924 : vector<8x128xf32>
    %951 = arith.addf %939, %950 : vector<8x128xf32>
    %c214 = arith.constant 214 : index
    %952 = memref.load %arg1[%c214] : memref<276xf32, #tpu.memory_space<smem>>
    %953 = vector.broadcast %952 : f32 to vector<8x128xf32>
    %954 = arith.mulf %953, %924 : vector<8x128xf32>
    %955 = arith.addf %943, %954 : vector<8x128xf32>
    %c215 = arith.constant 215 : index
    %956 = memref.load %arg1[%c215] : memref<276xf32, #tpu.memory_space<smem>>
    %957 = vector.broadcast %956 : f32 to vector<8x128xf32>
    %958 = arith.mulf %957, %924 : vector<8x128xf32>
    %959 = arith.addf %947, %958 : vector<8x128xf32>
    %c216 = arith.constant 216 : index
    %960 = memref.load %arg1[%c216] : memref<276xf32, #tpu.memory_space<smem>>
    %961 = vector.broadcast %960 : f32 to vector<8x128xf32>
    %962 = arith.mulf %961, %926 : vector<8x128xf32>
    %963 = arith.addf %951, %962 : vector<8x128xf32>
    %c217 = arith.constant 217 : index
    %964 = memref.load %arg1[%c217] : memref<276xf32, #tpu.memory_space<smem>>
    %965 = vector.broadcast %964 : f32 to vector<8x128xf32>
    %966 = arith.mulf %965, %926 : vector<8x128xf32>
    %967 = arith.addf %955, %966 : vector<8x128xf32>
    %c218 = arith.constant 218 : index
    %968 = memref.load %arg1[%c218] : memref<276xf32, #tpu.memory_space<smem>>
    %969 = vector.broadcast %968 : f32 to vector<8x128xf32>
    %970 = arith.mulf %969, %926 : vector<8x128xf32>
    %971 = arith.addf %959, %970 : vector<8x128xf32>
    %972 = arith.mulf %922, %922 : vector<8x128xf32>
    %c219 = arith.constant 219 : index
    %973 = memref.load %arg1[%c219] : memref<276xf32, #tpu.memory_space<smem>>
    %974 = vector.broadcast %973 : f32 to vector<8x128xf32>
    %975 = arith.mulf %974, %972 : vector<8x128xf32>
    %976 = arith.addf %963, %975 : vector<8x128xf32>
    %c220 = arith.constant 220 : index
    %977 = memref.load %arg1[%c220] : memref<276xf32, #tpu.memory_space<smem>>
    %978 = vector.broadcast %977 : f32 to vector<8x128xf32>
    %979 = arith.mulf %978, %972 : vector<8x128xf32>
    %980 = arith.addf %967, %979 : vector<8x128xf32>
    %c221 = arith.constant 221 : index
    %981 = memref.load %arg1[%c221] : memref<276xf32, #tpu.memory_space<smem>>
    %982 = vector.broadcast %981 : f32 to vector<8x128xf32>
    %983 = arith.mulf %982, %972 : vector<8x128xf32>
    %984 = arith.addf %971, %983 : vector<8x128xf32>
    %985 = arith.mulf %922, %924 : vector<8x128xf32>
    %c222 = arith.constant 222 : index
    %986 = memref.load %arg1[%c222] : memref<276xf32, #tpu.memory_space<smem>>
    %987 = vector.broadcast %986 : f32 to vector<8x128xf32>
    %988 = arith.mulf %987, %985 : vector<8x128xf32>
    %989 = arith.addf %976, %988 : vector<8x128xf32>
    %c223 = arith.constant 223 : index
    %990 = memref.load %arg1[%c223] : memref<276xf32, #tpu.memory_space<smem>>
    %991 = vector.broadcast %990 : f32 to vector<8x128xf32>
    %992 = arith.mulf %991, %985 : vector<8x128xf32>
    %993 = arith.addf %980, %992 : vector<8x128xf32>
    %c224 = arith.constant 224 : index
    %994 = memref.load %arg1[%c224] : memref<276xf32, #tpu.memory_space<smem>>
    %995 = vector.broadcast %994 : f32 to vector<8x128xf32>
    %996 = arith.mulf %995, %985 : vector<8x128xf32>
    %997 = arith.addf %984, %996 : vector<8x128xf32>
    %998 = arith.mulf %922, %926 : vector<8x128xf32>
    %c225 = arith.constant 225 : index
    %999 = memref.load %arg1[%c225] : memref<276xf32, #tpu.memory_space<smem>>
    %1000 = vector.broadcast %999 : f32 to vector<8x128xf32>
    %1001 = arith.mulf %1000, %998 : vector<8x128xf32>
    %1002 = arith.addf %989, %1001 : vector<8x128xf32>
    %c226 = arith.constant 226 : index
    %1003 = memref.load %arg1[%c226] : memref<276xf32, #tpu.memory_space<smem>>
    %1004 = vector.broadcast %1003 : f32 to vector<8x128xf32>
    %1005 = arith.mulf %1004, %998 : vector<8x128xf32>
    %1006 = arith.addf %993, %1005 : vector<8x128xf32>
    %c227 = arith.constant 227 : index
    %1007 = memref.load %arg1[%c227] : memref<276xf32, #tpu.memory_space<smem>>
    %1008 = vector.broadcast %1007 : f32 to vector<8x128xf32>
    %1009 = arith.mulf %1008, %998 : vector<8x128xf32>
    %1010 = arith.addf %997, %1009 : vector<8x128xf32>
    %1011 = arith.mulf %924, %924 : vector<8x128xf32>
    %c228 = arith.constant 228 : index
    %1012 = memref.load %arg1[%c228] : memref<276xf32, #tpu.memory_space<smem>>
    %1013 = vector.broadcast %1012 : f32 to vector<8x128xf32>
    %1014 = arith.mulf %1013, %1011 : vector<8x128xf32>
    %1015 = arith.addf %1002, %1014 : vector<8x128xf32>
    %c229 = arith.constant 229 : index
    %1016 = memref.load %arg1[%c229] : memref<276xf32, #tpu.memory_space<smem>>
    %1017 = vector.broadcast %1016 : f32 to vector<8x128xf32>
    %1018 = arith.mulf %1017, %1011 : vector<8x128xf32>
    %1019 = arith.addf %1006, %1018 : vector<8x128xf32>
    %c230 = arith.constant 230 : index
    %1020 = memref.load %arg1[%c230] : memref<276xf32, #tpu.memory_space<smem>>
    %1021 = vector.broadcast %1020 : f32 to vector<8x128xf32>
    %1022 = arith.mulf %1021, %1011 : vector<8x128xf32>
    %1023 = arith.addf %1010, %1022 : vector<8x128xf32>
    %1024 = arith.mulf %924, %926 : vector<8x128xf32>
    %c231 = arith.constant 231 : index
    %1025 = memref.load %arg1[%c231] : memref<276xf32, #tpu.memory_space<smem>>
    %1026 = vector.broadcast %1025 : f32 to vector<8x128xf32>
    %1027 = arith.mulf %1026, %1024 : vector<8x128xf32>
    %1028 = arith.addf %1015, %1027 : vector<8x128xf32>
    %c232 = arith.constant 232 : index
    %1029 = memref.load %arg1[%c232] : memref<276xf32, #tpu.memory_space<smem>>
    %1030 = vector.broadcast %1029 : f32 to vector<8x128xf32>
    %1031 = arith.mulf %1030, %1024 : vector<8x128xf32>
    %1032 = arith.addf %1019, %1031 : vector<8x128xf32>
    %c233 = arith.constant 233 : index
    %1033 = memref.load %arg1[%c233] : memref<276xf32, #tpu.memory_space<smem>>
    %1034 = vector.broadcast %1033 : f32 to vector<8x128xf32>
    %1035 = arith.mulf %1034, %1024 : vector<8x128xf32>
    %1036 = arith.addf %1023, %1035 : vector<8x128xf32>
    %1037 = arith.mulf %926, %926 : vector<8x128xf32>
    %c234 = arith.constant 234 : index
    %1038 = memref.load %arg1[%c234] : memref<276xf32, #tpu.memory_space<smem>>
    %1039 = vector.broadcast %1038 : f32 to vector<8x128xf32>
    %1040 = arith.mulf %1039, %1037 : vector<8x128xf32>
    %1041 = arith.addf %1028, %1040 : vector<8x128xf32>
    %c235 = arith.constant 235 : index
    %1042 = memref.load %arg1[%c235] : memref<276xf32, #tpu.memory_space<smem>>
    %1043 = vector.broadcast %1042 : f32 to vector<8x128xf32>
    %1044 = arith.mulf %1043, %1037 : vector<8x128xf32>
    %1045 = arith.addf %1032, %1044 : vector<8x128xf32>
    %c236 = arith.constant 236 : index
    %1046 = memref.load %arg1[%c236] : memref<276xf32, #tpu.memory_space<smem>>
    %1047 = vector.broadcast %1046 : f32 to vector<8x128xf32>
    %1048 = arith.mulf %1047, %1037 : vector<8x128xf32>
    %1049 = arith.addf %1036, %1048 : vector<8x128xf32>
    %1050 = arith.mulf %972, %922 : vector<8x128xf32>
    %c237 = arith.constant 237 : index
    %1051 = memref.load %arg1[%c237] : memref<276xf32, #tpu.memory_space<smem>>
    %1052 = vector.broadcast %1051 : f32 to vector<8x128xf32>
    %1053 = arith.mulf %1052, %1050 : vector<8x128xf32>
    %1054 = arith.addf %1041, %1053 : vector<8x128xf32>
    %c238 = arith.constant 238 : index
    %1055 = memref.load %arg1[%c238] : memref<276xf32, #tpu.memory_space<smem>>
    %1056 = vector.broadcast %1055 : f32 to vector<8x128xf32>
    %1057 = arith.mulf %1056, %1050 : vector<8x128xf32>
    %1058 = arith.addf %1045, %1057 : vector<8x128xf32>
    %c239 = arith.constant 239 : index
    %1059 = memref.load %arg1[%c239] : memref<276xf32, #tpu.memory_space<smem>>
    %1060 = vector.broadcast %1059 : f32 to vector<8x128xf32>
    %1061 = arith.mulf %1060, %1050 : vector<8x128xf32>
    %1062 = arith.addf %1049, %1061 : vector<8x128xf32>
    %1063 = arith.mulf %972, %924 : vector<8x128xf32>
    %c240 = arith.constant 240 : index
    %1064 = memref.load %arg1[%c240] : memref<276xf32, #tpu.memory_space<smem>>
    %1065 = vector.broadcast %1064 : f32 to vector<8x128xf32>
    %1066 = arith.mulf %1065, %1063 : vector<8x128xf32>
    %1067 = arith.addf %1054, %1066 : vector<8x128xf32>
    %c241 = arith.constant 241 : index
    %1068 = memref.load %arg1[%c241] : memref<276xf32, #tpu.memory_space<smem>>
    %1069 = vector.broadcast %1068 : f32 to vector<8x128xf32>
    %1070 = arith.mulf %1069, %1063 : vector<8x128xf32>
    %1071 = arith.addf %1058, %1070 : vector<8x128xf32>
    %c242 = arith.constant 242 : index
    %1072 = memref.load %arg1[%c242] : memref<276xf32, #tpu.memory_space<smem>>
    %1073 = vector.broadcast %1072 : f32 to vector<8x128xf32>
    %1074 = arith.mulf %1073, %1063 : vector<8x128xf32>
    %1075 = arith.addf %1062, %1074 : vector<8x128xf32>
    %1076 = arith.mulf %972, %926 : vector<8x128xf32>
    %c243 = arith.constant 243 : index
    %1077 = memref.load %arg1[%c243] : memref<276xf32, #tpu.memory_space<smem>>
    %1078 = vector.broadcast %1077 : f32 to vector<8x128xf32>
    %1079 = arith.mulf %1078, %1076 : vector<8x128xf32>
    %1080 = arith.addf %1067, %1079 : vector<8x128xf32>
    %c244 = arith.constant 244 : index
    %1081 = memref.load %arg1[%c244] : memref<276xf32, #tpu.memory_space<smem>>
    %1082 = vector.broadcast %1081 : f32 to vector<8x128xf32>
    %1083 = arith.mulf %1082, %1076 : vector<8x128xf32>
    %1084 = arith.addf %1071, %1083 : vector<8x128xf32>
    %c245 = arith.constant 245 : index
    %1085 = memref.load %arg1[%c245] : memref<276xf32, #tpu.memory_space<smem>>
    %1086 = vector.broadcast %1085 : f32 to vector<8x128xf32>
    %1087 = arith.mulf %1086, %1076 : vector<8x128xf32>
    %1088 = arith.addf %1075, %1087 : vector<8x128xf32>
    %1089 = arith.mulf %985, %924 : vector<8x128xf32>
    %c246 = arith.constant 246 : index
    %1090 = memref.load %arg1[%c246] : memref<276xf32, #tpu.memory_space<smem>>
    %1091 = vector.broadcast %1090 : f32 to vector<8x128xf32>
    %1092 = arith.mulf %1091, %1089 : vector<8x128xf32>
    %1093 = arith.addf %1080, %1092 : vector<8x128xf32>
    %c247 = arith.constant 247 : index
    %1094 = memref.load %arg1[%c247] : memref<276xf32, #tpu.memory_space<smem>>
    %1095 = vector.broadcast %1094 : f32 to vector<8x128xf32>
    %1096 = arith.mulf %1095, %1089 : vector<8x128xf32>
    %1097 = arith.addf %1084, %1096 : vector<8x128xf32>
    %c248 = arith.constant 248 : index
    %1098 = memref.load %arg1[%c248] : memref<276xf32, #tpu.memory_space<smem>>
    %1099 = vector.broadcast %1098 : f32 to vector<8x128xf32>
    %1100 = arith.mulf %1099, %1089 : vector<8x128xf32>
    %1101 = arith.addf %1088, %1100 : vector<8x128xf32>
    %1102 = arith.mulf %985, %926 : vector<8x128xf32>
    %c249 = arith.constant 249 : index
    %1103 = memref.load %arg1[%c249] : memref<276xf32, #tpu.memory_space<smem>>
    %1104 = vector.broadcast %1103 : f32 to vector<8x128xf32>
    %1105 = arith.mulf %1104, %1102 : vector<8x128xf32>
    %1106 = arith.addf %1093, %1105 : vector<8x128xf32>
    %c250 = arith.constant 250 : index
    %1107 = memref.load %arg1[%c250] : memref<276xf32, #tpu.memory_space<smem>>
    %1108 = vector.broadcast %1107 : f32 to vector<8x128xf32>
    %1109 = arith.mulf %1108, %1102 : vector<8x128xf32>
    %1110 = arith.addf %1097, %1109 : vector<8x128xf32>
    %c251 = arith.constant 251 : index
    %1111 = memref.load %arg1[%c251] : memref<276xf32, #tpu.memory_space<smem>>
    %1112 = vector.broadcast %1111 : f32 to vector<8x128xf32>
    %1113 = arith.mulf %1112, %1102 : vector<8x128xf32>
    %1114 = arith.addf %1101, %1113 : vector<8x128xf32>
    %1115 = arith.mulf %998, %926 : vector<8x128xf32>
    %c252 = arith.constant 252 : index
    %1116 = memref.load %arg1[%c252] : memref<276xf32, #tpu.memory_space<smem>>
    %1117 = vector.broadcast %1116 : f32 to vector<8x128xf32>
    %1118 = arith.mulf %1117, %1115 : vector<8x128xf32>
    %1119 = arith.addf %1106, %1118 : vector<8x128xf32>
    %c253 = arith.constant 253 : index
    %1120 = memref.load %arg1[%c253] : memref<276xf32, #tpu.memory_space<smem>>
    %1121 = vector.broadcast %1120 : f32 to vector<8x128xf32>
    %1122 = arith.mulf %1121, %1115 : vector<8x128xf32>
    %1123 = arith.addf %1110, %1122 : vector<8x128xf32>
    %c254 = arith.constant 254 : index
    %1124 = memref.load %arg1[%c254] : memref<276xf32, #tpu.memory_space<smem>>
    %1125 = vector.broadcast %1124 : f32 to vector<8x128xf32>
    %1126 = arith.mulf %1125, %1115 : vector<8x128xf32>
    %1127 = arith.addf %1114, %1126 : vector<8x128xf32>
    %1128 = arith.mulf %1011, %924 : vector<8x128xf32>
    %c255 = arith.constant 255 : index
    %1129 = memref.load %arg1[%c255] : memref<276xf32, #tpu.memory_space<smem>>
    %1130 = vector.broadcast %1129 : f32 to vector<8x128xf32>
    %1131 = arith.mulf %1130, %1128 : vector<8x128xf32>
    %1132 = arith.addf %1119, %1131 : vector<8x128xf32>
    %c256 = arith.constant 256 : index
    %1133 = memref.load %arg1[%c256] : memref<276xf32, #tpu.memory_space<smem>>
    %1134 = vector.broadcast %1133 : f32 to vector<8x128xf32>
    %1135 = arith.mulf %1134, %1128 : vector<8x128xf32>
    %1136 = arith.addf %1123, %1135 : vector<8x128xf32>
    %c257 = arith.constant 257 : index
    %1137 = memref.load %arg1[%c257] : memref<276xf32, #tpu.memory_space<smem>>
    %1138 = vector.broadcast %1137 : f32 to vector<8x128xf32>
    %1139 = arith.mulf %1138, %1128 : vector<8x128xf32>
    %1140 = arith.addf %1127, %1139 : vector<8x128xf32>
    %1141 = arith.mulf %1011, %926 : vector<8x128xf32>
    %c258 = arith.constant 258 : index
    %1142 = memref.load %arg1[%c258] : memref<276xf32, #tpu.memory_space<smem>>
    %1143 = vector.broadcast %1142 : f32 to vector<8x128xf32>
    %1144 = arith.mulf %1143, %1141 : vector<8x128xf32>
    %1145 = arith.addf %1132, %1144 : vector<8x128xf32>
    %c259 = arith.constant 259 : index
    %1146 = memref.load %arg1[%c259] : memref<276xf32, #tpu.memory_space<smem>>
    %1147 = vector.broadcast %1146 : f32 to vector<8x128xf32>
    %1148 = arith.mulf %1147, %1141 : vector<8x128xf32>
    %1149 = arith.addf %1136, %1148 : vector<8x128xf32>
    %c260 = arith.constant 260 : index
    %1150 = memref.load %arg1[%c260] : memref<276xf32, #tpu.memory_space<smem>>
    %1151 = vector.broadcast %1150 : f32 to vector<8x128xf32>
    %1152 = arith.mulf %1151, %1141 : vector<8x128xf32>
    %1153 = arith.addf %1140, %1152 : vector<8x128xf32>
    %1154 = arith.mulf %1024, %926 : vector<8x128xf32>
    %c261 = arith.constant 261 : index
    %1155 = memref.load %arg1[%c261] : memref<276xf32, #tpu.memory_space<smem>>
    %1156 = vector.broadcast %1155 : f32 to vector<8x128xf32>
    %1157 = arith.mulf %1156, %1154 : vector<8x128xf32>
    %1158 = arith.addf %1145, %1157 : vector<8x128xf32>
    %c262 = arith.constant 262 : index
    %1159 = memref.load %arg1[%c262] : memref<276xf32, #tpu.memory_space<smem>>
    %1160 = vector.broadcast %1159 : f32 to vector<8x128xf32>
    %1161 = arith.mulf %1160, %1154 : vector<8x128xf32>
    %1162 = arith.addf %1149, %1161 : vector<8x128xf32>
    %c263 = arith.constant 263 : index
    %1163 = memref.load %arg1[%c263] : memref<276xf32, #tpu.memory_space<smem>>
    %1164 = vector.broadcast %1163 : f32 to vector<8x128xf32>
    %1165 = arith.mulf %1164, %1154 : vector<8x128xf32>
    %1166 = arith.addf %1153, %1165 : vector<8x128xf32>
    %1167 = arith.mulf %1037, %926 : vector<8x128xf32>
    %c264 = arith.constant 264 : index
    %1168 = memref.load %arg1[%c264] : memref<276xf32, #tpu.memory_space<smem>>
    %1169 = vector.broadcast %1168 : f32 to vector<8x128xf32>
    %1170 = arith.mulf %1169, %1167 : vector<8x128xf32>
    %1171 = arith.addf %1158, %1170 : vector<8x128xf32>
    %c265 = arith.constant 265 : index
    %1172 = memref.load %arg1[%c265] : memref<276xf32, #tpu.memory_space<smem>>
    %1173 = vector.broadcast %1172 : f32 to vector<8x128xf32>
    %1174 = arith.mulf %1173, %1167 : vector<8x128xf32>
    %1175 = arith.addf %1162, %1174 : vector<8x128xf32>
    %c266 = arith.constant 266 : index
    %1176 = memref.load %arg1[%c266] : memref<276xf32, #tpu.memory_space<smem>>
    %1177 = vector.broadcast %1176 : f32 to vector<8x128xf32>
    %1178 = arith.mulf %1177, %1167 : vector<8x128xf32>
    %1179 = arith.addf %1166, %1178 : vector<8x128xf32>
    %1180 = math.sin %922 : vector<8x128xf32>
    %c267 = arith.constant 267 : index
    %1181 = memref.load %arg1[%c267] : memref<276xf32, #tpu.memory_space<smem>>
    %1182 = vector.broadcast %1181 : f32 to vector<8x128xf32>
    %1183 = arith.mulf %1182, %1180 : vector<8x128xf32>
    %1184 = arith.addf %1171, %1183 : vector<8x128xf32>
    %c268 = arith.constant 268 : index
    %1185 = memref.load %arg1[%c268] : memref<276xf32, #tpu.memory_space<smem>>
    %1186 = vector.broadcast %1185 : f32 to vector<8x128xf32>
    %1187 = arith.mulf %1186, %1180 : vector<8x128xf32>
    %1188 = arith.addf %1175, %1187 : vector<8x128xf32>
    %c269 = arith.constant 269 : index
    %1189 = memref.load %arg1[%c269] : memref<276xf32, #tpu.memory_space<smem>>
    %1190 = vector.broadcast %1189 : f32 to vector<8x128xf32>
    %1191 = arith.mulf %1190, %1180 : vector<8x128xf32>
    %1192 = arith.addf %1179, %1191 : vector<8x128xf32>
    %1193 = math.sin %924 : vector<8x128xf32>
    %c270 = arith.constant 270 : index
    %1194 = memref.load %arg1[%c270] : memref<276xf32, #tpu.memory_space<smem>>
    %1195 = vector.broadcast %1194 : f32 to vector<8x128xf32>
    %1196 = arith.mulf %1195, %1193 : vector<8x128xf32>
    %1197 = arith.addf %1184, %1196 : vector<8x128xf32>
    %c271 = arith.constant 271 : index
    %1198 = memref.load %arg1[%c271] : memref<276xf32, #tpu.memory_space<smem>>
    %1199 = vector.broadcast %1198 : f32 to vector<8x128xf32>
    %1200 = arith.mulf %1199, %1193 : vector<8x128xf32>
    %1201 = arith.addf %1188, %1200 : vector<8x128xf32>
    %c272 = arith.constant 272 : index
    %1202 = memref.load %arg1[%c272] : memref<276xf32, #tpu.memory_space<smem>>
    %1203 = vector.broadcast %1202 : f32 to vector<8x128xf32>
    %1204 = arith.mulf %1203, %1193 : vector<8x128xf32>
    %1205 = arith.addf %1192, %1204 : vector<8x128xf32>
    %1206 = math.sin %926 : vector<8x128xf32>
    %c273 = arith.constant 273 : index
    %1207 = memref.load %arg1[%c273] : memref<276xf32, #tpu.memory_space<smem>>
    %1208 = vector.broadcast %1207 : f32 to vector<8x128xf32>
    %1209 = arith.mulf %1208, %1206 : vector<8x128xf32>
    %1210 = arith.addf %1197, %1209 : vector<8x128xf32>
    %c274 = arith.constant 274 : index
    %1211 = memref.load %arg1[%c274] : memref<276xf32, #tpu.memory_space<smem>>
    %1212 = vector.broadcast %1211 : f32 to vector<8x128xf32>
    %1213 = arith.mulf %1212, %1206 : vector<8x128xf32>
    %1214 = arith.addf %1201, %1213 : vector<8x128xf32>
    %c275 = arith.constant 275 : index
    %1215 = memref.load %arg1[%c275] : memref<276xf32, #tpu.memory_space<smem>>
    %1216 = vector.broadcast %1215 : f32 to vector<8x128xf32>
    %1217 = arith.mulf %1216, %1206 : vector<8x128xf32>
    %1218 = arith.addf %1205, %1217 : vector<8x128xf32>
    %c3_84 = arith.constant 3 : index
    %c0_85 = arith.constant 0 : index
    %c0_86 = arith.constant 0 : index
    %c0_87 = arith.constant 0 : index
    %1219 = vector.load %arg3[%c3_84, %c0_85, %c0_86, %c0_87] : memref<4x3x8x128xf32, #tpu.memory_space<vmem>>, vector<1x1x8x128xf32>
    %1220 = vector.shape_cast %1219 : vector<1x1x8x128xf32> to vector<8x128xf32>
    %1221 = vector.shape_cast %1210 : vector<8x128xf32> to vector<1x1x8x128xf32>
    tpu.vector_store %arg3[%c3_84, %c0_85, %c0_86, %c0_87], %1221 {strides = array<i32>} : memref<4x3x8x128xf32, #tpu.memory_space<vmem>>, vector<1x1x8x128xf32>,
    %c3_88 = arith.constant 3 : index
    %c1_89 = arith.constant 1 : index
    %c0_90 = arith.constant 0 : index
    %c0_91 = arith.constant 0 : index
    %1222 = vector.load %arg3[%c3_88, %c1_89, %c0_90, %c0_91] : memref<4x3x8x128xf32, #tpu.memory_space<vmem>>, vector<1x1x8x128xf32>
    %1223 = vector.shape_cast %1222 : vector<1x1x8x128xf32> to vector<8x128xf32>
    %1224 = vector.shape_cast %1214 : vector<8x128xf32> to vector<1x1x8x128xf32>
    tpu.vector_store %arg3[%c3_88, %c1_89, %c0_90, %c0_91], %1224 {strides = array<i32>} : memref<4x3x8x128xf32, #tpu.memory_space<vmem>>, vector<1x1x8x128xf32>,
    %c3_92 = arith.constant 3 : index
    %c2_93 = arith.constant 2 : index
    %c0_94 = arith.constant 0 : index
    %c0_95 = arith.constant 0 : index
    %1225 = vector.load %arg3[%c3_92, %c2_93, %c0_94, %c0_95] : memref<4x3x8x128xf32, #tpu.memory_space<vmem>>, vector<1x1x8x128xf32>
    %1226 = vector.shape_cast %1225 : vector<1x1x8x128xf32> to vector<8x128xf32>
    %1227 = vector.shape_cast %1218 : vector<8x128xf32> to vector<1x1x8x128xf32>
    tpu.vector_store %arg3[%c3_92, %c2_93, %c0_94, %c0_95], %1227 {strides = array<i32>} : memref<4x3x8x128xf32, #tpu.memory_space<vmem>>, vector<1x1x8x128xf32>,
    return
  }
  func.func @transform_0(%arg0: i32) -> i32 {
    %c0_i32 = arith.constant 0 : i32
    %c0_i32_0 = arith.constant 0 : i32
    return %c0_i32 : i32
  }
  func.func @transform_1(%arg0: i32) -> (i32, i32, i32, i32) {
    %c0_i32 = arith.constant 0 : i32
    %c0_i32_0 = arith.constant 0 : i32
    %c0_i32_1 = arith.constant 0 : i32
    %c0_i32_2 = arith.constant 0 : i32
    return %c0_i32, %c0_i32_0, %arg0, %c0_i32_1 : i32, i32, i32, i32
  }
  func.func @transform_2(%arg0: i32) -> (i32, i32, i32, i32) {
    %c0_i32 = arith.constant 0 : i32
    %c0_i32_0 = arith.constant 0 : i32
    %c0_i32_1 = arith.constant 0 : i32
    %c0_i32_2 = arith.constant 0 : i32
    return %c0_i32, %c0_i32_0, %arg0, %c0_i32_1 : i32, i32, i32, i32
  }
}

</mosaic_0001>

<llo_original>
// kernel: tpu_custom_call.1
$region0: #{tpu_custom_call.1}
  #allocation0 [shape = 'u32[]', space=smem, size = 0x4, offset = 0x4, fixed_abs, tag = 'smem constant byte address 0x4 - core index']
  #allocation1 [shape = 'u32[72,128]{1,0:T(1,128)}', space=vmem, size = 0x9000, scoped, tag = 'internal scratch']
  %s0 = inlined_call_operand.hbm [shape: f32[276], index: 0, kind: input, shape index: {}]
  %s1 = inlined_call_operand.hbm [shape: f32[4,3,8,128], index: 1, kind: input, shape index: {}]
  %s2 = inlined_call_operand.hbm [shape: f32[4,3,8,128], index: 2, kind: output, shape index: {}]
  %s3 = sld [smem:[#allocation0]]
  $region26: #{tpu_custom_call.1} parent=0
    _
  %s5 = ssub.s32 1, %s3
  %s6 = scalar_select 0, %s5, %s3
  $region1: #{tpu_custom_call.1} parent=0
    #allocation2 [shape = 'u8[1536]{0}', space=smem, size = 0x600, scoped, tag = 'input window, operand 0, single buffered']
    #allocation3 [shape = 's32[1]{0}', space=sflag, size = 0x4, scoped, tag = 'scoped memory for tpu_custom_call.1']
    #allocation4 [shape = 's32[1]{0}', space=sflag, size = 0x4, scoped, tag = 'scoped memory for tpu_custom_call.1']
    #allocation5 [shape = 's32[1]{0}', space=sflag, size = 0x4, scoped, tag = 'scoped memory for tpu_custom_call.1']
    #allocation6 [shape = 'u8[49152]{0}', space=vmem, size = 0xc000, scoped, tag = 'input window, operand 1, single buffered']
    #allocation7 [shape = 'u8[49152]{0}', space=vmem, size = 0xc000, scoped, tag = 'output window, operand 0, single buffered']
    %7 = vsyncpa [#allocation5], 0
    %8 = vsyncpa [#allocation3], 0
    %9 = vsyncpa [#allocation4], 0
    // Predicated region
    $region2: #{tpu_custom_call.1} parent=1 // pred_check
      _
    $region3: #{tpu_custom_call.1} parent=1 // pred_check_branch
      %11 = sbr.rel (0) target = $region5
    $region4: #{tpu_custom_call.1} parent=1 // pred_region
      %13 = vsyncadd [#allocation5], 0
      %s15 = sshll.u32 %s0, 4
      %s16 = int_to_ptr.hbm [resolvable:$true] %s15
      %18 = dma.hbm_to_smem %s16, 48, [#allocation2], [#allocation5]
    $region5: #{tpu_custom_call.1} parent=1 // pred_fallthru
      _
    // Predicated region
    $region6: #{tpu_custom_call.1} parent=1 // pred_check
      _
    $region7: #{tpu_custom_call.1} parent=1 // pred_check_branch
      %20 = sbr.rel (0) target = $region9
    $region8: #{tpu_custom_call.1} parent=1 // pred_region
      %22 = vsyncadd [#allocation3], 0
      %s23 = sshll.u32 %s1, 4
      %s24 = int_to_ptr.hbm [resolvable:$true] %s23
      %s25 = sshll.u32 [#allocation6], 4
      %s26 = int_to_ptr.vmem [resolvable:$true] %s25
      %31 = dma.hbm_to_vmem [thread:$0]  %s24, 1536, %s26, [#allocation3], 128, 128, 8
    $region9: #{tpu_custom_call.1} parent=1 // pred_fallthru
      _
    // Predicated region
    $region10: #{tpu_custom_call.1} parent=1 // pred_check
      _
    $region11: #{tpu_custom_call.1} parent=1 // pred_check_branch
      %33 = sbr.rel (0) target = $region13
    $region12: #{tpu_custom_call.1} parent=1 // pred_region
      %35 = dma.done [#allocation5], 48
    $region13: #{tpu_custom_call.1} parent=1 // pred_fallthru
      _
    // Predicated region
    $region14: #{tpu_custom_call.1} parent=1 // pred_check
      _
    $region15: #{tpu_custom_call.1} parent=1 // pred_check_branch
      %37 = sbr.rel (0) target = $region17
    $region16: #{tpu_custom_call.1} parent=1 // pred_region
      %39 = dma.done [#allocation3], 1536
    $region17: #{tpu_custom_call.1} parent=1 // pred_fallthru
      _
    %40 = sfence
    %v41 = vld [vmem:[#allocation6] sm:$0xff]
    %s42 = scalar_lea.vmem [#allocation6], 8
    %v43 = vld [vmem:[%s42] sm:$0xff]
    %s44 = scalar_lea.vmem [#allocation6], 16
    %v45 = vld [vmem:[%s44] sm:$0xff]
    %s46 = sld [smem:[#allocation2]]
    %v47 = vstv %s46
    %v48 = vadd.f32 %v41, %v47
    %s49 = sld [smem:[#allocation2 + $0x1]]
    %v50 = vstv %s49
    %v51 = vadd.f32 %v43, %v50
    %s52 = sld [smem:[#allocation2 + $0x2]]
    %v53 = vstv %s52
    %v54 = vadd.f32 %v45, %v53
    %s55 = sld [smem:[#allocation2 + $0x3]]
    %v56 = vstv %s55
    %v57 = vmul.f32 %v56, %v41
    %v58 = vadd.f32 %v48, %v57
    %s59 = sld [smem:[#allocation2 + $0x4]]
    %v60 = vstv %s59
    %v61 = vmul.f32 %v60, %v41
    %v62 = vadd.f32 %v51, %v61
    %s63 = sld [smem:[#allocation2 + $0x5]]
    %v64 = vstv %s63
    %v65 = vmul.f32 %v64, %v41
    %v66 = vadd.f32 %v54, %v65
    %s67 = sld [smem:[#allocation2 + $0x6]]
    %v68 = vstv %s67
    %v69 = vmul.f32 %v68, %v43
    %v70 = vadd.f32 %v58, %v69
    %s71 = sld [smem:[#allocation2 + $0x7]]
    %v72 = vstv %s71
    %v73 = vmul.f32 %v72, %v43
    %v74 = vadd.f32 %v62, %v73
    %s75 = sld [smem:[#allocation2 + $0x8]]
    %v76 = vstv %s75
    %v77 = vmul.f32 %v76, %v43
    %v78 = vadd.f32 %v66, %v77
    %s79 = sld [smem:[#allocation2 + $0x9]]
    %v80 = vstv %s79
    %v81 = vmul.f32 %v80, %v45
    %v82 = vadd.f32 %v70, %v81
    %s83 = sld [smem:[#allocation2 + $0xa]]
    %v84 = vstv %s83
    %v85 = vmul.f32 %v84, %v45
    %v86 = vadd.f32 %v74, %v85
    %s87 = sld [smem:[#allocation2 + $0xb]]
    %v88 = vstv %s87
    %v89 = vmul.f32 %v88, %v45
    %v90 = vadd.f32 %v78, %v89
    %v91 = vmul.f32 %v41, %v41
    %s92 = sld [smem:[#allocation2 + $0xc]]
    %v93 = vstv %s92
    %v94 = vmul.f32 %v93, %v91
    %v95 = vadd.f32 %v82, %v94
    %s96 = sld [smem:[#allocation2 + $0xd]]
    %v97 = vstv %s96
    %v98 = vmul.f32 %v97, %v91
    %v99 = vadd.f32 %v86, %v98
    %s100 = sld [smem:[#allocation2 + $0xe]]
    %v101 = vstv %s100
    %v102 = vmul.f32 %v101, %v91
    %v103 = vadd.f32 %v90, %v102
    %v104 = vmul.f32 %v41, %v43
    %s105 = sld [smem:[#allocation2 + $0xf]]
    %v106 = vstv %s105
    %v107 = vmul.f32 %v106, %v104
    %v108 = vadd.f32 %v95, %v107
    %s109 = sld [smem:[#allocation2 + $0x10]]
    %v110 = vstv %s109
    %v111 = vmul.f32 %v110, %v104
    %v112 = vadd.f32 %v99, %v111
    %s113 = sld [smem:[#allocation2 + $0x11]]
    %v114 = vstv %s113
    %v115 = vmul.f32 %v114, %v104
    %v116 = vadd.f32 %v103, %v115
    %v117 = vmul.f32 %v41, %v45
    %s118 = sld [smem:[#allocation2 + $0x12]]
    %v119 = vstv %s118
    %v120 = vmul.f32 %v119, %v117
    %v121 = vadd.f32 %v108, %v120
    %s122 = sld [smem:[#allocation2 + $0x13]]
    %v123 = vstv %s122
    %v124 = vmul.f32 %v123, %v117
    %v125 = vadd.f32 %v112, %v124
    %s126 = sld [smem:[#allocation2 + $0x14]]
    %v127 = vstv %s126
    %v128 = vmul.f32 %v127, %v117
    %v129 = vadd.f32 %v116, %v128
    %v130 = vmul.f32 %v43, %v43
    %s131 = sld [smem:[#allocation2 + $0x15]]
    %v132 = vstv %s131
    %v133 = vmul.f32 %v132, %v130
    %v134 = vadd.f32 %v121, %v133
    %s135 = sld [smem:[#allocation2 + $0x16]]
    %v136 = vstv %s135
    %v137 = vmul.f32 %v136, %v130
    %v138 = vadd.f32 %v125, %v137
    %s139 = sld [smem:[#allocation2 + $0x17]]
    %v140 = vstv %s139
    %v141 = vmul.f32 %v140, %v130
    %v142 = vadd.f32 %v129, %v141
    %v143 = vmul.f32 %v43, %v45
    %s144 = sld [smem:[#allocation2 + $0x18]]
    %v145 = vstv %s144
    %v146 = vmul.f32 %v145, %v143
    %v147 = vadd.f32 %v134, %v146
    %s148 = sld [smem:[#allocation2 + $0x19]]
    %v149 = vstv %s148
    %v150 = vmul.f32 %v149, %v143
    %v151 = vadd.f32 %v138, %v150
    %s152 = sld [smem:[#allocation2 + $0x1a]]
    %v153 = vstv %s152
    %v154 = vmul.f32 %v153, %v143
    %v155 = vadd.f32 %v142, %v154
    %v156 = vmul.f32 %v45, %v45
    %s157 = sld [smem:[#allocation2 + $0x1b]]
    %v158 = vstv %s157
    %v159 = vmul.f32 %v158, %v156
    %v160 = vadd.f32 %v147, %v159
    %s161 = sld [smem:[#allocation2 + $0x1c]]
    %v162 = vstv %s161
    %v163 = vmul.f32 %v162, %v156
    %v164 = vadd.f32 %v151, %v163
    %s165 = sld [smem:[#allocation2 + $0x1d]]
    %v166 = vstv %s165
    %v167 = vmul.f32 %v166, %v156
    %v168 = vadd.f32 %v155, %v167
    %v169 = vmul.f32 %v91, %v41
    %s170 = sld [smem:[#allocation2 + $0x1e]]
    %v171 = vstv %s170
    %v172 = vmul.f32 %v171, %v169
    %v173 = vadd.f32 %v160, %v172
    %s174 = sld [smem:[#allocation2 + $0x1f]]
    %v175 = vstv %s174
    %v176 = vmul.f32 %v175, %v169
    %v177 = vadd.f32 %v164, %v176
    %s178 = sld [smem:[#allocation2 + $0x20]]
    %v179 = vstv %s178
    %v180 = vmul.f32 %v179, %v169
    %v181 = vadd.f32 %v168, %v180
    %v182 = vmul.f32 %v91, %v43
    %s183 = sld [smem:[#allocation2 + $0x21]]
    %v184 = vstv %s183
    %v185 = vmul.f32 %v184, %v182
    %v186 = vadd.f32 %v173, %v185
    %s187 = sld [smem:[#allocation2 + $0x22]]
    %v188 = vstv %s187
    %v189 = vmul.f32 %v188, %v182
    %v190 = vadd.f32 %v177, %v189
    %s191 = sld [smem:[#allocation2 + $0x23]]
    %v192 = vstv %s191
    %v193 = vmul.f32 %v192, %v182
    %v194 = vadd.f32 %v181, %v193
    %v195 = vmul.f32 %v91, %v45
    %s196 = sld [smem:[#allocation2 + $0x24]]
    %v197 = vstv %s196
    %v198 = vmul.f32 %v197, %v195
    %v199 = vadd.f32 %v186, %v198
    %s200 = sld [smem:[#allocation2 + $0x25]]
    %v201 = vstv %s200
    %v202 = vmul.f32 %v201, %v195
    %v203 = vadd.f32 %v190, %v202
    %s204 = sld [smem:[#allocation2 + $0x26]]
    %v205 = vstv %s204
    %v206 = vmul.f32 %v205, %v195
    %v207 = vadd.f32 %v194, %v206
    %v208 = vmul.f32 %v104, %v43
    %s209 = sld [smem:[#allocation2 + $0x27]]
    %v210 = vstv %s209
    %v211 = vmul.f32 %v210, %v208
    %v212 = vadd.f32 %v199, %v211
    %s213 = sld [smem:[#allocation2 + $0x28]]
    %v214 = vstv %s213
    %v215 = vmul.f32 %v214, %v208
    %v216 = vadd.f32 %v203, %v215
    %s217 = sld [smem:[#allocation2 + $0x29]]
    %v218 = vstv %s217
    %v219 = vmul.f32 %v218, %v208
    %v220 = vadd.f32 %v207, %v219
    %v221 = vmul.f32 %v104, %v45
    %s222 = sld [smem:[#allocation2 + $0x2a]]
    %v223 = vstv %s222
    %v224 = vmul.f32 %v223, %v221
    %v225 = vadd.f32 %v212, %v224
    %s226 = sld [smem:[#allocation2 + $0x2b]]
    %v227 = vstv %s226
    %v228 = vmul.f32 %v227, %v221
    %v229 = vadd.f32 %v216, %v228
    %s230 = sld [smem:[#allocation2 + $0x2c]]
    %v231 = vstv %s230
    %v232 = vmul.f32 %v231, %v221
    %v233 = vadd.f32 %v220, %v232
    %v234 = vmul.f32 %v117, %v45
    %s235 = sld [smem:[#allocation2 + $0x2d]]
    %v236 = vstv %s235
    %v237 = vmul.f32 %v236, %v234
    %v238 = vadd.f32 %v225, %v237
    %s239 = sld [smem:[#allocation2 + $0x2e]]
    %v240 = vstv %s239
    %v241 = vmul.f32 %v240, %v234
    %v242 = vadd.f32 %v229, %v241
    %s243 = sld [smem:[#allocation2 + $0x2f]]
    %v244 = vstv %s243
    %v245 = vmul.f32 %v244, %v234
    %v246 = vadd.f32 %v233, %v245
    %v247 = vmul.f32 %v130, %v43
    %s248 = sld [smem:[#allocation2 + $0x30]]
    %v249 = vstv %s248
    %v250 = vmul.f32 %v249, %v247
    %v251 = vadd.f32 %v238, %v250
    %s252 = sld [smem:[#allocation2 + $0x31]]
    %v253 = vstv %s252
    %v254 = vmul.f32 %v253, %v247
    %v255 = vadd.f32 %v242, %v254
    %s256 = sld [smem:[#allocation2 + $0x32]]
    %v257 = vstv %s256
    %v258 = vmul.f32 %v257, %v247
    %v259 = vadd.f32 %v246, %v258
    %v260 = vmul.f32 %v130, %v45
    %s261 = sld [smem:[#allocation2 + $0x33]]
    %v262 = vstv %s261
    %v263 = vmul.f32 %v262, %v260
    %v264 = vadd.f32 %v251, %v263
    %s265 = sld [smem:[#allocation2 + $0x34]]
    %v266 = vstv %s265
    %v267 = vmul.f32 %v266, %v260
    %v268 = vadd.f32 %v255, %v267
    %s269 = sld [smem:[#allocation2 + $0x35]]
    %v270 = vstv %s269
    %v271 = vmul.f32 %v270, %v260
    %v272 = vadd.f32 %v259, %v271
    %v273 = vmul.f32 %v143, %v45
    %s274 = sld [smem:[#allocation2 + $0x36]]
    %v275 = vstv %s274
    %v276 = vmul.f32 %v275, %v273
    %v277 = vadd.f32 %v264, %v276
    %s278 = sld [smem:[#allocation2 + $0x37]]
    %v279 = vstv %s278
    %v280 = vmul.f32 %v279, %v273
    %v281 = vadd.f32 %v268, %v280
    %s282 = sld [smem:[#allocation2 + $0x38]]
    %v283 = vstv %s282
    %v284 = vmul.f32 %v283, %v273
    %v285 = vadd.f32 %v272, %v284
    %v286 = vmul.f32 %v156, %v45
    %s287 = sld [smem:[#allocation2 + $0x39]]
    %v288 = vstv %s287
    %v289 = vmul.f32 %v288, %v286
    %v290 = vadd.f32 %v277, %v289
    %s291 = sld [smem:[#allocation2 + $0x3a]]
    %v292 = vstv %s291
    %v293 = vmul.f32 %v292, %v286
    %v294 = vadd.f32 %v281, %v293
    %s295 = sld [smem:[#allocation2 + $0x3b]]
    %v296 = vstv %s295
    %v297 = vmul.f32 %v296, %v286
    %v298 = vadd.f32 %v285, %v297
    %v299 = vand.u32 2147483647, %v41
    %vm300 = vcmp.le.f32.partialorder %v299, 0.7853982
    %vm301 = vcmp.lt.s32.totalorder %v41, 0
    %v302 = vand.u32 %v41, 2139095040
    %v303 = vshrl.u32 %v302, 23
    %v304 = vsub.s32 %v303, 127
    %v305 = vand.u32 2147483647, %v41
    %v306 = vand.u32 %v305, 8388607
    %v307 = vor.u32 %v306, 8388608
    %v308 = vsub.s32 0, %v307
    %v309 = vadd.s32 %v304, 1
    %vm310 = vcmp.gt.s32.totalorder %v309, 0
    %v311 = vsel %vm310, %v309, 0
    %v312 = vshrl.u32 %v311, 5
    %v313 = vand.u32 %v311, 31
    %v314 = vsub.s32 32, %v313
    %v315 = vshrl.u32 683565275, %v314
    %v316 = vshll.u32 683565275, %v313
    %v317 = vshrl.u32 2475754826, %v314
    %v318 = vor.u32 %v316, %v317
    %v319 = vshll.u32 2475754826, %v313
    %v320 = vshrl.u32 2131351028, %v314
    %v321 = vor.u32 %v319, %v320
    %v322 = vshll.u32 2131351028, %v313
    %v323 = vshrl.u32 2102212464, %v314
    %v324 = vor.u32 %v322, %v323
    %v325 = vshll.u32 2102212464, %v313
    %v326 = vshrl.u32 920167782, %v314
    %v327 = vor.u32 %v325, %v326
    %v328 = vshll.u32 920167782, %v313
    %v329 = vshrl.u32 1326507024, %v314
    %v330 = vor.u32 %v328, %v329
    %vm331 = vcmp.lt.s32.totalorder %v312, 1
    %vm332 = vcmp.lt.s32.totalorder %v312, 2
    %vm333 = vcmp.lt.s32.totalorder %v312, 3
    %vm334 = vcmp.lt.s32.totalorder %v312, 4
    %v335 = vsel %vm331, %v315, %v318
    %v336 = vsel %vm334, %v324, 2102212464
    %v337 = vsel %vm333, %v321, %v336
    %v338 = vsel %vm332, %v335, %v337
    %v339 = vsel %vm331, %v318, %v321
    %v340 = vsel %vm334, %v327, 920167782
    %v341 = vsel %vm333, %v324, %v340
    %v342 = vsel %vm332, %v339, %v341
    %v343 = vsel %vm331, %v321, %v324
    %v344 = vsel %vm334, %v330, 1326507024
    %v345 = vsel %vm333, %v327, %v344
    %v346 = vsel %vm332, %v343, %v345
    %v347 = vshll.u32 %v307, 8
    %v348 = vand.u32 %v347, 65535
    %v349 = vshrl.u32 %v347, 16
    %v350 = vand.u32 %v346, 65535
    %v351 = vshrl.u32 %v346, 16
    %v352 = vmul.u32 %v348, %v350
    %v353 = vmul.u32 %v348, %v351
    %v354 = vmul.u32 %v349, %v350
    %v355 = vmul.u32 %v349, %v351
    %v356 = vshll.u32 %v353, 16
    %v357 = vshrl.u32 %v353, 16
    %v358 = vshll.u32 %v354, 16
    %v359 = vshrl.u32 %v354, 16
    %vm360 = vc.u32 %v352, %v356
    %v361 = vsel %vm360, 1, 0
    %v362 = vadd.s32 %v352, %v356
    %v363 = vadd.s32 %v355, %v361
    %vm364 = vc.u32 %v362, %v358
    %v365 = vsel %vm364, 1, 0
    %v366 = vadd.s32 %v362, %v358
    %v367 = vadd.s32 %v363, %v365
    %v368 = vadd.s32 %v367, %v357
    %v369 = vadd.s32 %v368, %v359
    %v370 = vand.u32 %v347, 65535
    %v371 = vshrl.u32 %v347, 16
    %v372 = vand.u32 %v342, 65535
    %v373 = vshrl.u32 %v342, 16
    %v374 = vmul.u32 %v370, %v372
    %v375 = vmul.u32 %v370, %v373
    %v376 = vmul.u32 %v371, %v372
    %v377 = vmul.u32 %v371, %v373
    %v378 = vshll.u32 %v375, 16
    %v379 = vshrl.u32 %v375, 16
    %v380 = vshll.u32 %v376, 16
    %v381 = vshrl.u32 %v376, 16
    %vm382 = vc.u32 %v374, %v378
    %v383 = vsel %vm382, 1, 0
    %v384 = vadd.s32 %v374, %v378
    %v385 = vadd.s32 %v377, %v383
    %vm386 = vc.u32 %v384, %v380
    %v387 = vsel %vm386, 1, 0
    %v388 = vadd.s32 %v384, %v380
    %v389 = vadd.s32 %v385, %v387
    %v390 = vadd.s32 %v389, %v379
    %v391 = vadd.s32 %v390, %v381
    %v392 = vmul.u32 %v347, %v338
    %v393 = vadd.s32 %v369, %v388
    %vm394 = vc.u32 %v369, %v388
    %v395 = vadd.s32 %v391, 1
    %v396 = vsel %vm394, %v395, %v391
    %v397 = vadd.s32 %v392, %v396
    %v398 = vadd.s32 %v397, 536870912
    %v399 = vshrl.u32 %v398, 30
    %v400 = vshll.u32 %v399, 30
    %v401 = vsub.s32 %v397, %v400
    %vm402 = vcmp.lt.s32.totalorder %v401, 0
    %v403 = vsub.s32 0, %v401
    %v404 = vsel %vm402, %v403, %v401
    %v405 = vclz %v404
    %v406 = vsub.s32 %v405, 2
    %vm407 = vcmp.gt.s32.totalorder 0, %v406
    %v408 = vsel %vm407, 0, %v406
    %v409 = vsub.s32 32, %v408
    %v410 = vshll.u32 %v401, %v408
    %v411 = vshrl.u32 %v393, %v409
    %v412 = vor.u32 %v410, %v411
    %v413 = vsub.s32 4294967266, %v408
    %v414 = vadd.s32 %v413, 127
    %v415 = vshll.u32 %v414, 23
    %v416 = vor.u32 4788187, %v415
    %v417 = vand.u32 2147483647, %v416
    %v419 = vcvt.s32.f32 %v412
    %v420 = vmul.f32 %v419, %v417
    %v421 = vxor.u32 %v420, 2147483648
    %v422 = vsel %vm301, %v421, %v420
    %v423 = vsub.s32 4, %v399
    %v424 = vsel %vm301, %v423, %v399
    %v425 = vsel %vm300, %v41, %v422
    %v426 = vsel %vm300, 0, %v424
    %v427 = vmul.f32 %v425, %v425
    %v428 = vmul.f32 %v427, -0.001358992
    %v429 = vadd.f32 %v428, 0.041655596
    %v430 = vmul.f32 %v427, %v429
    %v431 = vadd.f32 %v430, -0.4999988
    %v432 = vmul.f32 %v427, %v431
    %v433 = vadd.f32 1.0, %v432
    %v434 = vmul.f32 %v425, %v425
    %v435 = vmul.f32 %v434, -0.00019511016
    %v436 = vadd.f32 %v435, 0.008332121
    %v437 = vmul.f32 %v434, %v436
    %v438 = vadd.f32 %v437, -0.16666654
    %v439 = vmul.f32 %v434, %v438
    %v440 = vadd.f32 %v439, 1.0
    %v441 = vmul.f32 %v440, %v425
    %vm442 = vweird.f32 %v41
    %v443 = vadd.s32 %v426, 3
    %v444 = vand.u32 %v443, 3
    %vm445 = vcmp.lt.s32.totalorder %v444, 2
    %vm446 = vcmp.eq.s32.totalorder %v444, 0
    %v447 = vxor.u32 %v441, 2147483648
    %v448 = vsel %vm446, %v433, %v447
    %vm449 = vcmp.eq.s32.totalorder %v444, 2
    %v450 = vxor.u32 %v433, 2147483648
    %v451 = vsel %vm449, %v450, %v441
    %v452 = vsel %vm445, %v448, %v451
    %v453 = vsel %vm442, nan, %v452
    %s454 = sld [smem:[#allocation2 + $0x3c]]
    %v455 = vstv %s454
    %v456 = vmul.f32 %v455, %v453
    %v457 = vadd.f32 %v290, %v456
    %s458 = sld [smem:[#allocation2 + $0x3d]]
    %v459 = vstv %s458
    %v460 = vmul.f32 %v459, %v453
    %v461 = vadd.f32 %v294, %v460
    %s462 = sld [smem:[#allocation2 + $0x3e]]
    %v463 = vstv %s462
    %v464 = vmul.f32 %v463, %v453
    %v465 = vadd.f32 %v298, %v464
    %v466 = vand.u32 2147483647, %v43
    %vm467 = vcmp.le.f32.partialorder %v466, 0.7853982
    %vm468 = vcmp.lt.s32.totalorder %v43, 0
    %v469 = vand.u32 %v43, 2139095040
    %v470 = vshrl.u32 %v469, 23
    %v471 = vsub.s32 %v470, 127
    %v472 = vand.u32 2147483647, %v43
    %v473 = vand.u32 %v472, 8388607
    %v474 = vor.u32 %v473, 8388608
    %v475 = vsub.s32 0, %v474
    %v476 = vadd.s32 %v471, 1
    %vm477 = vcmp.gt.s32.totalorder %v476, 0
    %v478 = vsel %vm477, %v476, 0
    %v479 = vshrl.u32 %v478, 5
    %v480 = vand.u32 %v478, 31
    %v481 = vsub.s32 32, %v480
    %v482 = vshrl.u32 683565275, %v481
    %v483 = vshll.u32 683565275, %v480
    %v484 = vshrl.u32 2475754826, %v481
    %v485 = vor.u32 %v483, %v484
    %v486 = vshll.u32 2475754826, %v480
    %v487 = vshrl.u32 2131351028, %v481
    %v488 = vor.u32 %v486, %v487
    %v489 = vshll.u32 2131351028, %v480
    %v490 = vshrl.u32 2102212464, %v481
    %v491 = vor.u32 %v489, %v490
    %v492 = vshll.u32 2102212464, %v480
    %v493 = vshrl.u32 920167782, %v481
    %v494 = vor.u32 %v492, %v493
    %v495 = vshll.u32 920167782, %v480
    %v496 = vshrl.u32 1326507024, %v481
    %v497 = vor.u32 %v495, %v496
    %vm498 = vcmp.lt.s32.totalorder %v479, 1
    %vm499 = vcmp.lt.s32.totalorder %v479, 2
    %vm500 = vcmp.lt.s32.totalorder %v479, 3
    %vm501 = vcmp.lt.s32.totalorder %v479, 4
    %v502 = vsel %vm498, %v482, %v485
    %v503 = vsel %vm501, %v491, 2102212464
    %v504 = vsel %vm500, %v488, %v503
    %v505 = vsel %vm499, %v502, %v504
    %v506 = vsel %vm498, %v485, %v488
    %v507 = vsel %vm501, %v494, 920167782
    %v508 = vsel %vm500, %v491, %v507
    %v509 = vsel %vm499, %v506, %v508
    %v510 = vsel %vm498, %v488, %v491
    %v511 = vsel %vm501, %v497, 1326507024
    %v512 = vsel %vm500, %v494, %v511
    %v513 = vsel %vm499, %v510, %v512
    %v514 = vshll.u32 %v474, 8
    %v515 = vand.u32 %v514, 65535
    %v516 = vshrl.u32 %v514, 16
    %v517 = vand.u32 %v513, 65535
    %v518 = vshrl.u32 %v513, 16
    %v519 = vmul.u32 %v515, %v517
    %v520 = vmul.u32 %v515, %v518
    %v521 = vmul.u32 %v516, %v517
    %v522 = vmul.u32 %v516, %v518
    %v523 = vshll.u32 %v520, 16
    %v524 = vshrl.u32 %v520, 16
    %v525 = vshll.u32 %v521, 16
    %v526 = vshrl.u32 %v521, 16
    %vm527 = vc.u32 %v519, %v523
    %v528 = vsel %vm527, 1, 0
    %v529 = vadd.s32 %v519, %v523
    %v530 = vadd.s32 %v522, %v528
    %vm531 = vc.u32 %v529, %v525
    %v532 = vsel %vm531, 1, 0
    %v533 = vadd.s32 %v529, %v525
    %v534 = vadd.s32 %v530, %v532
    %v535 = vadd.s32 %v534, %v524
    %v536 = vadd.s32 %v535, %v526
    %v537 = vand.u32 %v514, 65535
    %v538 = vshrl.u32 %v514, 16
    %v539 = vand.u32 %v509, 65535
    %v540 = vshrl.u32 %v509, 16
    %v541 = vmul.u32 %v537, %v539
    %v542 = vmul.u32 %v537, %v540
    %v543 = vmul.u32 %v538, %v539
    %v544 = vmul.u32 %v538, %v540
    %v545 = vshll.u32 %v542, 16
    %v546 = vshrl.u32 %v542, 16
    %v547 = vshll.u32 %v543, 16
    %v548 = vshrl.u32 %v543, 16
    %vm549 = vc.u32 %v541, %v545
    %v550 = vsel %vm549, 1, 0
    %v551 = vadd.s32 %v541, %v545
    %v552 = vadd.s32 %v544, %v550
    %vm553 = vc.u32 %v551, %v547
    %v554 = vsel %vm553, 1, 0
    %v555 = vadd.s32 %v551, %v547
    %v556 = vadd.s32 %v552, %v554
    %v557 = vadd.s32 %v556, %v546
    %v558 = vadd.s32 %v557, %v548
    %v559 = vmul.u32 %v514, %v505
    %v560 = vadd.s32 %v536, %v555
    %vm561 = vc.u32 %v536, %v555
    %v562 = vadd.s32 %v558, 1
    %v563 = vsel %vm561, %v562, %v558
    %v564 = vadd.s32 %v559, %v563
    %v565 = vadd.s32 %v564, 536870912
    %v566 = vshrl.u32 %v565, 30
    %v567 = vshll.u32 %v566, 30
    %v568 = vsub.s32 %v564, %v567
    %vm569 = vcmp.lt.s32.totalorder %v568, 0
    %v570 = vsub.s32 0, %v568
    %v571 = vsel %vm569, %v570, %v568
    %v572 = vclz %v571
    %v573 = vsub.s32 %v572, 2
    %vm574 = vcmp.gt.s32.totalorder 0, %v573
    %v575 = vsel %vm574, 0, %v573
    %v576 = vsub.s32 32, %v575
    %v577 = vshll.u32 %v568, %v575
    %v578 = vshrl.u32 %v560, %v576
    %v579 = vor.u32 %v577, %v578
    %v580 = vsub.s32 4294967266, %v575
    %v581 = vadd.s32 %v580, 127
    %v582 = vshll.u32 %v581, 23
    %v583 = vor.u32 4788187, %v582
    %v584 = vand.u32 2147483647, %v583
    %v586 = vcvt.s32.f32 %v579
    %v587 = vmul.f32 %v586, %v584
    %v588 = vxor.u32 %v587, 2147483648
    %v589 = vsel %vm468, %v588, %v587
    %v590 = vsub.s32 4, %v566
    %v591 = vsel %vm468, %v590, %v566
    %v592 = vsel %vm467, %v43, %v589
    %v593 = vsel %vm467, 0, %v591
    %v594 = vmul.f32 %v592, %v592
    %v595 = vmul.f32 %v594, -0.001358992
    %v596 = vadd.f32 %v595, 0.041655596
    %v597 = vmul.f32 %v594, %v596
    %v598 = vadd.f32 %v597, -0.4999988
    %v599 = vmul.f32 %v594, %v598
    %v600 = vadd.f32 1.0, %v599
    %v601 = vmul.f32 %v592, %v592
    %v602 = vmul.f32 %v601, -0.00019511016
    %v603 = vadd.f32 %v602, 0.008332121
    %v604 = vmul.f32 %v601, %v603
    %v605 = vadd.f32 %v604, -0.16666654
    %v606 = vmul.f32 %v601, %v605
    %v607 = vadd.f32 %v606, 1.0
    %v608 = vmul.f32 %v607, %v592
    %vm609 = vweird.f32 %v43
    %v610 = vadd.s32 %v593, 3
    %v611 = vand.u32 %v610, 3
    %vm612 = vcmp.lt.s32.totalorder %v611, 2
    %vm613 = vcmp.eq.s32.totalorder %v611, 0
    %v614 = vxor.u32 %v608, 2147483648
    %v615 = vsel %vm613, %v600, %v614
    %vm616 = vcmp.eq.s32.totalorder %v611, 2
    %v617 = vxor.u32 %v600, 2147483648
    %v618 = vsel %vm616, %v617, %v608
    %v619 = vsel %vm612, %v615, %v618
    %v620 = vsel %vm609, nan, %v619
    %s621 = sld [smem:[#allocation2 + $0x3f]]
    %v622 = vstv %s621
    %v623 = vmul.f32 %v622, %v620
    %v624 = vadd.f32 %v457, %v623
    %s625 = sld [smem:[#allocation2 + $0x40]]
    %v626 = vstv %s625
    %v627 = vmul.f32 %v626, %v620
    %v628 = vadd.f32 %v461, %v627
    %s629 = sld [smem:[#allocation2 + $0x41]]
    %v630 = vstv %s629
    %v631 = vmul.f32 %v630, %v620
    %v632 = vadd.f32 %v465, %v631
    %v633 = vand.u32 2147483647, %v45
    %vm634 = vcmp.le.f32.partialorder %v633, 0.7853982
    %vm635 = vcmp.lt.s32.totalorder %v45, 0
    %v636 = vand.u32 %v45, 2139095040
    %v637 = vshrl.u32 %v636, 23
    %v638 = vsub.s32 %v637, 127
    %v639 = vand.u32 2147483647, %v45
    %v640 = vand.u32 %v639, 8388607
    %v641 = vor.u32 %v640, 8388608
    %v642 = vsub.s32 0, %v641
    %v643 = vadd.s32 %v638, 1
    %vm644 = vcmp.gt.s32.totalorder %v643, 0
    %v645 = vsel %vm644, %v643, 0
    %v646 = vshrl.u32 %v645, 5
    %v647 = vand.u32 %v645, 31
    %v648 = vsub.s32 32, %v647
    %v649 = vshrl.u32 683565275, %v648
    %v650 = vshll.u32 683565275, %v647
    %v651 = vshrl.u32 2475754826, %v648
    %v652 = vor.u32 %v650, %v651
    %v653 = vshll.u32 2475754826, %v647
    %v654 = vshrl.u32 2131351028, %v648
    %v655 = vor.u32 %v653, %v654
    %v656 = vshll.u32 2131351028, %v647
    %v657 = vshrl.u32 2102212464, %v648
    %v658 = vor.u32 %v656, %v657
    %v659 = vshll.u32 2102212464, %v647
    %v660 = vshrl.u32 920167782, %v648
    %v661 = vor.u32 %v659, %v660
    %v662 = vshll.u32 920167782, %v647
    %v663 = vshrl.u32 1326507024, %v648
    %v664 = vor.u32 %v662, %v663
    %vm665 = vcmp.lt.s32.totalorder %v646, 1
    %vm666 = vcmp.lt.s32.totalorder %v646, 2
    %vm667 = vcmp.lt.s32.totalorder %v646, 3
    %vm668 = vcmp.lt.s32.totalorder %v646, 4
    %v669 = vsel %vm665, %v649, %v652
    %v670 = vsel %vm668, %v658, 2102212464
    %v671 = vsel %vm667, %v655, %v670
    %v672 = vsel %vm666, %v669, %v671
    %v673 = vsel %vm665, %v652, %v655
    %v674 = vsel %vm668, %v661, 920167782
    %v675 = vsel %vm667, %v658, %v674
    %v676 = vsel %vm666, %v673, %v675
    %v677 = vsel %vm665, %v655, %v658
    %v678 = vsel %vm668, %v664, 1326507024
    %v679 = vsel %vm667, %v661, %v678
    %v680 = vsel %vm666, %v677, %v679
    %v681 = vshll.u32 %v641, 8
    %v682 = vand.u32 %v681, 65535
    %v683 = vshrl.u32 %v681, 16
    %v684 = vand.u32 %v680, 65535
    %v685 = vshrl.u32 %v680, 16
    %v686 = vmul.u32 %v682, %v684
    %v687 = vmul.u32 %v682, %v685
    %v688 = vmul.u32 %v683, %v684
    %v689 = vmul.u32 %v683, %v685
    %v690 = vshll.u32 %v687, 16
    %v691 = vshrl.u32 %v687, 16
    %v692 = vshll.u32 %v688, 16
    %v693 = vshrl.u32 %v688, 16
    %vm694 = vc.u32 %v686, %v690
    %v695 = vsel %vm694, 1, 0
    %v696 = vadd.s32 %v686, %v690
    %v697 = vadd.s32 %v689, %v695
    %vm698 = vc.u32 %v696, %v692
    %v699 = vsel %vm698, 1, 0
    %v700 = vadd.s32 %v696, %v692
    %v701 = vadd.s32 %v697, %v699
    %v702 = vadd.s32 %v701, %v691
    %v703 = vadd.s32 %v702, %v693
    %v704 = vand.u32 %v681, 65535
    %v705 = vshrl.u32 %v681, 16
    %v706 = vand.u32 %v676, 65535
    %v707 = vshrl.u32 %v676, 16
    %v708 = vmul.u32 %v704, %v706
    %v709 = vmul.u32 %v704, %v707
    %v710 = vmul.u32 %v705, %v706
    %v711 = vmul.u32 %v705, %v707
    %v712 = vshll.u32 %v709, 16
    %v713 = vshrl.u32 %v709, 16
    %v714 = vshll.u32 %v710, 16
    %v715 = vshrl.u32 %v710, 16
    %vm716 = vc.u32 %v708, %v712
    %v717 = vsel %vm716, 1, 0
    %v718 = vadd.s32 %v708, %v712
    %v719 = vadd.s32 %v711, %v717
    %vm720 = vc.u32 %v718, %v714
    %v721 = vsel %vm720, 1, 0
    %v722 = vadd.s32 %v718, %v714
    %v723 = vadd.s32 %v719, %v721
    %v724 = vadd.s32 %v723, %v713
    %v725 = vadd.s32 %v724, %v715
    %v726 = vmul.u32 %v681, %v672
    %v727 = vadd.s32 %v703, %v722
    %vm728 = vc.u32 %v703, %v722
    %v729 = vadd.s32 %v725, 1
    %v730 = vsel %vm728, %v729, %v725
    %v731 = vadd.s32 %v726, %v730
    %v732 = vadd.s32 %v731, 536870912
    %v733 = vshrl.u32 %v732, 30
    %v734 = vshll.u32 %v733, 30
    %v735 = vsub.s32 %v731, %v734
    %vm736 = vcmp.lt.s32.totalorder %v735, 0
    %v737 = vsub.s32 0, %v735
    %v738 = vsel %vm736, %v737, %v735
    %v739 = vclz %v738
    %v740 = vsub.s32 %v739, 2
    %vm741 = vcmp.gt.s32.totalorder 0, %v740
    %v742 = vsel %vm741, 0, %v740
    %v743 = vsub.s32 32, %v742
    %v744 = vshll.u32 %v735, %v742
    %v745 = vshrl.u32 %v727, %v743
    %v746 = vor.u32 %v744, %v745
    %v747 = vsub.s32 4294967266, %v742
    %v748 = vadd.s32 %v747, 127
    %v749 = vshll.u32 %v748, 23
    %v750 = vor.u32 4788187, %v749
    %v751 = vand.u32 2147483647, %v750
    %v753 = vcvt.s32.f32 %v746
    %v754 = vmul.f32 %v753, %v751
    %v755 = vxor.u32 %v754, 2147483648
    %v756 = vsel %vm635, %v755, %v754
    %v757 = vsub.s32 4, %v733
    %v758 = vsel %vm635, %v757, %v733
    %v759 = vsel %vm634, %v45, %v756
    %v760 = vsel %vm634, 0, %v758
    %v761 = vmul.f32 %v759, %v759
    %v762 = vmul.f32 %v761, -0.001358992
    %v763 = vadd.f32 %v762, 0.041655596
    %v764 = vmul.f32 %v761, %v763
    %v765 = vadd.f32 %v764, -0.4999988
    %v766 = vmul.f32 %v761, %v765
    %v767 = vadd.f32 1.0, %v766
    %v768 = vmul.f32 %v759, %v759
    %v769 = vmul.f32 %v768, -0.00019511016
    %v770 = vadd.f32 %v769, 0.008332121
    %v771 = vmul.f32 %v768, %v770
    %v772 = vadd.f32 %v771, -0.16666654
    %v773 = vmul.f32 %v768, %v772
    %v774 = vadd.f32 %v773, 1.0
    %v775 = vmul.f32 %v774, %v759
    %vm776 = vweird.f32 %v45
    %v777 = vadd.s32 %v760, 3
    %v778 = vand.u32 %v777, 3
    %vm779 = vcmp.lt.s32.totalorder %v778, 2
    %vm780 = vcmp.eq.s32.totalorder %v778, 0
    %v781 = vxor.u32 %v775, 2147483648
    %v782 = vsel %vm780, %v767, %v781
    %vm783 = vcmp.eq.s32.totalorder %v778, 2
    %v784 = vxor.u32 %v767, 2147483648
    %v785 = vsel %vm783, %v784, %v775
    %v786 = vsel %vm779, %v782, %v785
    %v787 = vsel %vm776, nan, %v786
    %s788 = sld [smem:[#allocation2 + $0x42]]
    %v789 = vstv %s788
    %v790 = vmul.f32 %v789, %v787
    %v791 = vadd.f32 %v624, %v790
    %s792 = sld [smem:[#allocation2 + $0x43]]
    %v793 = vstv %s792
    %v794 = vmul.f32 %v793, %v787
    %v795 = vadd.f32 %v628, %v794
    %s796 = sld [smem:[#allocation2 + $0x44]]
    %v797 = vstv %s796
    %v798 = vmul.f32 %v797, %v787
    %v799 = vadd.f32 %v632, %v798
    %800 = vst [vmem:[#allocation7] sm:$0xff] %v791
    %s801 = scalar_lea.vmem [#allocation7], 8
    %802 = vst [vmem:[%s801] sm:$0xff] %v795
    %s803 = scalar_lea.vmem [#allocation7], 16
    %804 = vst [vmem:[%s803] sm:$0xff] %v799
    %s805 = scalar_lea.vmem [#allocation6], 24
    %v806 = vld [vmem:[%s805] sm:$0xff]
    %s807 = scalar_lea.vmem [#allocation6], 32
    %v808 = vld [vmem:[%s807] sm:$0xff]
    %s809 = scalar_lea.vmem [#allocation6], 40
    %v810 = vld [vmem:[%s809] sm:$0xff]
    %s811 = sld [smem:[#allocation2 + $0x45]]
    %v812 = vstv %s811
    %v813 = vadd.f32 %v806, %v812
    %s814 = sld [smem:[#allocation2 + $0x46]]
    %v815 = vstv %s814
    %v816 = vadd.f32 %v808, %v815
    %s817 = sld [smem:[#allocation2 + $0x47]]
    %v818 = vstv %s817
    %v819 = vadd.f32 %v810, %v818
    %s820 = sld [smem:[#allocation2 + $0x48]]
    %v821 = vstv %s820
    %v822 = vmul.f32 %v821, %v806
    %v823 = vadd.f32 %v813, %v822
    %s824 = sld [smem:[#allocation2 + $0x49]]
    %v825 = vstv %s824
    %v826 = vmul.f32 %v825, %v806
    %v827 = vadd.f32 %v816, %v826
    %s828 = sld [smem:[#allocation2 + $0x4a]]
    %v829 = vstv %s828
    %v830 = vmul.f32 %v829, %v806
    %v831 = vadd.f32 %v819, %v830
    %s832 = sld [smem:[#allocation2 + $0x4b]]
    %v833 = vstv %s832
    %v834 = vmul.f32 %v833, %v808
    %v835 = vadd.f32 %v823, %v834
    %s836 = sld [smem:[#allocation2 + $0x4c]]
    %v837 = vstv %s836
    %v838 = vmul.f32 %v837, %v808
    %v839 = vadd.f32 %v827, %v838
    %s840 = sld [smem:[#allocation2 + $0x4d]]
    %v841 = vstv %s840
    %v842 = vmul.f32 %v841, %v808
    %v843 = vadd.f32 %v831, %v842
    %s844 = sld [smem:[#allocation2 + $0x4e]]
    %v845 = vstv %s844
    %v846 = vmul.f32 %v845, %v810
    %v847 = vadd.f32 %v835, %v846
    %s848 = sld [smem:[#allocation2 + $0x4f]]
    %v849 = vstv %s848
    %v850 = vmul.f32 %v849, %v810
    %v851 = vadd.f32 %v839, %v850
    %s852 = sld [smem:[#allocation2 + $0x50]]
    %v853 = vstv %s852
    %v854 = vmul.f32 %v853, %v810
    %v855 = vadd.f32 %v843, %v854
    %v856 = vmul.f32 %v806, %v806
    %s857 = sld [smem:[#allocation2 + $0x51]]
    %v858 = vstv %s857
    %v859 = vmul.f32 %v858, %v856
    %v860 = vadd.f32 %v847, %v859
    %s861 = sld [smem:[#allocation2 + $0x52]]
    %v862 = vstv %s861
    %v863 = vmul.f32 %v862, %v856
    %v864 = vadd.f32 %v851, %v863
    %s865 = sld [smem:[#allocation2 + $0x53]]
    %v866 = vstv %s865
    %v867 = vmul.f32 %v866, %v856
    %v868 = vadd.f32 %v855, %v867
    %v869 = vmul.f32 %v806, %v808
    %s870 = sld [smem:[#allocation2 + $0x54]]
    %v871 = vstv %s870
    %v872 = vmul.f32 %v871, %v869
    %v873 = vadd.f32 %v860, %v872
    %s874 = sld [smem:[#allocation2 + $0x55]]
    %v875 = vstv %s874
    %v876 = vmul.f32 %v875, %v869
    %v877 = vadd.f32 %v864, %v876
    %s878 = sld [smem:[#allocation2 + $0x56]]
    %v879 = vstv %s878
    %v880 = vmul.f32 %v879, %v869
    %v881 = vadd.f32 %v868, %v880
    %v882 = vmul.f32 %v806, %v810
    %s883 = sld [smem:[#allocation2 + $0x57]]
    %v884 = vstv %s883
    %v885 = vmul.f32 %v884, %v882
    %v886 = vadd.f32 %v873, %v885
    %s887 = sld [smem:[#allocation2 + $0x58]]
    %v888 = vstv %s887
    %v889 = vmul.f32 %v888, %v882
    %v890 = vadd.f32 %v877, %v889
    %s891 = sld [smem:[#allocation2 + $0x59]]
    %v892 = vstv %s891
    %v893 = vmul.f32 %v892, %v882
    %v894 = vadd.f32 %v881, %v893
    %v895 = vmul.f32 %v808, %v808
    %s896 = sld [smem:[#allocation2 + $0x5a]]
    %v897 = vstv %s896
    %v898 = vmul.f32 %v897, %v895
    %v899 = vadd.f32 %v886, %v898
    %s900 = sld [smem:[#allocation2 + $0x5b]]
    %v901 = vstv %s900
    %v902 = vmul.f32 %v901, %v895
    %v903 = vadd.f32 %v890, %v902
    %s904 = sld [smem:[#allocation2 + $0x5c]]
    %v905 = vstv %s904
    %v906 = vmul.f32 %v905, %v895
    %v907 = vadd.f32 %v894, %v906
    %v908 = vmul.f32 %v808, %v810
    %s909 = sld [smem:[#allocation2 + $0x5d]]
    %v910 = vstv %s909
    %v911 = vmul.f32 %v910, %v908
    %v912 = vadd.f32 %v899, %v911
    %s913 = sld [smem:[#allocation2 + $0x5e]]
    %v914 = vstv %s913
    %v915 = vmul.f32 %v914, %v908
    %v916 = vadd.f32 %v903, %v915
    %s917 = sld [smem:[#allocation2 + $0x5f]]
    %v918 = vstv %s917
    %v919 = vmul.f32 %v918, %v908
    %v920 = vadd.f32 %v907, %v919
    %v921 = vmul.f32 %v810, %v810
    %s922 = sld [smem:[#allocation2 + $0x60]]
    %v923 = vstv %s922
    %v924 = vmul.f32 %v923, %v921
    %v925 = vadd.f32 %v912, %v924
    %s926 = sld [smem:[#allocation2 + $0x61]]
    %v927 = vstv %s926
    %v928 = vmul.f32 %v927, %v921
    %v929 = vadd.f32 %v916, %v928
    %s930 = sld [smem:[#allocation2 + $0x62]]
    %v931 = vstv %s930
    %v932 = vmul.f32 %v931, %v921
    %v933 = vadd.f32 %v920, %v932
    %v934 = vmul.f32 %v856, %v806
    %s935 = sld [smem:[#allocation2 + $0x63]]
    %v936 = vstv %s935
    %v937 = vmul.f32 %v936, %v934
    %v938 = vadd.f32 %v925, %v937
    %s939 = sld [smem:[#allocation2 + $0x64]]
    %v940 = vstv %s939
    %v941 = vmul.f32 %v940, %v934
    %v942 = vadd.f32 %v929, %v941
    %s943 = sld [smem:[#allocation2 + $0x65]]
    %v944 = vstv %s943
    %v945 = vmul.f32 %v944, %v934
    %v946 = vadd.f32 %v933, %v945
    %v947 = vmul.f32 %v856, %v808
    %s948 = sld [smem:[#allocation2 + $0x66]]
    %v949 = vstv %s948
    %v950 = vmul.f32 %v949, %v947
    %v951 = vadd.f32 %v938, %v950
    %s952 = sld [smem:[#allocation2 + $0x67]]
    %v953 = vstv %s952
    %v954 = vmul.f32 %v953, %v947
    %v955 = vadd.f32 %v942, %v954
    %s956 = sld [smem:[#allocation2 + $0x68]]
    %v957 = vstv %s956
    %v958 = vmul.f32 %v957, %v947
    %v959 = vadd.f32 %v946, %v958
    %v960 = vmul.f32 %v856, %v810
    %s961 = sld [smem:[#allocation2 + $0x69]]
    %v962 = vstv %s961
    %v963 = vmul.f32 %v962, %v960
    %v964 = vadd.f32 %v951, %v963
    %s965 = sld [smem:[#allocation2 + $0x6a]]
    %v966 = vstv %s965
    %v967 = vmul.f32 %v966, %v960
    %v968 = vadd.f32 %v955, %v967
    %s969 = sld [smem:[#allocation2 + $0x6b]]
    %v970 = vstv %s969
    %v971 = vmul.f32 %v970, %v960
    %v972 = vadd.f32 %v959, %v971
    %v973 = vmul.f32 %v869, %v808
    %s974 = sld [smem:[#allocation2 + $0x6c]]
    %v975 = vstv %s974
    %v976 = vmul.f32 %v975, %v973
    %v977 = vadd.f32 %v964, %v976
    %s978 = sld [smem:[#allocation2 + $0x6d]]
    %v979 = vstv %s978
    %v980 = vmul.f32 %v979, %v973
    %v981 = vadd.f32 %v968, %v980
    %s982 = sld [smem:[#allocation2 + $0x6e]]
    %v983 = vstv %s982
    %v984 = vmul.f32 %v983, %v973
    %v985 = vadd.f32 %v972, %v984
    %v986 = vmul.f32 %v869, %v810
    %s987 = sld [smem:[#allocation2 + $0x6f]]
    %v988 = vstv %s987
    %v989 = vmul.f32 %v988, %v986
    %v990 = vadd.f32 %v977, %v989
    %s991 = sld [smem:[#allocation2 + $0x70]]
    %v992 = vstv %s991
    %v993 = vmul.f32 %v992, %v986
    %v994 = vadd.f32 %v981, %v993
    %s995 = sld [smem:[#allocation2 + $0x71]]
    %v996 = vstv %s995
    %v997 = vmul.f32 %v996, %v986
    %v998 = vadd.f32 %v985, %v997
    %v999 = vmul.f32 %v882, %v810
    %s1000 = sld [smem:[#allocation2 + $0x72]]
    %v1001 = vstv %s1000
    %v1002 = vmul.f32 %v1001, %v999
    %v1003 = vadd.f32 %v990, %v1002
    %s1004 = sld [smem:[#allocation2 + $0x73]]
    %v1005 = vstv %s1004
    %v1006 = vmul.f32 %v1005, %v999
    %v1007 = vadd.f32 %v994, %v1006
    %s1008 = sld [smem:[#allocation2 + $0x74]]
    %v1009 = vstv %s1008
    %v1010 = vmul.f32 %v1009, %v999
    %v1011 = vadd.f32 %v998, %v1010
    %v1012 = vmul.f32 %v895, %v808
    %s1013 = sld [smem:[#allocation2 + $0x75]]
    %v1014 = vstv %s1013
    %v1015 = vmul.f32 %v1014, %v1012
    %v1016 = vadd.f32 %v1003, %v1015
    %s1017 = sld [smem:[#allocation2 + $0x76]]
    %v1018 = vstv %s1017
    %v1019 = vmul.f32 %v1018, %v1012
    %v1020 = vadd.f32 %v1007, %v1019
    %s1021 = sld [smem:[#allocation2 + $0x77]]
    %v1022 = vstv %s1021
    %v1023 = vmul.f32 %v1022, %v1012
    %v1024 = vadd.f32 %v1011, %v1023
    %v1025 = vmul.f32 %v895, %v810
    %s1026 = sld [smem:[#allocation2 + $0x78]]
    %v1027 = vstv %s1026
    %v1028 = vmul.f32 %v1027, %v1025
    %v1029 = vadd.f32 %v1016, %v1028
    %s1030 = sld [smem:[#allocation2 + $0x79]]
    %v1031 = vstv %s1030
    %v1032 = vmul.f32 %v1031, %v1025
    %v1033 = vadd.f32 %v1020, %v1032
    %s1034 = sld [smem:[#allocation2 + $0x7a]]
    %v1035 = vstv %s1034
    %v1036 = vmul.f32 %v1035, %v1025
    %v1037 = vadd.f32 %v1024, %v1036
    %v1038 = vmul.f32 %v908, %v810
    %s1039 = sld [smem:[#allocation2 + $0x7b]]
    %v1040 = vstv %s1039
    %v1041 = vmul.f32 %v1040, %v1038
    %v1042 = vadd.f32 %v1029, %v1041
    %s1043 = sld [smem:[#allocation2 + $0x7c]]
    %v1044 = vstv %s1043
    %v1045 = vmul.f32 %v1044, %v1038
    %v1046 = vadd.f32 %v1033, %v1045
    %s1047 = sld [smem:[#allocation2 + $0x7d]]
    %v1048 = vstv %s1047
    %v1049 = vmul.f32 %v1048, %v1038
    %v1050 = vadd.f32 %v1037, %v1049
    %v1051 = vmul.f32 %v921, %v810
    %s1052 = sld [smem:[#allocation2 + $0x7e]]
    %v1053 = vstv %s1052
    %v1054 = vmul.f32 %v1053, %v1051
    %v1055 = vadd.f32 %v1042, %v1054
    %s1056 = sld [smem:[#allocation2 + $0x7f]]
    %v1057 = vstv %s1056
    %v1058 = vmul.f32 %v1057, %v1051
    %v1059 = vadd.f32 %v1046, %v1058
    %s1060 = sld [smem:[#allocation2 + $0x80]]
    %v1061 = vstv %s1060
    %v1062 = vmul.f32 %v1061, %v1051
    %v1063 = vadd.f32 %v1050, %v1062
    %v1064 = vand.u32 2147483647, %v806
    %vm1065 = vcmp.le.f32.partialorder %v1064, 0.7853982
    %vm1066 = vcmp.lt.s32.totalorder %v806, 0
    %v1067 = vand.u32 %v806, 2139095040
    %v1068 = vshrl.u32 %v1067, 23
    %v1069 = vsub.s32 %v1068, 127
    %v1070 = vand.u32 2147483647, %v806
    %v1071 = vand.u32 %v1070, 8388607
    %v1072 = vor.u32 %v1071, 8388608
    %v1073 = vsub.s32 0, %v1072
    %v1074 = vadd.s32 %v1069, 1
    %vm1075 = vcmp.gt.s32.totalorder %v1074, 0
    %v1076 = vsel %vm1075, %v1074, 0
    %v1077 = vshrl.u32 %v1076, 5
    %v1078 = vand.u32 %v1076, 31
    %v1079 = vsub.s32 32, %v1078
    %v1080 = vshrl.u32 683565275, %v1079
    %v1081 = vshll.u32 683565275, %v1078
    %v1082 = vshrl.u32 2475754826, %v1079
    %v1083 = vor.u32 %v1081, %v1082
    %v1084 = vshll.u32 2475754826, %v1078
    %v1085 = vshrl.u32 2131351028, %v1079
    %v1086 = vor.u32 %v1084, %v1085
    %v1087 = vshll.u32 2131351028, %v1078
    %v1088 = vshrl.u32 2102212464, %v1079
    %v1089 = vor.u32 %v1087, %v1088
    %v1090 = vshll.u32 2102212464, %v1078
    %v1091 = vshrl.u32 920167782, %v1079
    %v1092 = vor.u32 %v1090, %v1091
    %v1093 = vshll.u32 920167782, %v1078
    %v1094 = vshrl.u32 1326507024, %v1079
    %v1095 = vor.u32 %v1093, %v1094
    %vm1096 = vcmp.lt.s32.totalorder %v1077, 1
    %vm1097 = vcmp.lt.s32.totalorder %v1077, 2
    %vm1098 = vcmp.lt.s32.totalorder %v1077, 3
    %vm1099 = vcmp.lt.s32.totalorder %v1077, 4
    %v1100 = vsel %vm1096, %v1080, %v1083
    %v1101 = vsel %vm1099, %v1089, 2102212464
    %v1102 = vsel %vm1098, %v1086, %v1101
    %v1103 = vsel %vm1097, %v1100, %v1102
    %v1104 = vsel %vm1096, %v1083, %v1086
    %v1105 = vsel %vm1099, %v1092, 920167782
    %v1106 = vsel %vm1098, %v1089, %v1105
    %v1107 = vsel %vm1097, %v1104, %v1106
    %v1108 = vsel %vm1096, %v1086, %v1089
    %v1109 = vsel %vm1099, %v1095, 1326507024
    %v1110 = vsel %vm1098, %v1092, %v1109
    %v1111 = vsel %vm1097, %v1108, %v1110
    %v1112 = vshll.u32 %v1072, 8
    %v1113 = vand.u32 %v1112, 65535
    %v1114 = vshrl.u32 %v1112, 16
    %v1115 = vand.u32 %v1111, 65535
    %v1116 = vshrl.u32 %v1111, 16
    %v1117 = vmul.u32 %v1113, %v1115
    %v1118 = vmul.u32 %v1113, %v1116
    %v1119 = vmul.u32 %v1114, %v1115
    %v1120 = vmul.u32 %v1114, %v1116
    %v1121 = vshll.u32 %v1118, 16
    %v1122 = vshrl.u32 %v1118, 16
    %v1123 = vshll.u32 %v1119, 16
    %v1124 = vshrl.u32 %v1119, 16
    %vm1125 = vc.u32 %v1117, %v1121
    %v1126 = vsel %vm1125, 1, 0
    %v1127 = vadd.s32 %v1117, %v1121
    %v1128 = vadd.s32 %v1120, %v1126
    %vm1129 = vc.u32 %v1127, %v1123
    %v1130 = vsel %vm1129, 1, 0
    %v1131 = vadd.s32 %v1127, %v1123
    %v1132 = vadd.s32 %v1128, %v1130
    %v1133 = vadd.s32 %v1132, %v1122
    %v1134 = vadd.s32 %v1133, %v1124
    %v1135 = vand.u32 %v1112, 65535
    %v1136 = vshrl.u32 %v1112, 16
    %v1137 = vand.u32 %v1107, 65535
    %v1138 = vshrl.u32 %v1107, 16
    %v1139 = vmul.u32 %v1135, %v1137
    %v1140 = vmul.u32 %v1135, %v1138
    %v1141 = vmul.u32 %v1136, %v1137
    %v1142 = vmul.u32 %v1136, %v1138
    %v1143 = vshll.u32 %v1140, 16
    %v1144 = vshrl.u32 %v1140, 16
    %v1145 = vshll.u32 %v1141, 16
    %v1146 = vshrl.u32 %v1141, 16
    %vm1147 = vc.u32 %v1139, %v1143
    %v1148 = vsel %vm1147, 1, 0
    %v1149 = vadd.s32 %v1139, %v1143
    %v1150 = vadd.s32 %v1142, %v1148
    %vm1151 = vc.u32 %v1149, %v1145
    %v1152 = vsel %vm1151, 1, 0
    %v1153 = vadd.s32 %v1149, %v1145
    %v1154 = vadd.s32 %v1150, %v1152
    %v1155 = vadd.s32 %v1154, %v1144
    %v1156 = vadd.s32 %v1155, %v1146
    %v1157 = vmul.u32 %v1112, %v1103
    %v1158 = vadd.s32 %v1134, %v1153
    %vm1159 = vc.u32 %v1134, %v1153
    %v1160 = vadd.s32 %v1156, 1
    %v1161 = vsel %vm1159, %v1160, %v1156
    %v1162 = vadd.s32 %v1157, %v1161
    %v1163 = vadd.s32 %v1162, 536870912
    %v1164 = vshrl.u32 %v1163, 30
    %v1165 = vshll.u32 %v1164, 30
    %v1166 = vsub.s32 %v1162, %v1165
    %vm1167 = vcmp.lt.s32.totalorder %v1166, 0
    %v1168 = vsub.s32 0, %v1166
    %v1169 = vsel %vm1167, %v1168, %v1166
    %v1170 = vclz %v1169
    %v1171 = vsub.s32 %v1170, 2
    %vm1172 = vcmp.gt.s32.totalorder 0, %v1171
    %v1173 = vsel %vm1172, 0, %v1171
    %v1174 = vsub.s32 32, %v1173
    %v1175 = vshll.u32 %v1166, %v1173
    %v1176 = vshrl.u32 %v1158, %v1174
    %v1177 = vor.u32 %v1175, %v1176
    %v1178 = vsub.s32 4294967266, %v1173
    %v1179 = vadd.s32 %v1178, 127
    %v1180 = vshll.u32 %v1179, 23
    %v1181 = vor.u32 4788187, %v1180
    %v1182 = vand.u32 2147483647, %v1181
    %v1184 = vcvt.s32.f32 %v1177
    %v1185 = vmul.f32 %v1184, %v1182
    %v1186 = vxor.u32 %v1185, 2147483648
    %v1187 = vsel %vm1066, %v1186, %v1185
    %v1188 = vsub.s32 4, %v1164
    %v1189 = vsel %vm1066, %v1188, %v1164
    %v1190 = vsel %vm1065, %v806, %v1187
    %v1191 = vsel %vm1065, 0, %v1189
    %v1192 = vmul.f32 %v1190, %v1190
    %v1193 = vmul.f32 %v1192, -0.001358992
    %v1194 = vadd.f32 %v1193, 0.041655596
    %v1195 = vmul.f32 %v1192, %v1194
    %v1196 = vadd.f32 %v1195, -0.4999988
    %v1197 = vmul.f32 %v1192, %v1196
    %v1198 = vadd.f32 1.0, %v1197
    %v1199 = vmul.f32 %v1190, %v1190
    %v1200 = vmul.f32 %v1199, -0.00019511016
    %v1201 = vadd.f32 %v1200, 0.008332121
    %v1202 = vmul.f32 %v1199, %v1201
    %v1203 = vadd.f32 %v1202, -0.16666654
    %v1204 = vmul.f32 %v1199, %v1203
    %v1205 = vadd.f32 %v1204, 1.0
    %v1206 = vmul.f32 %v1205, %v1190
    %vm1207 = vweird.f32 %v806
    %v1208 = vadd.s32 %v1191, 3
    %v1209 = vand.u32 %v1208, 3
    %vm1210 = vcmp.lt.s32.totalorder %v1209, 2
    %vm1211 = vcmp.eq.s32.totalorder %v1209, 0
    %v1212 = vxor.u32 %v1206, 2147483648
    %v1213 = vsel %vm1211, %v1198, %v1212
    %vm1214 = vcmp.eq.s32.totalorder %v1209, 2
    %v1215 = vxor.u32 %v1198, 2147483648
    %v1216 = vsel %vm1214, %v1215, %v1206
    %v1217 = vsel %vm1210, %v1213, %v1216
    %v1218 = vsel %vm1207, nan, %v1217
    %s1219 = sld [smem:[#allocation2 + $0x81]]
    %v1220 = vstv %s1219
    %v1221 = vmul.f32 %v1220, %v1218
    %v1222 = vadd.f32 %v1055, %v1221
    %s1223 = sld [smem:[#allocation2 + $0x82]]
    %v1224 = vstv %s1223
    %v1225 = vmul.f32 %v1224, %v1218
    %v1226 = vadd.f32 %v1059, %v1225
    %s1227 = sld [smem:[#allocation2 + $0x83]]
    %v1228 = vstv %s1227
    %v1229 = vmul.f32 %v1228, %v1218
    %v1230 = vadd.f32 %v1063, %v1229
    %v1231 = vand.u32 2147483647, %v808
    %vm1232 = vcmp.le.f32.partialorder %v1231, 0.7853982
    %vm1233 = vcmp.lt.s32.totalorder %v808, 0
    %v1234 = vand.u32 %v808, 2139095040
    %v1235 = vshrl.u32 %v1234, 23
    %v1236 = vsub.s32 %v1235, 127
    %v1237 = vand.u32 2147483647, %v808
    %v1238 = vand.u32 %v1237, 8388607
    %v1239 = vor.u32 %v1238, 8388608
    %v1240 = vsub.s32 0, %v1239
    %v1241 = vadd.s32 %v1236, 1
    %vm1242 = vcmp.gt.s32.totalorder %v1241, 0
    %v1243 = vsel %vm1242, %v1241, 0
    %v1244 = vshrl.u32 %v1243, 5
    %v1245 = vand.u32 %v1243, 31
    %v1246 = vsub.s32 32, %v1245
    %v1247 = vshrl.u32 683565275, %v1246
    %v1248 = vshll.u32 683565275, %v1245
    %v1249 = vshrl.u32 2475754826, %v1246
    %v1250 = vor.u32 %v1248, %v1249
    %v1251 = vshll.u32 2475754826, %v1245
    %v1252 = vshrl.u32 2131351028, %v1246
    %v1253 = vor.u32 %v1251, %v1252
    %v1254 = vshll.u32 2131351028, %v1245
    %v1255 = vshrl.u32 2102212464, %v1246
    %v1256 = vor.u32 %v1254, %v1255
    %v1257 = vshll.u32 2102212464, %v1245
    %v1258 = vshrl.u32 920167782, %v1246
    %v1259 = vor.u32 %v1257, %v1258
    %v1260 = vshll.u32 920167782, %v1245
    %v1261 = vshrl.u32 1326507024, %v1246
    %v1262 = vor.u32 %v1260, %v1261
    %vm1263 = vcmp.lt.s32.totalorder %v1244, 1
    %vm1264 = vcmp.lt.s32.totalorder %v1244, 2
    %vm1265 = vcmp.lt.s32.totalorder %v1244, 3
    %vm1266 = vcmp.lt.s32.totalorder %v1244, 4
    %v1267 = vsel %vm1263, %v1247, %v1250
    %v1268 = vsel %vm1266, %v1256, 2102212464
    %v1269 = vsel %vm1265, %v1253, %v1268
    %v1270 = vsel %vm1264, %v1267, %v1269
    %v1271 = vsel %vm1263, %v1250, %v1253
    %v1272 = vsel %vm1266, %v1259, 920167782
    %v1273 = vsel %vm1265, %v1256, %v1272
    %v1274 = vsel %vm1264, %v1271, %v1273
    %v1275 = vsel %vm1263, %v1253, %v1256
    %v1276 = vsel %vm1266, %v1262, 1326507024
    %v1277 = vsel %vm1265, %v1259, %v1276
    %v1278 = vsel %vm1264, %v1275, %v1277
    %v1279 = vshll.u32 %v1239, 8
    %v1280 = vand.u32 %v1279, 65535
    %v1281 = vshrl.u32 %v1279, 16
    %v1282 = vand.u32 %v1278, 65535
    %v1283 = vshrl.u32 %v1278, 16
    %v1284 = vmul.u32 %v1280, %v1282
    %v1285 = vmul.u32 %v1280, %v1283
    %v1286 = vmul.u32 %v1281, %v1282
    %v1287 = vmul.u32 %v1281, %v1283
    %v1288 = vshll.u32 %v1285, 16
    %v1289 = vshrl.u32 %v1285, 16
    %v1290 = vshll.u32 %v1286, 16
    %v1291 = vshrl.u32 %v1286, 16
    %vm1292 = vc.u32 %v1284, %v1288
    %v1293 = vsel %vm1292, 1, 0
    %v1294 = vadd.s32 %v1284, %v1288
    %v1295 = vadd.s32 %v1287, %v1293
    %vm1296 = vc.u32 %v1294, %v1290
    %v1297 = vsel %vm1296, 1, 0
    %v1298 = vadd.s32 %v1294, %v1290
    %v1299 = vadd.s32 %v1295, %v1297
    %v1300 = vadd.s32 %v1299, %v1289
    %v1301 = vadd.s32 %v1300, %v1291
    %v1302 = vand.u32 %v1279, 65535
    %v1303 = vshrl.u32 %v1279, 16
    %v1304 = vand.u32 %v1274, 65535
    %v1305 = vshrl.u32 %v1274, 16
    %v1306 = vmul.u32 %v1302, %v1304
    %v1307 = vmul.u32 %v1302, %v1305
    %v1308 = vmul.u32 %v1303, %v1304
    %v1309 = vmul.u32 %v1303, %v1305
    %v1310 = vshll.u32 %v1307, 16
    %v1311 = vshrl.u32 %v1307, 16
    %v1312 = vshll.u32 %v1308, 16
    %v1313 = vshrl.u32 %v1308, 16
    %vm1314 = vc.u32 %v1306, %v1310
    %v1315 = vsel %vm1314, 1, 0
    %v1316 = vadd.s32 %v1306, %v1310
    %v1317 = vadd.s32 %v1309, %v1315
    %vm1318 = vc.u32 %v1316, %v1312
    %v1319 = vsel %vm1318, 1, 0
    %v1320 = vadd.s32 %v1316, %v1312
    %v1321 = vadd.s32 %v1317, %v1319
    %v1322 = vadd.s32 %v1321, %v1311
    %v1323 = vadd.s32 %v1322, %v1313
    %v1324 = vmul.u32 %v1279, %v1270
    %v1325 = vadd.s32 %v1301, %v1320
    %vm1326 = vc.u32 %v1301, %v1320
    %v1327 = vadd.s32 %v1323, 1
    %v1328 = vsel %vm1326, %v1327, %v1323
    %v1329 = vadd.s32 %v1324, %v1328
    %v1330 = vadd.s32 %v1329, 536870912
    %v1331 = vshrl.u32 %v1330, 30
    %v1332 = vshll.u32 %v1331, 30
    %v1333 = vsub.s32 %v1329, %v1332
    %vm1334 = vcmp.lt.s32.totalorder %v1333, 0
    %v1335 = vsub.s32 0, %v1333
    %v1336 = vsel %vm1334, %v1335, %v1333
    %v1337 = vclz %v1336
    %v1338 = vsub.s32 %v1337, 2
    %vm1339 = vcmp.gt.s32.totalorder 0, %v1338
    %v1340 = vsel %vm1339, 0, %v1338
    %v1341 = vsub.s32 32, %v1340
    %v1342 = vshll.u32 %v1333, %v1340
    %v1343 = vshrl.u32 %v1325, %v1341
    %v1344 = vor.u32 %v1342, %v1343
    %v1345 = vsub.s32 4294967266, %v1340
    %v1346 = vadd.s32 %v1345, 127
    %v1347 = vshll.u32 %v1346, 23
    %v1348 = vor.u32 4788187, %v1347
    %v1349 = vand.u32 2147483647, %v1348
    %v1351 = vcvt.s32.f32 %v1344
    %v1352 = vmul.f32 %v1351, %v1349
    %v1353 = vxor.u32 %v1352, 2147483648
    %v1354 = vsel %vm1233, %v1353, %v1352
    %v1355 = vsub.s32 4, %v1331
    %v1356 = vsel %vm1233, %v1355, %v1331
    %v1357 = vsel %vm1232, %v808, %v1354
    %v1358 = vsel %vm1232, 0, %v1356
    %v1359 = vmul.f32 %v1357, %v1357
    %v1360 = vmul.f32 %v1359, -0.001358992
    %v1361 = vadd.f32 %v1360, 0.041655596
    %v1362 = vmul.f32 %v1359, %v1361
    %v1363 = vadd.f32 %v1362, -0.4999988
    %v1364 = vmul.f32 %v1359, %v1363
    %v1365 = vadd.f32 1.0, %v1364
    %v1366 = vmul.f32 %v1357, %v1357
    %v1367 = vmul.f32 %v1366, -0.00019511016
    %v1368 = vadd.f32 %v1367, 0.008332121
    %v1369 = vmul.f32 %v1366, %v1368
    %v1370 = vadd.f32 %v1369, -0.16666654
    %v1371 = vmul.f32 %v1366, %v1370
    %v1372 = vadd.f32 %v1371, 1.0
    %v1373 = vmul.f32 %v1372, %v1357
    %vm1374 = vweird.f32 %v808
    %v1375 = vadd.s32 %v1358, 3
    %v1376 = vand.u32 %v1375, 3
    %vm1377 = vcmp.lt.s32.totalorder %v1376, 2
    %vm1378 = vcmp.eq.s32.totalorder %v1376, 0
    %v1379 = vxor.u32 %v1373, 2147483648
    %v1380 = vsel %vm1378, %v1365, %v1379
    %vm1381 = vcmp.eq.s32.totalorder %v1376, 2
    %v1382 = vxor.u32 %v1365, 2147483648
    %v1383 = vsel %vm1381, %v1382, %v1373
    %v1384 = vsel %vm1377, %v1380, %v1383
    %v1385 = vsel %vm1374, nan, %v1384
    %s1386 = sld [smem:[#allocation2 + $0x84]]
    %v1387 = vstv %s1386
    %v1388 = vmul.f32 %v1387, %v1385
    %v1389 = vadd.f32 %v1222, %v1388
    %s1390 = sld [smem:[#allocation2 + $0x85]]
    %v1391 = vstv %s1390
    %v1392 = vmul.f32 %v1391, %v1385
    %v1393 = vadd.f32 %v1226, %v1392
    %s1394 = sld [smem:[#allocation2 + $0x86]]
    %v1395 = vstv %s1394
    %v1396 = vmul.f32 %v1395, %v1385
    %v1397 = vadd.f32 %v1230, %v1396
    %v1398 = vand.u32 2147483647, %v810
    %vm1399 = vcmp.le.f32.partialorder %v1398, 0.7853982
    %vm1400 = vcmp.lt.s32.totalorder %v810, 0
    %v1401 = vand.u32 %v810, 2139095040
    %v1402 = vshrl.u32 %v1401, 23
    %v1403 = vsub.s32 %v1402, 127
    %v1404 = vand.u32 2147483647, %v810
    %v1405 = vand.u32 %v1404, 8388607
    %v1406 = vor.u32 %v1405, 8388608
    %v1407 = vsub.s32 0, %v1406
    %v1408 = vadd.s32 %v1403, 1
    %vm1409 = vcmp.gt.s32.totalorder %v1408, 0
    %v1410 = vsel %vm1409, %v1408, 0
    %v1411 = vshrl.u32 %v1410, 5
    %v1412 = vand.u32 %v1410, 31
    %v1413 = vsub.s32 32, %v1412
    %v1414 = vshrl.u32 683565275, %v1413
    %v1415 = vshll.u32 683565275, %v1412
    %v1416 = vshrl.u32 2475754826, %v1413
    %v1417 = vor.u32 %v1415, %v1416
    %v1418 = vshll.u32 2475754826, %v1412
    %v1419 = vshrl.u32 2131351028, %v1413
    %v1420 = vor.u32 %v1418, %v1419
    %v1421 = vshll.u32 2131351028, %v1412
    %v1422 = vshrl.u32 2102212464, %v1413
    %v1423 = vor.u32 %v1421, %v1422
    %v1424 = vshll.u32 2102212464, %v1412
    %v1425 = vshrl.u32 920167782, %v1413
    %v1426 = vor.u32 %v1424, %v1425
    %v1427 = vshll.u32 920167782, %v1412
    %v1428 = vshrl.u32 1326507024, %v1413
    %v1429 = vor.u32 %v1427, %v1428
    %vm1430 = vcmp.lt.s32.totalorder %v1411, 1
    %vm1431 = vcmp.lt.s32.totalorder %v1411, 2
    %vm1432 = vcmp.lt.s32.totalorder %v1411, 3
    %vm1433 = vcmp.lt.s32.totalorder %v1411, 4
    %v1434 = vsel %vm1430, %v1414, %v1417
    %v1435 = vsel %vm1433, %v1423, 2102212464
    %v1436 = vsel %vm1432, %v1420, %v1435
    %v1437 = vsel %vm1431, %v1434, %v1436
    %v1438 = vsel %vm1430, %v1417, %v1420
    %v1439 = vsel %vm1433, %v1426, 920167782
    %v1440 = vsel %vm1432, %v1423, %v1439
    %v1441 = vsel %vm1431, %v1438, %v1440
    %v1442 = vsel %vm1430, %v1420, %v1423
    %v1443 = vsel %vm1433, %v1429, 1326507024
    %v1444 = vsel %vm1432, %v1426, %v1443
    %v1445 = vsel %vm1431, %v1442, %v1444
    %v1446 = vshll.u32 %v1406, 8
    %v1447 = vand.u32 %v1446, 65535
    %v1448 = vshrl.u32 %v1446, 16
    %v1449 = vand.u32 %v1445, 65535
    %v1450 = vshrl.u32 %v1445, 16
    %v1451 = vmul.u32 %v1447, %v1449
    %v1452 = vmul.u32 %v1447, %v1450
    %v1453 = vmul.u32 %v1448, %v1449
    %v1454 = vmul.u32 %v1448, %v1450
    %v1455 = vshll.u32 %v1452, 16
    %v1456 = vshrl.u32 %v1452, 16
    %v1457 = vshll.u32 %v1453, 16
    %v1458 = vshrl.u32 %v1453, 16
    %vm1459 = vc.u32 %v1451, %v1455
    %v1460 = vsel %vm1459, 1, 0
    %v1461 = vadd.s32 %v1451, %v1455
    %v1462 = vadd.s32 %v1454, %v1460
    %vm1463 = vc.u32 %v1461, %v1457
    %v1464 = vsel %vm1463, 1, 0
    %v1465 = vadd.s32 %v1461, %v1457
    %v1466 = vadd.s32 %v1462, %v1464
    %v1467 = vadd.s32 %v1466, %v1456
    %v1468 = vadd.s32 %v1467, %v1458
    %v1469 = vand.u32 %v1446, 65535
    %v1470 = vshrl.u32 %v1446, 16
    %v1471 = vand.u32 %v1441, 65535
    %v1472 = vshrl.u32 %v1441, 16
    %v1473 = vmul.u32 %v1469, %v1471
    %v1474 = vmul.u32 %v1469, %v1472
    %v1475 = vmul.u32 %v1470, %v1471
    %v1476 = vmul.u32 %v1470, %v1472
    %v1477 = vshll.u32 %v1474, 16
    %v1478 = vshrl.u32 %v1474, 16
    %v1479 = vshll.u32 %v1475, 16
    %v1480 = vshrl.u32 %v1475, 16
    %vm1481 = vc.u32 %v1473, %v1477
    %v1482 = vsel %vm1481, 1, 0
    %v1483 = vadd.s32 %v1473, %v1477
    %v1484 = vadd.s32 %v1476, %v1482
    %vm1485 = vc.u32 %v1483, %v1479
    %v1486 = vsel %vm1485, 1, 0
    %v1487 = vadd.s32 %v1483, %v1479
    %v1488 = vadd.s32 %v1484, %v1486
    %v1489 = vadd.s32 %v1488, %v1478
    %v1490 = vadd.s32 %v1489, %v1480
    %v1491 = vmul.u32 %v1446, %v1437
    %v1492 = vadd.s32 %v1468, %v1487
    %vm1493 = vc.u32 %v1468, %v1487
    %v1494 = vadd.s32 %v1490, 1
    %v1495 = vsel %vm1493, %v1494, %v1490
    %v1496 = vadd.s32 %v1491, %v1495
    %v1497 = vadd.s32 %v1496, 536870912
    %v1498 = vshrl.u32 %v1497, 30
    %v1499 = vshll.u32 %v1498, 30
    %v1500 = vsub.s32 %v1496, %v1499
    %vm1501 = vcmp.lt.s32.totalorder %v1500, 0
    %v1502 = vsub.s32 0, %v1500
    %v1503 = vsel %vm1501, %v1502, %v1500
    %v1504 = vclz %v1503
    %v1505 = vsub.s32 %v1504, 2
    %vm1506 = vcmp.gt.s32.totalorder 0, %v1505
    %v1507 = vsel %vm1506, 0, %v1505
    %v1508 = vsub.s32 32, %v1507
    %v1509 = vshll.u32 %v1500, %v1507
    %v1510 = vshrl.u32 %v1492, %v1508
    %v1511 = vor.u32 %v1509, %v1510
    %v1512 = vsub.s32 4294967266, %v1507
    %v1513 = vadd.s32 %v1512, 127
    %v1514 = vshll.u32 %v1513, 23
    %v1515 = vor.u32 4788187, %v1514
    %v1516 = vand.u32 2147483647, %v1515
    %v1518 = vcvt.s32.f32 %v1511
    %v1519 = vmul.f32 %v1518, %v1516
    %v1520 = vxor.u32 %v1519, 2147483648
    %v1521 = vsel %vm1400, %v1520, %v1519
    %v1522 = vsub.s32 4, %v1498
    %v1523 = vsel %vm1400, %v1522, %v1498
    %v1524 = vsel %vm1399, %v810, %v1521
    %v1525 = vsel %vm1399, 0, %v1523
    %v1526 = vmul.f32 %v1524, %v1524
    %v1527 = vmul.f32 %v1526, -0.001358992
    %v1528 = vadd.f32 %v1527, 0.041655596
    %v1529 = vmul.f32 %v1526, %v1528
    %v1530 = vadd.f32 %v1529, -0.4999988
    %v1531 = vmul.f32 %v1526, %v1530
    %v1532 = vadd.f32 1.0, %v1531
    %v1533 = vmul.f32 %v1524, %v1524
    %v1534 = vmul.f32 %v1533, -0.00019511016
    %v1535 = vadd.f32 %v1534, 0.008332121
    %v1536 = vmul.f32 %v1533, %v1535
    %v1537 = vadd.f32 %v1536, -0.16666654
    %v1538 = vmul.f32 %v1533, %v1537
    %v1539 = vadd.f32 %v1538, 1.0
    %v1540 = vmul.f32 %v1539, %v1524
    %vm1541 = vweird.f32 %v810
    %v1542 = vadd.s32 %v1525, 3
    %v1543 = vand.u32 %v1542, 3
    %vm1544 = vcmp.lt.s32.totalorder %v1543, 2
    %vm1545 = vcmp.eq.s32.totalorder %v1543, 0
    %v1546 = vxor.u32 %v1540, 2147483648
    %v1547 = vsel %vm1545, %v1532, %v1546
    %vm1548 = vcmp.eq.s32.totalorder %v1543, 2
    %v1549 = vxor.u32 %v1532, 2147483648
    %v1550 = vsel %vm1548, %v1549, %v1540
    %v1551 = vsel %vm1544, %v1547, %v1550
    %v1552 = vsel %vm1541, nan, %v1551
    %s1553 = sld [smem:[#allocation2 + $0x87]]
    %v1554 = vstv %s1553
    %v1555 = vmul.f32 %v1554, %v1552
    %v1556 = vadd.f32 %v1389, %v1555
    %s1557 = sld [smem:[#allocation2 + $0x88]]
    %v1558 = vstv %s1557
    %v1559 = vmul.f32 %v1558, %v1552
    %v1560 = vadd.f32 %v1393, %v1559
    %s1561 = sld [smem:[#allocation2 + $0x89]]
    %v1562 = vstv %s1561
    %v1563 = vmul.f32 %v1562, %v1552
    %v1564 = vadd.f32 %v1397, %v1563
    %s1565 = scalar_lea.vmem [#allocation7], 24
    %1566 = vst [vmem:[%s1565] sm:$0xff] %v1556
    %s1567 = scalar_lea.vmem [#allocation7], 32
    %1568 = vst [vmem:[%s1567] sm:$0xff] %v1560
    %s1569 = scalar_lea.vmem [#allocation7], 40
    %1570 = vst [vmem:[%s1569] sm:$0xff] %v1564
    %s1571 = scalar_lea.vmem [#allocation6], 48
    %v1572 = vld [vmem:[%s1571] sm:$0xff]
    %s1573 = scalar_lea.vmem [#allocation6], 56
    %v1574 = vld [vmem:[%s1573] sm:$0xff]
    %s1575 = scalar_lea.vmem [#allocation6], 64
    %v1576 = vld [vmem:[%s1575] sm:$0xff]
    %s1577 = sld [smem:[#allocation2 + $0x8a]]
    %v1578 = vstv %s1577
    %v1579 = vadd.f32 %v1572, %v1578
    %s1580 = sld [smem:[#allocation2 + $0x8b]]
    %v1581 = vstv %s1580
    %v1582 = vadd.f32 %v1574, %v1581
    %s1583 = sld [smem:[#allocation2 + $0x8c]]
    %v1584 = vstv %s1583
    %v1585 = vadd.f32 %v1576, %v1584
    %s1586 = sld [smem:[#allocation2 + $0x8d]]
    %v1587 = vstv %s1586
    %v1588 = vmul.f32 %v1587, %v1572
    %v1589 = vadd.f32 %v1579, %v1588
    %s1590 = sld [smem:[#allocation2 + $0x8e]]
    %v1591 = vstv %s1590
    %v1592 = vmul.f32 %v1591, %v1572
    %v1593 = vadd.f32 %v1582, %v1592
    %s1594 = sld [smem:[#allocation2 + $0x8f]]
    %v1595 = vstv %s1594
    %v1596 = vmul.f32 %v1595, %v1572
    %v1597 = vadd.f32 %v1585, %v1596
    %s1598 = sld [smem:[#allocation2 + $0x90]]
    %v1599 = vstv %s1598
    %v1600 = vmul.f32 %v1599, %v1574
    %v1601 = vadd.f32 %v1589, %v1600
    %s1602 = sld [smem:[#allocation2 + $0x91]]
    %v1603 = vstv %s1602
    %v1604 = vmul.f32 %v1603, %v1574
    %v1605 = vadd.f32 %v1593, %v1604
    %s1606 = sld [smem:[#allocation2 + $0x92]]
    %v1607 = vstv %s1606
    %v1608 = vmul.f32 %v1607, %v1574
    %v1609 = vadd.f32 %v1597, %v1608
    %s1610 = sld [smem:[#allocation2 + $0x93]]
    %v1611 = vstv %s1610
    %v1612 = vmul.f32 %v1611, %v1576
    %v1613 = vadd.f32 %v1601, %v1612
    %s1614 = sld [smem:[#allocation2 + $0x94]]
    %v1615 = vstv %s1614
    %v1616 = vmul.f32 %v1615, %v1576
    %v1617 = vadd.f32 %v1605, %v1616
    %s1618 = sld [smem:[#allocation2 + $0x95]]
    %v1619 = vstv %s1618
    %v1620 = vmul.f32 %v1619, %v1576
    %v1621 = vadd.f32 %v1609, %v1620
    %v1622 = vmul.f32 %v1572, %v1572
    %s1623 = sld [smem:[#allocation2 + $0x96]]
    %v1624 = vstv %s1623
    %v1625 = vmul.f32 %v1624, %v1622
    %v1626 = vadd.f32 %v1613, %v1625
    %s1627 = sld [smem:[#allocation2 + $0x97]]
    %v1628 = vstv %s1627
    %v1629 = vmul.f32 %v1628, %v1622
    %v1630 = vadd.f32 %v1617, %v1629
    %s1631 = sld [smem:[#allocation2 + $0x98]]
    %v1632 = vstv %s1631
    %v1633 = vmul.f32 %v1632, %v1622
    %v1634 = vadd.f32 %v1621, %v1633
    %v1635 = vmul.f32 %v1572, %v1574
    %s1636 = sld [smem:[#allocation2 + $0x99]]
    %v1637 = vstv %s1636
    %v1638 = vmul.f32 %v1637, %v1635
    %v1639 = vadd.f32 %v1626, %v1638
    %s1640 = sld [smem:[#allocation2 + $0x9a]]
    %v1641 = vstv %s1640
    %v1642 = vmul.f32 %v1641, %v1635
    %v1643 = vadd.f32 %v1630, %v1642
    %s1644 = sld [smem:[#allocation2 + $0x9b]]
    %v1645 = vstv %s1644
    %v1646 = vmul.f32 %v1645, %v1635
    %v1647 = vadd.f32 %v1634, %v1646
    %v1648 = vmul.f32 %v1572, %v1576
    %s1649 = sld [smem:[#allocation2 + $0x9c]]
    %v1650 = vstv %s1649
    %v1651 = vmul.f32 %v1650, %v1648
    %v1652 = vadd.f32 %v1639, %v1651
    %s1653 = sld [smem:[#allocation2 + $0x9d]]
    %v1654 = vstv %s1653
    %v1655 = vmul.f32 %v1654, %v1648
    %v1656 = vadd.f32 %v1643, %v1655
    %s1657 = sld [smem:[#allocation2 + $0x9e]]
    %v1658 = vstv %s1657
    %v1659 = vmul.f32 %v1658, %v1648
    %v1660 = vadd.f32 %v1647, %v1659
    %v1661 = vmul.f32 %v1574, %v1574
    %s1662 = sld [smem:[#allocation2 + $0x9f]]
    %v1663 = vstv %s1662
    %v1664 = vmul.f32 %v1663, %v1661
    %v1665 = vadd.f32 %v1652, %v1664
    %s1666 = sld [smem:[#allocation2 + $0xa0]]
    %v1667 = vstv %s1666
    %v1668 = vmul.f32 %v1667, %v1661
    %v1669 = vadd.f32 %v1656, %v1668
    %s1670 = sld [smem:[#allocation2 + $0xa1]]
    %v1671 = vstv %s1670
    %v1672 = vmul.f32 %v1671, %v1661
    %v1673 = vadd.f32 %v1660, %v1672
    %v1674 = vmul.f32 %v1574, %v1576
    %s1675 = sld [smem:[#allocation2 + $0xa2]]
    %v1676 = vstv %s1675
    %v1677 = vmul.f32 %v1676, %v1674
    %v1678 = vadd.f32 %v1665, %v1677
    %s1679 = sld [smem:[#allocation2 + $0xa3]]
    %v1680 = vstv %s1679
    %v1681 = vmul.f32 %v1680, %v1674
    %v1682 = vadd.f32 %v1669, %v1681
    %s1683 = sld [smem:[#allocation2 + $0xa4]]
    %v1684 = vstv %s1683
    %v1685 = vmul.f32 %v1684, %v1674
    %v1686 = vadd.f32 %v1673, %v1685
    %v1687 = vmul.f32 %v1576, %v1576
    %s1688 = sld [smem:[#allocation2 + $0xa5]]
    %v1689 = vstv %s1688
    %v1690 = vmul.f32 %v1689, %v1687
    %v1691 = vadd.f32 %v1678, %v1690
    %s1692 = sld [smem:[#allocation2 + $0xa6]]
    %v1693 = vstv %s1692
    %v1694 = vmul.f32 %v1693, %v1687
    %v1695 = vadd.f32 %v1682, %v1694
    %s1696 = sld [smem:[#allocation2 + $0xa7]]
    %v1697 = vstv %s1696
    %v1698 = vmul.f32 %v1697, %v1687
    %v1699 = vadd.f32 %v1686, %v1698
    %v1700 = vmul.f32 %v1622, %v1572
    %s1701 = sld [smem:[#allocation2 + $0xa8]]
    %v1702 = vstv %s1701
    %v1703 = vmul.f32 %v1702, %v1700
    %v1704 = vadd.f32 %v1691, %v1703
    %s1705 = sld [smem:[#allocation2 + $0xa9]]
    %v1706 = vstv %s1705
    %v1707 = vmul.f32 %v1706, %v1700
    %v1708 = vadd.f32 %v1695, %v1707
    %s1709 = sld [smem:[#allocation2 + $0xaa]]
    %v1710 = vstv %s1709
    %v1711 = vmul.f32 %v1710, %v1700
    %v1712 = vadd.f32 %v1699, %v1711
    %v1713 = vmul.f32 %v1622, %v1574
    %s1714 = sld [smem:[#allocation2 + $0xab]]
    %v1715 = vstv %s1714
    %v1716 = vmul.f32 %v1715, %v1713
    %v1717 = vadd.f32 %v1704, %v1716
    %s1718 = sld [smem:[#allocation2 + $0xac]]
    %v1719 = vstv %s1718
    %v1720 = vmul.f32 %v1719, %v1713
    %v1721 = vadd.f32 %v1708, %v1720
    %s1722 = sld [smem:[#allocation2 + $0xad]]
    %v1723 = vstv %s1722
    %v1724 = vmul.f32 %v1723, %v1713
    %v1725 = vadd.f32 %v1712, %v1724
    %v1726 = vmul.f32 %v1622, %v1576
    %s1727 = sld [smem:[#allocation2 + $0xae]]
    %v1728 = vstv %s1727
    %v1729 = vmul.f32 %v1728, %v1726
    %v1730 = vadd.f32 %v1717, %v1729
    %s1731 = sld [smem:[#allocation2 + $0xaf]]
    %v1732 = vstv %s1731
    %v1733 = vmul.f32 %v1732, %v1726
    %v1734 = vadd.f32 %v1721, %v1733
    %s1735 = sld [smem:[#allocation2 + $0xb0]]
    %v1736 = vstv %s1735
    %v1737 = vmul.f32 %v1736, %v1726
    %v1738 = vadd.f32 %v1725, %v1737
    %v1739 = vmul.f32 %v1635, %v1574
    %s1740 = sld [smem:[#allocation2 + $0xb1]]
    %v1741 = vstv %s1740
    %v1742 = vmul.f32 %v1741, %v1739
    %v1743 = vadd.f32 %v1730, %v1742
    %s1744 = sld [smem:[#allocation2 + $0xb2]]
    %v1745 = vstv %s1744
    %v1746 = vmul.f32 %v1745, %v1739
    %v1747 = vadd.f32 %v1734, %v1746
    %s1748 = sld [smem:[#allocation2 + $0xb3]]
    %v1749 = vstv %s1748
    %v1750 = vmul.f32 %v1749, %v1739
    %v1751 = vadd.f32 %v1738, %v1750
    %v1752 = vmul.f32 %v1635, %v1576
    %s1753 = sld [smem:[#allocation2 + $0xb4]]
    %v1754 = vstv %s1753
    %v1755 = vmul.f32 %v1754, %v1752
    %v1756 = vadd.f32 %v1743, %v1755
    %s1757 = sld [smem:[#allocation2 + $0xb5]]
    %v1758 = vstv %s1757
    %v1759 = vmul.f32 %v1758, %v1752
    %v1760 = vadd.f32 %v1747, %v1759
    %s1761 = sld [smem:[#allocation2 + $0xb6]]
    %v1762 = vstv %s1761
    %v1763 = vmul.f32 %v1762, %v1752
    %v1764 = vadd.f32 %v1751, %v1763
    %v1765 = vmul.f32 %v1648, %v1576
    %s1766 = sld [smem:[#allocation2 + $0xb7]]
    %v1767 = vstv %s1766
    %v1768 = vmul.f32 %v1767, %v1765
    %v1769 = vadd.f32 %v1756, %v1768
    %s1770 = sld [smem:[#allocation2 + $0xb8]]
    %v1771 = vstv %s1770
    %v1772 = vmul.f32 %v1771, %v1765
    %v1773 = vadd.f32 %v1760, %v1772
    %s1774 = sld [smem:[#allocation2 + $0xb9]]
    %v1775 = vstv %s1774
    %v1776 = vmul.f32 %v1775, %v1765
    %v1777 = vadd.f32 %v1764, %v1776
    %v1778 = vmul.f32 %v1661, %v1574
    %s1779 = sld [smem:[#allocation2 + $0xba]]
    %v1780 = vstv %s1779
    %v1781 = vmul.f32 %v1780, %v1778
    %v1782 = vadd.f32 %v1769, %v1781
    %s1783 = sld [smem:[#allocation2 + $0xbb]]
    %v1784 = vstv %s1783
    %v1785 = vmul.f32 %v1784, %v1778
    %v1786 = vadd.f32 %v1773, %v1785
    %s1787 = sld [smem:[#allocation2 + $0xbc]]
    %v1788 = vstv %s1787
    %v1789 = vmul.f32 %v1788, %v1778
    %v1790 = vadd.f32 %v1777, %v1789
    %v1791 = vmul.f32 %v1661, %v1576
    %s1792 = sld [smem:[#allocation2 + $0xbd]]
    %v1793 = vstv %s1792
    %v1794 = vmul.f32 %v1793, %v1791
    %v1795 = vadd.f32 %v1782, %v1794
    %s1796 = sld [smem:[#allocation2 + $0xbe]]
    %v1797 = vstv %s1796
    %v1798 = vmul.f32 %v1797, %v1791
    %v1799 = vadd.f32 %v1786, %v1798
    %s1800 = sld [smem:[#allocation2 + $0xbf]]
    %v1801 = vstv %s1800
    %v1802 = vmul.f32 %v1801, %v1791
    %v1803 = vadd.f32 %v1790, %v1802
    %v1804 = vmul.f32 %v1674, %v1576
    %s1805 = sld [smem:[#allocation2 + $0xc0]]
    %v1806 = vstv %s1805
    %v1807 = vmul.f32 %v1806, %v1804
    %v1808 = vadd.f32 %v1795, %v1807
    %s1809 = sld [smem:[#allocation2 + $0xc1]]
    %v1810 = vstv %s1809
    %v1811 = vmul.f32 %v1810, %v1804
    %v1812 = vadd.f32 %v1799, %v1811
    %s1813 = sld [smem:[#allocation2 + $0xc2]]
    %v1814 = vstv %s1813
    %v1815 = vmul.f32 %v1814, %v1804
    %v1816 = vadd.f32 %v1803, %v1815
    %v1817 = vmul.f32 %v1687, %v1576
    %s1818 = sld [smem:[#allocation2 + $0xc3]]
    %v1819 = vstv %s1818
    %v1820 = vmul.f32 %v1819, %v1817
    %v1821 = vadd.f32 %v1808, %v1820
    %s1822 = sld [smem:[#allocation2 + $0xc4]]
    %v1823 = vstv %s1822
    %v1824 = vmul.f32 %v1823, %v1817
    %v1825 = vadd.f32 %v1812, %v1824
    %s1826 = sld [smem:[#allocation2 + $0xc5]]
    %v1827 = vstv %s1826
    %v1828 = vmul.f32 %v1827, %v1817
    %v1829 = vadd.f32 %v1816, %v1828
    %v1830 = vand.u32 2147483647, %v1572
    %vm1831 = vcmp.le.f32.partialorder %v1830, 0.7853982
    %vm1832 = vcmp.lt.s32.totalorder %v1572, 0
    %v1833 = vand.u32 %v1572, 2139095040
    %v1834 = vshrl.u32 %v1833, 23
    %v1835 = vsub.s32 %v1834, 127
    %v1836 = vand.u32 2147483647, %v1572
    %v1837 = vand.u32 %v1836, 8388607
    %v1838 = vor.u32 %v1837, 8388608
    %v1839 = vsub.s32 0, %v1838
    %v1840 = vadd.s32 %v1835, 1
    %vm1841 = vcmp.gt.s32.totalorder %v1840, 0
    %v1842 = vsel %vm1841, %v1840, 0
    %v1843 = vshrl.u32 %v1842, 5
    %v1844 = vand.u32 %v1842, 31
    %v1845 = vsub.s32 32, %v1844
    %v1846 = vshrl.u32 683565275, %v1845
    %v1847 = vshll.u32 683565275, %v1844
    %v1848 = vshrl.u32 2475754826, %v1845
    %v1849 = vor.u32 %v1847, %v1848
    %v1850 = vshll.u32 2475754826, %v1844
    %v1851 = vshrl.u32 2131351028, %v1845
    %v1852 = vor.u32 %v1850, %v1851
    %v1853 = vshll.u32 2131351028, %v1844
    %v1854 = vshrl.u32 2102212464, %v1845
    %v1855 = vor.u32 %v1853, %v1854
    %v1856 = vshll.u32 2102212464, %v1844
    %v1857 = vshrl.u32 920167782, %v1845
    %v1858 = vor.u32 %v1856, %v1857
    %v1859 = vshll.u32 920167782, %v1844
    %v1860 = vshrl.u32 1326507024, %v1845
    %v1861 = vor.u32 %v1859, %v1860
    %vm1862 = vcmp.lt.s32.totalorder %v1843, 1
    %vm1863 = vcmp.lt.s32.totalorder %v1843, 2
    %vm1864 = vcmp.lt.s32.totalorder %v1843, 3
    %vm1865 = vcmp.lt.s32.totalorder %v1843, 4
    %v1866 = vsel %vm1862, %v1846, %v1849
    %v1867 = vsel %vm1865, %v1855, 2102212464
    %v1868 = vsel %vm1864, %v1852, %v1867
    %v1869 = vsel %vm1863, %v1866, %v1868
    %v1870 = vsel %vm1862, %v1849, %v1852
    %v1871 = vsel %vm1865, %v1858, 920167782
    %v1872 = vsel %vm1864, %v1855, %v1871
    %v1873 = vsel %vm1863, %v1870, %v1872
    %v1874 = vsel %vm1862, %v1852, %v1855
    %v1875 = vsel %vm1865, %v1861, 1326507024
    %v1876 = vsel %vm1864, %v1858, %v1875
    %v1877 = vsel %vm1863, %v1874, %v1876
    %v1878 = vshll.u32 %v1838, 8
    %v1879 = vand.u32 %v1878, 65535
    %v1880 = vshrl.u32 %v1878, 16
    %v1881 = vand.u32 %v1877, 65535
    %v1882 = vshrl.u32 %v1877, 16
    %v1883 = vmul.u32 %v1879, %v1881
    %v1884 = vmul.u32 %v1879, %v1882
    %v1885 = vmul.u32 %v1880, %v1881
    %v1886 = vmul.u32 %v1880, %v1882
    %v1887 = vshll.u32 %v1884, 16
    %v1888 = vshrl.u32 %v1884, 16
    %v1889 = vshll.u32 %v1885, 16
    %v1890 = vshrl.u32 %v1885, 16
    %vm1891 = vc.u32 %v1883, %v1887
    %v1892 = vsel %vm1891, 1, 0
    %v1893 = vadd.s32 %v1883, %v1887
    %v1894 = vadd.s32 %v1886, %v1892
    %vm1895 = vc.u32 %v1893, %v1889
    %v1896 = vsel %vm1895, 1, 0
    %v1897 = vadd.s32 %v1893, %v1889
    %v1898 = vadd.s32 %v1894, %v1896
    %v1899 = vadd.s32 %v1898, %v1888
    %v1900 = vadd.s32 %v1899, %v1890
    %v1901 = vand.u32 %v1878, 65535
    %v1902 = vshrl.u32 %v1878, 16
    %v1903 = vand.u32 %v1873, 65535
    %v1904 = vshrl.u32 %v1873, 16
    %v1905 = vmul.u32 %v1901, %v1903
    %v1906 = vmul.u32 %v1901, %v1904
    %v1907 = vmul.u32 %v1902, %v1903
    %v1908 = vmul.u32 %v1902, %v1904
    %v1909 = vshll.u32 %v1906, 16
    %v1910 = vshrl.u32 %v1906, 16
    %v1911 = vshll.u32 %v1907, 16
    %v1912 = vshrl.u32 %v1907, 16
    %vm1913 = vc.u32 %v1905, %v1909
    %v1914 = vsel %vm1913, 1, 0
    %v1915 = vadd.s32 %v1905, %v1909
    %v1916 = vadd.s32 %v1908, %v1914
    %vm1917 = vc.u32 %v1915, %v1911
    %v1918 = vsel %vm1917, 1, 0
    %v1919 = vadd.s32 %v1915, %v1911
    %v1920 = vadd.s32 %v1916, %v1918
    %v1921 = vadd.s32 %v1920, %v1910
    %v1922 = vadd.s32 %v1921, %v1912
    %v1923 = vmul.u32 %v1878, %v1869
    %v1924 = vadd.s32 %v1900, %v1919
    %vm1925 = vc.u32 %v1900, %v1919
    %v1926 = vadd.s32 %v1922, 1
    %v1927 = vsel %vm1925, %v1926, %v1922
    %v1928 = vadd.s32 %v1923, %v1927
    %v1929 = vadd.s32 %v1928, 536870912
    %v1930 = vshrl.u32 %v1929, 30
    %v1931 = vshll.u32 %v1930, 30
    %v1932 = vsub.s32 %v1928, %v1931
    %vm1933 = vcmp.lt.s32.totalorder %v1932, 0
    %v1934 = vsub.s32 0, %v1932
    %v1935 = vsel %vm1933, %v1934, %v1932
    %v1936 = vclz %v1935
    %v1937 = vsub.s32 %v1936, 2
    %vm1938 = vcmp.gt.s32.totalorder 0, %v1937
    %v1939 = vsel %vm1938, 0, %v1937
    %v1940 = vsub.s32 32, %v1939
    %v1941 = vshll.u32 %v1932, %v1939
    %v1942 = vshrl.u32 %v1924, %v1940
    %v1943 = vor.u32 %v1941, %v1942
    %v1944 = vsub.s32 4294967266, %v1939
    %v1945 = vadd.s32 %v1944, 127
    %v1946 = vshll.u32 %v1945, 23
    %v1947 = vor.u32 4788187, %v1946
    %v1948 = vand.u32 2147483647, %v1947
    %v1950 = vcvt.s32.f32 %v1943
    %v1951 = vmul.f32 %v1950, %v1948
    %v1952 = vxor.u32 %v1951, 2147483648
    %v1953 = vsel %vm1832, %v1952, %v1951
    %v1954 = vsub.s32 4, %v1930
    %v1955 = vsel %vm1832, %v1954, %v1930
    %v1956 = vsel %vm1831, %v1572, %v1953
    %v1957 = vsel %vm1831, 0, %v1955
    %v1958 = vmul.f32 %v1956, %v1956
    %v1959 = vmul.f32 %v1958, -0.001358992
    %v1960 = vadd.f32 %v1959, 0.041655596
    %v1961 = vmul.f32 %v1958, %v1960
    %v1962 = vadd.f32 %v1961, -0.4999988
    %v1963 = vmul.f32 %v1958, %v1962
    %v1964 = vadd.f32 1.0, %v1963
    %v1965 = vmul.f32 %v1956, %v1956
    %v1966 = vmul.f32 %v1965, -0.00019511016
    %v1967 = vadd.f32 %v1966, 0.008332121
    %v1968 = vmul.f32 %v1965, %v1967
    %v1969 = vadd.f32 %v1968, -0.16666654
    %v1970 = vmul.f32 %v1965, %v1969
    %v1971 = vadd.f32 %v1970, 1.0
    %v1972 = vmul.f32 %v1971, %v1956
    %vm1973 = vweird.f32 %v1572
    %v1974 = vadd.s32 %v1957, 3
    %v1975 = vand.u32 %v1974, 3
    %vm1976 = vcmp.lt.s32.totalorder %v1975, 2
    %vm1977 = vcmp.eq.s32.totalorder %v1975, 0
    %v1978 = vxor.u32 %v1972, 2147483648
    %v1979 = vsel %vm1977, %v1964, %v1978
    %vm1980 = vcmp.eq.s32.totalorder %v1975, 2
    %v1981 = vxor.u32 %v1964, 2147483648
    %v1982 = vsel %vm1980, %v1981, %v1972
    %v1983 = vsel %vm1976, %v1979, %v1982
    %v1984 = vsel %vm1973, nan, %v1983
    %s1985 = sld [smem:[#allocation2 + $0xc6]]
    %v1986 = vstv %s1985
    %v1987 = vmul.f32 %v1986, %v1984
    %v1988 = vadd.f32 %v1821, %v1987
    %s1989 = sld [smem:[#allocation2 + $0xc7]]
    %v1990 = vstv %s1989
    %v1991 = vmul.f32 %v1990, %v1984
    %v1992 = vadd.f32 %v1825, %v1991
    %s1993 = sld [smem:[#allocation2 + $0xc8]]
    %v1994 = vstv %s1993
    %v1995 = vmul.f32 %v1994, %v1984
    %v1996 = vadd.f32 %v1829, %v1995
    %v1997 = vand.u32 2147483647, %v1574
    %vm1998 = vcmp.le.f32.partialorder %v1997, 0.7853982
    %vm1999 = vcmp.lt.s32.totalorder %v1574, 0
    %v2000 = vand.u32 %v1574, 2139095040
    %v2001 = vshrl.u32 %v2000, 23
    %v2002 = vsub.s32 %v2001, 127
    %v2003 = vand.u32 2147483647, %v1574
    %v2004 = vand.u32 %v2003, 8388607
    %v2005 = vor.u32 %v2004, 8388608
    %v2006 = vsub.s32 0, %v2005
    %v2007 = vadd.s32 %v2002, 1
    %vm2008 = vcmp.gt.s32.totalorder %v2007, 0
    %v2009 = vsel %vm2008, %v2007, 0
    %v2010 = vshrl.u32 %v2009, 5
    %v2011 = vand.u32 %v2009, 31
    %v2012 = vsub.s32 32, %v2011
    %v2013 = vshrl.u32 683565275, %v2012
    %v2014 = vshll.u32 683565275, %v2011
    %v2015 = vshrl.u32 2475754826, %v2012
    %v2016 = vor.u32 %v2014, %v2015
    %v2017 = vshll.u32 2475754826, %v2011
    %v2018 = vshrl.u32 2131351028, %v2012
    %v2019 = vor.u32 %v2017, %v2018
    %v2020 = vshll.u32 2131351028, %v2011
    %v2021 = vshrl.u32 2102212464, %v2012
    %v2022 = vor.u32 %v2020, %v2021
    %v2023 = vshll.u32 2102212464, %v2011
    %v2024 = vshrl.u32 920167782, %v2012
    %v2025 = vor.u32 %v2023, %v2024
    %v2026 = vshll.u32 920167782, %v2011
    %v2027 = vshrl.u32 1326507024, %v2012
    %v2028 = vor.u32 %v2026, %v2027
    %vm2029 = vcmp.lt.s32.totalorder %v2010, 1
    %vm2030 = vcmp.lt.s32.totalorder %v2010, 2
    %vm2031 = vcmp.lt.s32.totalorder %v2010, 3
    %vm2032 = vcmp.lt.s32.totalorder %v2010, 4
    %v2033 = vsel %vm2029, %v2013, %v2016
    %v2034 = vsel %vm2032, %v2022, 2102212464
    %v2035 = vsel %vm2031, %v2019, %v2034
    %v2036 = vsel %vm2030, %v2033, %v2035
    %v2037 = vsel %vm2029, %v2016, %v2019
    %v2038 = vsel %vm2032, %v2025, 920167782
    %v2039 = vsel %vm2031, %v2022, %v2038
    %v2040 = vsel %vm2030, %v2037, %v2039
    %v2041 = vsel %vm2029, %v2019, %v2022
    %v2042 = vsel %vm2032, %v2028, 1326507024
    %v2043 = vsel %vm2031, %v2025, %v2042
    %v2044 = vsel %vm2030, %v2041, %v2043
    %v2045 = vshll.u32 %v2005, 8
    %v2046 = vand.u32 %v2045, 65535
    %v2047 = vshrl.u32 %v2045, 16
    %v2048 = vand.u32 %v2044, 65535
    %v2049 = vshrl.u32 %v2044, 16
    %v2050 = vmul.u32 %v2046, %v2048
    %v2051 = vmul.u32 %v2046, %v2049
    %v2052 = vmul.u32 %v2047, %v2048
    %v2053 = vmul.u32 %v2047, %v2049
    %v2054 = vshll.u32 %v2051, 16
    %v2055 = vshrl.u32 %v2051, 16
    %v2056 = vshll.u32 %v2052, 16
    %v2057 = vshrl.u32 %v2052, 16
    %vm2058 = vc.u32 %v2050, %v2054
    %v2059 = vsel %vm2058, 1, 0
    %v2060 = vadd.s32 %v2050, %v2054
    %v2061 = vadd.s32 %v2053, %v2059
    %vm2062 = vc.u32 %v2060, %v2056
    %v2063 = vsel %vm2062, 1, 0
    %v2064 = vadd.s32 %v2060, %v2056
    %v2065 = vadd.s32 %v2061, %v2063
    %v2066 = vadd.s32 %v2065, %v2055
    %v2067 = vadd.s32 %v2066, %v2057
    %v2068 = vand.u32 %v2045, 65535
    %v2069 = vshrl.u32 %v2045, 16
    %v2070 = vand.u32 %v2040, 65535
    %v2071 = vshrl.u32 %v2040, 16
    %v2072 = vmul.u32 %v2068, %v2070
    %v2073 = vmul.u32 %v2068, %v2071
    %v2074 = vmul.u32 %v2069, %v2070
    %v2075 = vmul.u32 %v2069, %v2071
    %v2076 = vshll.u32 %v2073, 16
    %v2077 = vshrl.u32 %v2073, 16
    %v2078 = vshll.u32 %v2074, 16
    %v2079 = vshrl.u32 %v2074, 16
    %vm2080 = vc.u32 %v2072, %v2076
    %v2081 = vsel %vm2080, 1, 0
    %v2082 = vadd.s32 %v2072, %v2076
    %v2083 = vadd.s32 %v2075, %v2081
    %vm2084 = vc.u32 %v2082, %v2078
    %v2085 = vsel %vm2084, 1, 0
    %v2086 = vadd.s32 %v2082, %v2078
    %v2087 = vadd.s32 %v2083, %v2085
    %v2088 = vadd.s32 %v2087, %v2077
    %v2089 = vadd.s32 %v2088, %v2079
    %v2090 = vmul.u32 %v2045, %v2036
    %v2091 = vadd.s32 %v2067, %v2086
    %vm2092 = vc.u32 %v2067, %v2086
    %v2093 = vadd.s32 %v2089, 1
    %v2094 = vsel %vm2092, %v2093, %v2089
    %v2095 = vadd.s32 %v2090, %v2094
    %v2096 = vadd.s32 %v2095, 536870912
    %v2097 = vshrl.u32 %v2096, 30
    %v2098 = vshll.u32 %v2097, 30
    %v2099 = vsub.s32 %v2095, %v2098
    %vm2100 = vcmp.lt.s32.totalorder %v2099, 0
    %v2101 = vsub.s32 0, %v2099
    %v2102 = vsel %vm2100, %v2101, %v2099
    %v2103 = vclz %v2102
    %v2104 = vsub.s32 %v2103, 2
    %vm2105 = vcmp.gt.s32.totalorder 0, %v2104
    %v2106 = vsel %vm2105, 0, %v2104
    %v2107 = vsub.s32 32, %v2106
    %v2108 = vshll.u32 %v2099, %v2106
    %v2109 = vshrl.u32 %v2091, %v2107
    %v2110 = vor.u32 %v2108, %v2109
    %v2111 = vsub.s32 4294967266, %v2106
    %v2112 = vadd.s32 %v2111, 127
    %v2113 = vshll.u32 %v2112, 23
    %v2114 = vor.u32 4788187, %v2113
    %v2115 = vand.u32 2147483647, %v2114
    %v2117 = vcvt.s32.f32 %v2110
    %v2118 = vmul.f32 %v2117, %v2115
    %v2119 = vxor.u32 %v2118, 2147483648
    %v2120 = vsel %vm1999, %v2119, %v2118
    %v2121 = vsub.s32 4, %v2097
    %v2122 = vsel %vm1999, %v2121, %v2097
    %v2123 = vsel %vm1998, %v1574, %v2120
    %v2124 = vsel %vm1998, 0, %v2122
    %v2125 = vmul.f32 %v2123, %v2123
    %v2126 = vmul.f32 %v2125, -0.001358992
    %v2127 = vadd.f32 %v2126, 0.041655596
    %v2128 = vmul.f32 %v2125, %v2127
    %v2129 = vadd.f32 %v2128, -0.4999988
    %v2130 = vmul.f32 %v2125, %v2129
    %v2131 = vadd.f32 1.0, %v2130
    %v2132 = vmul.f32 %v2123, %v2123
    %v2133 = vmul.f32 %v2132, -0.00019511016
    %v2134 = vadd.f32 %v2133, 0.008332121
    %v2135 = vmul.f32 %v2132, %v2134
    %v2136 = vadd.f32 %v2135, -0.16666654
    %v2137 = vmul.f32 %v2132, %v2136
    %v2138 = vadd.f32 %v2137, 1.0
    %v2139 = vmul.f32 %v2138, %v2123
    %vm2140 = vweird.f32 %v1574
    %v2141 = vadd.s32 %v2124, 3
    %v2142 = vand.u32 %v2141, 3
    %vm2143 = vcmp.lt.s32.totalorder %v2142, 2
    %vm2144 = vcmp.eq.s32.totalorder %v2142, 0
    %v2145 = vxor.u32 %v2139, 2147483648
    %v2146 = vsel %vm2144, %v2131, %v2145
    %vm2147 = vcmp.eq.s32.totalorder %v2142, 2
    %v2148 = vxor.u32 %v2131, 2147483648
    %v2149 = vsel %vm2147, %v2148, %v2139
    %v2150 = vsel %vm2143, %v2146, %v2149
    %v2151 = vsel %vm2140, nan, %v2150
    %s2152 = sld [smem:[#allocation2 + $0xc9]]
    %v2153 = vstv %s2152
    %v2154 = vmul.f32 %v2153, %v2151
    %v2155 = vadd.f32 %v1988, %v2154
    %s2156 = sld [smem:[#allocation2 + $0xca]]
    %v2157 = vstv %s2156
    %v2158 = vmul.f32 %v2157, %v2151
    %v2159 = vadd.f32 %v1992, %v2158
    %s2160 = sld [smem:[#allocation2 + $0xcb]]
    %v2161 = vstv %s2160
    %v2162 = vmul.f32 %v2161, %v2151
    %v2163 = vadd.f32 %v1996, %v2162
    %v2164 = vand.u32 2147483647, %v1576
    %vm2165 = vcmp.le.f32.partialorder %v2164, 0.7853982
    %vm2166 = vcmp.lt.s32.totalorder %v1576, 0
    %v2167 = vand.u32 %v1576, 2139095040
    %v2168 = vshrl.u32 %v2167, 23
    %v2169 = vsub.s32 %v2168, 127
    %v2170 = vand.u32 2147483647, %v1576
    %v2171 = vand.u32 %v2170, 8388607
    %v2172 = vor.u32 %v2171, 8388608
    %v2173 = vsub.s32 0, %v2172
    %v2174 = vadd.s32 %v2169, 1
    %vm2175 = vcmp.gt.s32.totalorder %v2174, 0
    %v2176 = vsel %vm2175, %v2174, 0
    %v2177 = vshrl.u32 %v2176, 5
    %v2178 = vand.u32 %v2176, 31
    %v2179 = vsub.s32 32, %v2178
    %v2180 = vshrl.u32 683565275, %v2179
    %v2181 = vshll.u32 683565275, %v2178
    %v2182 = vshrl.u32 2475754826, %v2179
    %v2183 = vor.u32 %v2181, %v2182
    %v2184 = vshll.u32 2475754826, %v2178
    %v2185 = vshrl.u32 2131351028, %v2179
    %v2186 = vor.u32 %v2184, %v2185
    %v2187 = vshll.u32 2131351028, %v2178
    %v2188 = vshrl.u32 2102212464, %v2179
    %v2189 = vor.u32 %v2187, %v2188
    %v2190 = vshll.u32 2102212464, %v2178
    %v2191 = vshrl.u32 920167782, %v2179
    %v2192 = vor.u32 %v2190, %v2191
    %v2193 = vshll.u32 920167782, %v2178
    %v2194 = vshrl.u32 1326507024, %v2179
    %v2195 = vor.u32 %v2193, %v2194
    %vm2196 = vcmp.lt.s32.totalorder %v2177, 1
    %vm2197 = vcmp.lt.s32.totalorder %v2177, 2
    %vm2198 = vcmp.lt.s32.totalorder %v2177, 3
    %vm2199 = vcmp.lt.s32.totalorder %v2177, 4
    %v2200 = vsel %vm2196, %v2180, %v2183
    %v2201 = vsel %vm2199, %v2189, 2102212464
    %v2202 = vsel %vm2198, %v2186, %v2201
    %v2203 = vsel %vm2197, %v2200, %v2202
    %v2204 = vsel %vm2196, %v2183, %v2186
    %v2205 = vsel %vm2199, %v2192, 920167782
    %v2206 = vsel %vm2198, %v2189, %v2205
    %v2207 = vsel %vm2197, %v2204, %v2206
    %v2208 = vsel %vm2196, %v2186, %v2189
    %v2209 = vsel %vm2199, %v2195, 1326507024
    %v2210 = vsel %vm2198, %v2192, %v2209
    %v2211 = vsel %vm2197, %v2208, %v2210
    %v2212 = vshll.u32 %v2172, 8
    %v2213 = vand.u32 %v2212, 65535
    %v2214 = vshrl.u32 %v2212, 16
    %v2215 = vand.u32 %v2211, 65535
    %v2216 = vshrl.u32 %v2211, 16
    %v2217 = vmul.u32 %v2213, %v2215
    %v2218 = vmul.u32 %v2213, %v2216
    %v2219 = vmul.u32 %v2214, %v2215
    %v2220 = vmul.u32 %v2214, %v2216
    %v2221 = vshll.u32 %v2218, 16
    %v2222 = vshrl.u32 %v2218, 16
    %v2223 = vshll.u32 %v2219, 16
    %v2224 = vshrl.u32 %v2219, 16
    %vm2225 = vc.u32 %v2217, %v2221
    %v2226 = vsel %vm2225, 1, 0
    %v2227 = vadd.s32 %v2217, %v2221
    %v2228 = vadd.s32 %v2220, %v2226
    %vm2229 = vc.u32 %v2227, %v2223
    %v2230 = vsel %vm2229, 1, 0
    %v2231 = vadd.s32 %v2227, %v2223
    %v2232 = vadd.s32 %v2228, %v2230
    %v2233 = vadd.s32 %v2232, %v2222
    %v2234 = vadd.s32 %v2233, %v2224
    %v2235 = vand.u32 %v2212, 65535
    %v2236 = vshrl.u32 %v2212, 16
    %v2237 = vand.u32 %v2207, 65535
    %v2238 = vshrl.u32 %v2207, 16
    %v2239 = vmul.u32 %v2235, %v2237
    %v2240 = vmul.u32 %v2235, %v2238
    %v2241 = vmul.u32 %v2236, %v2237
    %v2242 = vmul.u32 %v2236, %v2238
    %v2243 = vshll.u32 %v2240, 16
    %v2244 = vshrl.u32 %v2240, 16
    %v2245 = vshll.u32 %v2241, 16
    %v2246 = vshrl.u32 %v2241, 16
    %vm2247 = vc.u32 %v2239, %v2243
    %v2248 = vsel %vm2247, 1, 0
    %v2249 = vadd.s32 %v2239, %v2243
    %v2250 = vadd.s32 %v2242, %v2248
    %vm2251 = vc.u32 %v2249, %v2245
    %v2252 = vsel %vm2251, 1, 0
    %v2253 = vadd.s32 %v2249, %v2245
    %v2254 = vadd.s32 %v2250, %v2252
    %v2255 = vadd.s32 %v2254, %v2244
    %v2256 = vadd.s32 %v2255, %v2246
    %v2257 = vmul.u32 %v2212, %v2203
    %v2258 = vadd.s32 %v2234, %v2253
    %vm2259 = vc.u32 %v2234, %v2253
    %v2260 = vadd.s32 %v2256, 1
    %v2261 = vsel %vm2259, %v2260, %v2256
    %v2262 = vadd.s32 %v2257, %v2261
    %v2263 = vadd.s32 %v2262, 536870912
    %v2264 = vshrl.u32 %v2263, 30
    %v2265 = vshll.u32 %v2264, 30
    %v2266 = vsub.s32 %v2262, %v2265
    %vm2267 = vcmp.lt.s32.totalorder %v2266, 0
    %v2268 = vsub.s32 0, %v2266
    %v2269 = vsel %vm2267, %v2268, %v2266
    %v2270 = vclz %v2269
    %v2271 = vsub.s32 %v2270, 2
    %vm2272 = vcmp.gt.s32.totalorder 0, %v2271
    %v2273 = vsel %vm2272, 0, %v2271
    %v2274 = vsub.s32 32, %v2273
    %v2275 = vshll.u32 %v2266, %v2273
    %v2276 = vshrl.u32 %v2258, %v2274
    %v2277 = vor.u32 %v2275, %v2276
    %v2278 = vsub.s32 4294967266, %v2273
    %v2279 = vadd.s32 %v2278, 127
    %v2280 = vshll.u32 %v2279, 23
    %v2281 = vor.u32 4788187, %v2280
    %v2282 = vand.u32 2147483647, %v2281
    %v2284 = vcvt.s32.f32 %v2277
    %v2285 = vmul.f32 %v2284, %v2282
    %v2286 = vxor.u32 %v2285, 2147483648
    %v2287 = vsel %vm2166, %v2286, %v2285
    %v2288 = vsub.s32 4, %v2264
    %v2289 = vsel %vm2166, %v2288, %v2264
    %v2290 = vsel %vm2165, %v1576, %v2287
    %v2291 = vsel %vm2165, 0, %v2289
    %v2292 = vmul.f32 %v2290, %v2290
    %v2293 = vmul.f32 %v2292, -0.001358992
    %v2294 = vadd.f32 %v2293, 0.041655596
    %v2295 = vmul.f32 %v2292, %v2294
    %v2296 = vadd.f32 %v2295, -0.4999988
    %v2297 = vmul.f32 %v2292, %v2296
    %v2298 = vadd.f32 1.0, %v2297
    %v2299 = vmul.f32 %v2290, %v2290
    %v2300 = vmul.f32 %v2299, -0.00019511016
    %v2301 = vadd.f32 %v2300, 0.008332121
    %v2302 = vmul.f32 %v2299, %v2301
    %v2303 = vadd.f32 %v2302, -0.16666654
    %v2304 = vmul.f32 %v2299, %v2303
    %v2305 = vadd.f32 %v2304, 1.0
    %v2306 = vmul.f32 %v2305, %v2290
    %vm2307 = vweird.f32 %v1576
    %v2308 = vadd.s32 %v2291, 3
    %v2309 = vand.u32 %v2308, 3
    %vm2310 = vcmp.lt.s32.totalorder %v2309, 2
    %vm2311 = vcmp.eq.s32.totalorder %v2309, 0
    %v2312 = vxor.u32 %v2306, 2147483648
    %v2313 = vsel %vm2311, %v2298, %v2312
    %vm2314 = vcmp.eq.s32.totalorder %v2309, 2
    %v2315 = vxor.u32 %v2298, 2147483648
    %v2316 = vsel %vm2314, %v2315, %v2306
    %v2317 = vsel %vm2310, %v2313, %v2316
    %v2318 = vsel %vm2307, nan, %v2317
    %s2319 = sld [smem:[#allocation2 + $0xcc]]
    %v2320 = vstv %s2319
    %v2321 = vmul.f32 %v2320, %v2318
    %v2322 = vadd.f32 %v2155, %v2321
    %s2323 = sld [smem:[#allocation2 + $0xcd]]
    %v2324 = vstv %s2323
    %v2325 = vmul.f32 %v2324, %v2318
    %v2326 = vadd.f32 %v2159, %v2325
    %s2327 = sld [smem:[#allocation2 + $0xce]]
    %v2328 = vstv %s2327
    %v2329 = vmul.f32 %v2328, %v2318
    %v2330 = vadd.f32 %v2163, %v2329
    %s2331 = scalar_lea.vmem [#allocation7], 48
    %2332 = vst [vmem:[%s2331] sm:$0xff] %v2322
    %s2333 = scalar_lea.vmem [#allocation7], 56
    %2334 = vst [vmem:[%s2333] sm:$0xff] %v2326
    %s2335 = scalar_lea.vmem [#allocation7], 64
    %2336 = vst [vmem:[%s2335] sm:$0xff] %v2330
    %s2337 = scalar_lea.vmem [#allocation6], 72
    %v2338 = vld [vmem:[%s2337] sm:$0xff]
    %s2339 = scalar_lea.vmem [#allocation6], 80
    %v2340 = vld [vmem:[%s2339] sm:$0xff]
    %s2341 = scalar_lea.vmem [#allocation6], 88
    %v2342 = vld [vmem:[%s2341] sm:$0xff]
    %s2343 = sld [smem:[#allocation2 + $0xcf]]
    %v2344 = vstv %s2343
    %v2345 = vadd.f32 %v2338, %v2344
    %s2346 = sld [smem:[#allocation2 + $0xd0]]
    %v2347 = vstv %s2346
    %v2348 = vadd.f32 %v2340, %v2347
    %s2349 = sld [smem:[#allocation2 + $0xd1]]
    %v2350 = vstv %s2349
    %v2351 = vadd.f32 %v2342, %v2350
    %s2352 = sld [smem:[#allocation2 + $0xd2]]
    %v2353 = vstv %s2352
    %v2354 = vmul.f32 %v2353, %v2338
    %v2355 = vadd.f32 %v2345, %v2354
    %s2356 = sld [smem:[#allocation2 + $0xd3]]
    %v2357 = vstv %s2356
    %v2358 = vmul.f32 %v2357, %v2338
    %v2359 = vadd.f32 %v2348, %v2358
    %s2360 = sld [smem:[#allocation2 + $0xd4]]
    %v2361 = vstv %s2360
    %v2362 = vmul.f32 %v2361, %v2338
    %v2363 = vadd.f32 %v2351, %v2362
    %s2364 = sld [smem:[#allocation2 + $0xd5]]
    %v2365 = vstv %s2364
    %v2366 = vmul.f32 %v2365, %v2340
    %v2367 = vadd.f32 %v2355, %v2366
    %s2368 = sld [smem:[#allocation2 + $0xd6]]
    %v2369 = vstv %s2368
    %v2370 = vmul.f32 %v2369, %v2340
    %v2371 = vadd.f32 %v2359, %v2370
    %s2372 = sld [smem:[#allocation2 + $0xd7]]
    %v2373 = vstv %s2372
    %v2374 = vmul.f32 %v2373, %v2340
    %v2375 = vadd.f32 %v2363, %v2374
    %s2376 = sld [smem:[#allocation2 + $0xd8]]
    %v2377 = vstv %s2376
    %v2378 = vmul.f32 %v2377, %v2342
    %v2379 = vadd.f32 %v2367, %v2378
    %s2380 = sld [smem:[#allocation2 + $0xd9]]
    %v2381 = vstv %s2380
    %v2382 = vmul.f32 %v2381, %v2342
    %v2383 = vadd.f32 %v2371, %v2382
    %s2384 = sld [smem:[#allocation2 + $0xda]]
    %v2385 = vstv %s2384
    %v2386 = vmul.f32 %v2385, %v2342
    %v2387 = vadd.f32 %v2375, %v2386
    %v2388 = vmul.f32 %v2338, %v2338
    %s2389 = sld [smem:[#allocation2 + $0xdb]]
    %v2390 = vstv %s2389
    %v2391 = vmul.f32 %v2390, %v2388
    %v2392 = vadd.f32 %v2379, %v2391
    %s2393 = sld [smem:[#allocation2 + $0xdc]]
    %v2394 = vstv %s2393
    %v2395 = vmul.f32 %v2394, %v2388
    %v2396 = vadd.f32 %v2383, %v2395
    %s2397 = sld [smem:[#allocation2 + $0xdd]]
    %v2398 = vstv %s2397
    %v2399 = vmul.f32 %v2398, %v2388
    %v2400 = vadd.f32 %v2387, %v2399
    %v2401 = vmul.f32 %v2338, %v2340
    %s2402 = sld [smem:[#allocation2 + $0xde]]
    %v2403 = vstv %s2402
    %v2404 = vmul.f32 %v2403, %v2401
    %v2405 = vadd.f32 %v2392, %v2404
    %s2406 = sld [smem:[#allocation2 + $0xdf]]
    %v2407 = vstv %s2406
    %v2408 = vmul.f32 %v2407, %v2401
    %v2409 = vadd.f32 %v2396, %v2408
    %s2410 = sld [smem:[#allocation2 + $0xe0]]
    %v2411 = vstv %s2410
    %v2412 = vmul.f32 %v2411, %v2401
    %v2413 = vadd.f32 %v2400, %v2412
    %v2414 = vmul.f32 %v2338, %v2342
    %s2415 = sld [smem:[#allocation2 + $0xe1]]
    %v2416 = vstv %s2415
    %v2417 = vmul.f32 %v2416, %v2414
    %v2418 = vadd.f32 %v2405, %v2417
    %s2419 = sld [smem:[#allocation2 + $0xe2]]
    %v2420 = vstv %s2419
    %v2421 = vmul.f32 %v2420, %v2414
    %v2422 = vadd.f32 %v2409, %v2421
    %s2423 = sld [smem:[#allocation2 + $0xe3]]
    %v2424 = vstv %s2423
    %v2425 = vmul.f32 %v2424, %v2414
    %v2426 = vadd.f32 %v2413, %v2425
    %v2427 = vmul.f32 %v2340, %v2340
    %s2428 = sld [smem:[#allocation2 + $0xe4]]
    %v2429 = vstv %s2428
    %v2430 = vmul.f32 %v2429, %v2427
    %v2431 = vadd.f32 %v2418, %v2430
    %s2432 = sld [smem:[#allocation2 + $0xe5]]
    %v2433 = vstv %s2432
    %v2434 = vmul.f32 %v2433, %v2427
    %v2435 = vadd.f32 %v2422, %v2434
    %s2436 = sld [smem:[#allocation2 + $0xe6]]
    %v2437 = vstv %s2436
    %v2438 = vmul.f32 %v2437, %v2427
    %v2439 = vadd.f32 %v2426, %v2438
    %v2440 = vmul.f32 %v2340, %v2342
    %s2441 = sld [smem:[#allocation2 + $0xe7]]
    %v2442 = vstv %s2441
    %v2443 = vmul.f32 %v2442, %v2440
    %v2444 = vadd.f32 %v2431, %v2443
    %s2445 = sld [smem:[#allocation2 + $0xe8]]
    %v2446 = vstv %s2445
    %v2447 = vmul.f32 %v2446, %v2440
    %v2448 = vadd.f32 %v2435, %v2447
    %s2449 = sld [smem:[#allocation2 + $0xe9]]
    %v2450 = vstv %s2449
    %v2451 = vmul.f32 %v2450, %v2440
    %v2452 = vadd.f32 %v2439, %v2451
    %v2453 = vmul.f32 %v2342, %v2342
    %s2454 = sld [smem:[#allocation2 + $0xea]]
    %v2455 = vstv %s2454
    %v2456 = vmul.f32 %v2455, %v2453
    %v2457 = vadd.f32 %v2444, %v2456
    %s2458 = sld [smem:[#allocation2 + $0xeb]]
    %v2459 = vstv %s2458
    %v2460 = vmul.f32 %v2459, %v2453
    %v2461 = vadd.f32 %v2448, %v2460
    %s2462 = sld [smem:[#allocation2 + $0xec]]
    %v2463 = vstv %s2462
    %v2464 = vmul.f32 %v2463, %v2453
    %v2465 = vadd.f32 %v2452, %v2464
    %v2466 = vmul.f32 %v2388, %v2338
    %s2467 = sld [smem:[#allocation2 + $0xed]]
    %v2468 = vstv %s2467
    %v2469 = vmul.f32 %v2468, %v2466
    %v2470 = vadd.f32 %v2457, %v2469
    %s2471 = sld [smem:[#allocation2 + $0xee]]
    %v2472 = vstv %s2471
    %v2473 = vmul.f32 %v2472, %v2466
    %v2474 = vadd.f32 %v2461, %v2473
    %s2475 = sld [smem:[#allocation2 + $0xef]]
    %v2476 = vstv %s2475
    %v2477 = vmul.f32 %v2476, %v2466
    %v2478 = vadd.f32 %v2465, %v2477
    %v2479 = vmul.f32 %v2388, %v2340
    %s2480 = sld [smem:[#allocation2 + $0xf0]]
    %v2481 = vstv %s2480
    %v2482 = vmul.f32 %v2481, %v2479
    %v2483 = vadd.f32 %v2470, %v2482
    %s2484 = sld [smem:[#allocation2 + $0xf1]]
    %v2485 = vstv %s2484
    %v2486 = vmul.f32 %v2485, %v2479
    %v2487 = vadd.f32 %v2474, %v2486
    %s2488 = sld [smem:[#allocation2 + $0xf2]]
    %v2489 = vstv %s2488
    %v2490 = vmul.f32 %v2489, %v2479
    %v2491 = vadd.f32 %v2478, %v2490
    %v2492 = vmul.f32 %v2388, %v2342
    %s2493 = sld [smem:[#allocation2 + $0xf3]]
    %v2494 = vstv %s2493
    %v2495 = vmul.f32 %v2494, %v2492
    %v2496 = vadd.f32 %v2483, %v2495
    %s2497 = sld [smem:[#allocation2 + $0xf4]]
    %v2498 = vstv %s2497
    %v2499 = vmul.f32 %v2498, %v2492
    %v2500 = vadd.f32 %v2487, %v2499
    %s2501 = sld [smem:[#allocation2 + $0xf5]]
    %v2502 = vstv %s2501
    %v2503 = vmul.f32 %v2502, %v2492
    %v2504 = vadd.f32 %v2491, %v2503
    %v2505 = vmul.f32 %v2401, %v2340
    %s2506 = sld [smem:[#allocation2 + $0xf6]]
    %v2507 = vstv %s2506
    %v2508 = vmul.f32 %v2507, %v2505
    %v2509 = vadd.f32 %v2496, %v2508
    %s2510 = sld [smem:[#allocation2 + $0xf7]]
    %v2511 = vstv %s2510
    %v2512 = vmul.f32 %v2511, %v2505
    %v2513 = vadd.f32 %v2500, %v2512
    %s2514 = sld [smem:[#allocation2 + $0xf8]]
    %v2515 = vstv %s2514
    %v2516 = vmul.f32 %v2515, %v2505
    %v2517 = vadd.f32 %v2504, %v2516
    %v2518 = vmul.f32 %v2401, %v2342
    %s2519 = sld [smem:[#allocation2 + $0xf9]]
    %v2520 = vstv %s2519
    %v2521 = vmul.f32 %v2520, %v2518
    %v2522 = vadd.f32 %v2509, %v2521
    %s2523 = sld [smem:[#allocation2 + $0xfa]]
    %v2524 = vstv %s2523
    %v2525 = vmul.f32 %v2524, %v2518
    %v2526 = vadd.f32 %v2513, %v2525
    %s2527 = sld [smem:[#allocation2 + $0xfb]]
    %v2528 = vstv %s2527
    %v2529 = vmul.f32 %v2528, %v2518
    %v2530 = vadd.f32 %v2517, %v2529
    %v2531 = vmul.f32 %v2414, %v2342
    %s2532 = sld [smem:[#allocation2 + $0xfc]]
    %v2533 = vstv %s2532
    %v2534 = vmul.f32 %v2533, %v2531
    %v2535 = vadd.f32 %v2522, %v2534
    %s2536 = sld [smem:[#allocation2 + $0xfd]]
    %v2537 = vstv %s2536
    %v2538 = vmul.f32 %v2537, %v2531
    %v2539 = vadd.f32 %v2526, %v2538
    %s2540 = sld [smem:[#allocation2 + $0xfe]]
    %v2541 = vstv %s2540
    %v2542 = vmul.f32 %v2541, %v2531
    %v2543 = vadd.f32 %v2530, %v2542
    %v2544 = vmul.f32 %v2427, %v2340
    %s2545 = sld [smem:[#allocation2 + $0xff]]
    %v2546 = vstv %s2545
    %v2547 = vmul.f32 %v2546, %v2544
    %v2548 = vadd.f32 %v2535, %v2547
    %s2549 = sld [smem:[#allocation2 + $0x100]]
    %v2550 = vstv %s2549
    %v2551 = vmul.f32 %v2550, %v2544
    %v2552 = vadd.f32 %v2539, %v2551
    %s2553 = sld [smem:[#allocation2 + $0x101]]
    %v2554 = vstv %s2553
    %v2555 = vmul.f32 %v2554, %v2544
    %v2556 = vadd.f32 %v2543, %v2555
    %v2557 = vmul.f32 %v2427, %v2342
    %s2558 = sld [smem:[#allocation2 + $0x102]]
    %v2559 = vstv %s2558
    %v2560 = vmul.f32 %v2559, %v2557
    %v2561 = vadd.f32 %v2548, %v2560
    %s2562 = sld [smem:[#allocation2 + $0x103]]
    %v2563 = vstv %s2562
    %v2564 = vmul.f32 %v2563, %v2557
    %v2565 = vadd.f32 %v2552, %v2564
    %s2566 = sld [smem:[#allocation2 + $0x104]]
    %v2567 = vstv %s2566
    %v2568 = vmul.f32 %v2567, %v2557
    %v2569 = vadd.f32 %v2556, %v2568
    %v2570 = vmul.f32 %v2440, %v2342
    %s2571 = sld [smem:[#allocation2 + $0x105]]
    %v2572 = vstv %s2571
    %v2573 = vmul.f32 %v2572, %v2570
    %v2574 = vadd.f32 %v2561, %v2573
    %s2575 = sld [smem:[#allocation2 + $0x106]]
    %v2576 = vstv %s2575
    %v2577 = vmul.f32 %v2576, %v2570
    %v2578 = vadd.f32 %v2565, %v2577
    %s2579 = sld [smem:[#allocation2 + $0x107]]
    %v2580 = vstv %s2579
    %v2581 = vmul.f32 %v2580, %v2570
    %v2582 = vadd.f32 %v2569, %v2581
    %v2583 = vmul.f32 %v2453, %v2342
    %s2584 = sld [smem:[#allocation2 + $0x108]]
    %v2585 = vstv %s2584
    %v2586 = vmul.f32 %v2585, %v2583
    %v2587 = vadd.f32 %v2574, %v2586
    %s2588 = sld [smem:[#allocation2 + $0x109]]
    %v2589 = vstv %s2588
    %v2590 = vmul.f32 %v2589, %v2583
    %v2591 = vadd.f32 %v2578, %v2590
    %s2592 = sld [smem:[#allocation2 + $0x10a]]
    %v2593 = vstv %s2592
    %v2594 = vmul.f32 %v2593, %v2583
    %v2595 = vadd.f32 %v2582, %v2594
    %v2596 = vand.u32 2147483647, %v2338
    %vm2597 = vcmp.le.f32.partialorder %v2596, 0.7853982
    %vm2598 = vcmp.lt.s32.totalorder %v2338, 0
    %v2599 = vand.u32 %v2338, 2139095040
    %v2600 = vshrl.u32 %v2599, 23
    %v2601 = vsub.s32 %v2600, 127
    %v2602 = vand.u32 2147483647, %v2338
    %v2603 = vand.u32 %v2602, 8388607
    %v2604 = vor.u32 %v2603, 8388608
    %v2605 = vsub.s32 0, %v2604
    %v2606 = vadd.s32 %v2601, 1
    %vm2607 = vcmp.gt.s32.totalorder %v2606, 0
    %v2608 = vsel %vm2607, %v2606, 0
    %v2609 = vshrl.u32 %v2608, 5
    %v2610 = vand.u32 %v2608, 31
    %v2611 = vsub.s32 32, %v2610
    %v2612 = vshrl.u32 683565275, %v2611
    %v2613 = vshll.u32 683565275, %v2610
    %v2614 = vshrl.u32 2475754826, %v2611
    %v2615 = vor.u32 %v2613, %v2614
    %v2616 = vshll.u32 2475754826, %v2610
    %v2617 = vshrl.u32 2131351028, %v2611
    %v2618 = vor.u32 %v2616, %v2617
    %v2619 = vshll.u32 2131351028, %v2610
    %v2620 = vshrl.u32 2102212464, %v2611
    %v2621 = vor.u32 %v2619, %v2620
    %v2622 = vshll.u32 2102212464, %v2610
    %v2623 = vshrl.u32 920167782, %v2611
    %v2624 = vor.u32 %v2622, %v2623
    %v2625 = vshll.u32 920167782, %v2610
    %v2626 = vshrl.u32 1326507024, %v2611
    %v2627 = vor.u32 %v2625, %v2626
    %vm2628 = vcmp.lt.s32.totalorder %v2609, 1
    %vm2629 = vcmp.lt.s32.totalorder %v2609, 2
    %vm2630 = vcmp.lt.s32.totalorder %v2609, 3
    %vm2631 = vcmp.lt.s32.totalorder %v2609, 4
    %v2632 = vsel %vm2628, %v2612, %v2615
    %v2633 = vsel %vm2631, %v2621, 2102212464
    %v2634 = vsel %vm2630, %v2618, %v2633
    %v2635 = vsel %vm2629, %v2632, %v2634
    %v2636 = vsel %vm2628, %v2615, %v2618
    %v2637 = vsel %vm2631, %v2624, 920167782
    %v2638 = vsel %vm2630, %v2621, %v2637
    %v2639 = vsel %vm2629, %v2636, %v2638
    %v2640 = vsel %vm2628, %v2618, %v2621
    %v2641 = vsel %vm2631, %v2627, 1326507024
    %v2642 = vsel %vm2630, %v2624, %v2641
    %v2643 = vsel %vm2629, %v2640, %v2642
    %v2644 = vshll.u32 %v2604, 8
    %v2645 = vand.u32 %v2644, 65535
    %v2646 = vshrl.u32 %v2644, 16
    %v2647 = vand.u32 %v2643, 65535
    %v2648 = vshrl.u32 %v2643, 16
    %v2649 = vmul.u32 %v2645, %v2647
    %v2650 = vmul.u32 %v2645, %v2648
    %v2651 = vmul.u32 %v2646, %v2647
    %v2652 = vmul.u32 %v2646, %v2648
    %v2653 = vshll.u32 %v2650, 16
    %v2654 = vshrl.u32 %v2650, 16
    %v2655 = vshll.u32 %v2651, 16
    %v2656 = vshrl.u32 %v2651, 16
    %vm2657 = vc.u32 %v2649, %v2653
    %v2658 = vsel %vm2657, 1, 0
    %v2659 = vadd.s32 %v2649, %v2653
    %v2660 = vadd.s32 %v2652, %v2658
    %vm2661 = vc.u32 %v2659, %v2655
    %v2662 = vsel %vm2661, 1, 0
    %v2663 = vadd.s32 %v2659, %v2655
    %v2664 = vadd.s32 %v2660, %v2662
    %v2665 = vadd.s32 %v2664, %v2654
    %v2666 = vadd.s32 %v2665, %v2656
    %v2667 = vand.u32 %v2644, 65535
    %v2668 = vshrl.u32 %v2644, 16
    %v2669 = vand.u32 %v2639, 65535
    %v2670 = vshrl.u32 %v2639, 16
    %v2671 = vmul.u32 %v2667, %v2669
    %v2672 = vmul.u32 %v2667, %v2670
    %v2673 = vmul.u32 %v2668, %v2669
    %v2674 = vmul.u32 %v2668, %v2670
    %v2675 = vshll.u32 %v2672, 16
    %v2676 = vshrl.u32 %v2672, 16
    %v2677 = vshll.u32 %v2673, 16
    %v2678 = vshrl.u32 %v2673, 16
    %vm2679 = vc.u32 %v2671, %v2675
    %v2680 = vsel %vm2679, 1, 0
    %v2681 = vadd.s32 %v2671, %v2675
    %v2682 = vadd.s32 %v2674, %v2680
    %vm2683 = vc.u32 %v2681, %v2677
    %v2684 = vsel %vm2683, 1, 0
    %v2685 = vadd.s32 %v2681, %v2677
    %v2686 = vadd.s32 %v2682, %v2684
    %v2687 = vadd.s32 %v2686, %v2676
    %v2688 = vadd.s32 %v2687, %v2678
    %v2689 = vmul.u32 %v2644, %v2635
    %v2690 = vadd.s32 %v2666, %v2685
    %vm2691 = vc.u32 %v2666, %v2685
    %v2692 = vadd.s32 %v2688, 1
    %v2693 = vsel %vm2691, %v2692, %v2688
    %v2694 = vadd.s32 %v2689, %v2693
    %v2695 = vadd.s32 %v2694, 536870912
    %v2696 = vshrl.u32 %v2695, 30
    %v2697 = vshll.u32 %v2696, 30
    %v2698 = vsub.s32 %v2694, %v2697
    %vm2699 = vcmp.lt.s32.totalorder %v2698, 0
    %v2700 = vsub.s32 0, %v2698
    %v2701 = vsel %vm2699, %v2700, %v2698
    %v2702 = vclz %v2701
    %v2703 = vsub.s32 %v2702, 2
    %vm2704 = vcmp.gt.s32.totalorder 0, %v2703
    %v2705 = vsel %vm2704, 0, %v2703
    %v2706 = vsub.s32 32, %v2705
    %v2707 = vshll.u32 %v2698, %v2705
    %v2708 = vshrl.u32 %v2690, %v2706
    %v2709 = vor.u32 %v2707, %v2708
    %v2710 = vsub.s32 4294967266, %v2705
    %v2711 = vadd.s32 %v2710, 127
    %v2712 = vshll.u32 %v2711, 23
    %v2713 = vor.u32 4788187, %v2712
    %v2714 = vand.u32 2147483647, %v2713
    %v2716 = vcvt.s32.f32 %v2709
    %v2717 = vmul.f32 %v2716, %v2714
    %v2718 = vxor.u32 %v2717, 2147483648
    %v2719 = vsel %vm2598, %v2718, %v2717
    %v2720 = vsub.s32 4, %v2696
    %v2721 = vsel %vm2598, %v2720, %v2696
    %v2722 = vsel %vm2597, %v2338, %v2719
    %v2723 = vsel %vm2597, 0, %v2721
    %v2724 = vmul.f32 %v2722, %v2722
    %v2725 = vmul.f32 %v2724, -0.001358992
    %v2726 = vadd.f32 %v2725, 0.041655596
    %v2727 = vmul.f32 %v2724, %v2726
    %v2728 = vadd.f32 %v2727, -0.4999988
    %v2729 = vmul.f32 %v2724, %v2728
    %v2730 = vadd.f32 1.0, %v2729
    %v2731 = vmul.f32 %v2722, %v2722
    %v2732 = vmul.f32 %v2731, -0.00019511016
    %v2733 = vadd.f32 %v2732, 0.008332121
    %v2734 = vmul.f32 %v2731, %v2733
    %v2735 = vadd.f32 %v2734, -0.16666654
    %v2736 = vmul.f32 %v2731, %v2735
    %v2737 = vadd.f32 %v2736, 1.0
    %v2738 = vmul.f32 %v2737, %v2722
    %vm2739 = vweird.f32 %v2338
    %v2740 = vadd.s32 %v2723, 3
    %v2741 = vand.u32 %v2740, 3
    %vm2742 = vcmp.lt.s32.totalorder %v2741, 2
    %vm2743 = vcmp.eq.s32.totalorder %v2741, 0
    %v2744 = vxor.u32 %v2738, 2147483648
    %v2745 = vsel %vm2743, %v2730, %v2744
    %vm2746 = vcmp.eq.s32.totalorder %v2741, 2
    %v2747 = vxor.u32 %v2730, 2147483648
    %v2748 = vsel %vm2746, %v2747, %v2738
    %v2749 = vsel %vm2742, %v2745, %v2748
    %v2750 = vsel %vm2739, nan, %v2749
    %s2751 = sld [smem:[#allocation2 + $0x10b]]
    %v2752 = vstv %s2751
    %v2753 = vmul.f32 %v2752, %v2750
    %v2754 = vadd.f32 %v2587, %v2753
    %s2755 = sld [smem:[#allocation2 + $0x10c]]
    %v2756 = vstv %s2755
    %v2757 = vmul.f32 %v2756, %v2750
    %v2758 = vadd.f32 %v2591, %v2757
    %s2759 = sld [smem:[#allocation2 + $0x10d]]
    %v2760 = vstv %s2759
    %v2761 = vmul.f32 %v2760, %v2750
    %v2762 = vadd.f32 %v2595, %v2761
    %v2763 = vand.u32 2147483647, %v2340
    %vm2764 = vcmp.le.f32.partialorder %v2763, 0.7853982
    %vm2765 = vcmp.lt.s32.totalorder %v2340, 0
    %v2766 = vand.u32 %v2340, 2139095040
    %v2767 = vshrl.u32 %v2766, 23
    %v2768 = vsub.s32 %v2767, 127
    %v2769 = vand.u32 2147483647, %v2340
    %v2770 = vand.u32 %v2769, 8388607
    %v2771 = vor.u32 %v2770, 8388608
    %v2772 = vsub.s32 0, %v2771
    %v2773 = vadd.s32 %v2768, 1
    %vm2774 = vcmp.gt.s32.totalorder %v2773, 0
    %v2775 = vsel %vm2774, %v2773, 0
    %v2776 = vshrl.u32 %v2775, 5
    %v2777 = vand.u32 %v2775, 31
    %v2778 = vsub.s32 32, %v2777
    %v2779 = vshrl.u32 683565275, %v2778
    %v2780 = vshll.u32 683565275, %v2777
    %v2781 = vshrl.u32 2475754826, %v2778
    %v2782 = vor.u32 %v2780, %v2781
    %v2783 = vshll.u32 2475754826, %v2777
    %v2784 = vshrl.u32 2131351028, %v2778
    %v2785 = vor.u32 %v2783, %v2784
    %v2786 = vshll.u32 2131351028, %v2777
    %v2787 = vshrl.u32 2102212464, %v2778
    %v2788 = vor.u32 %v2786, %v2787
    %v2789 = vshll.u32 2102212464, %v2777
    %v2790 = vshrl.u32 920167782, %v2778
    %v2791 = vor.u32 %v2789, %v2790
    %v2792 = vshll.u32 920167782, %v2777
    %v2793 = vshrl.u32 1326507024, %v2778
    %v2794 = vor.u32 %v2792, %v2793
    %vm2795 = vcmp.lt.s32.totalorder %v2776, 1
    %vm2796 = vcmp.lt.s32.totalorder %v2776, 2
    %vm2797 = vcmp.lt.s32.totalorder %v2776, 3
    %vm2798 = vcmp.lt.s32.totalorder %v2776, 4
    %v2799 = vsel %vm2795, %v2779, %v2782
    %v2800 = vsel %vm2798, %v2788, 2102212464
    %v2801 = vsel %vm2797, %v2785, %v2800
    %v2802 = vsel %vm2796, %v2799, %v2801
    %v2803 = vsel %vm2795, %v2782, %v2785
    %v2804 = vsel %vm2798, %v2791, 920167782
    %v2805 = vsel %vm2797, %v2788, %v2804
    %v2806 = vsel %vm2796, %v2803, %v2805
    %v2807 = vsel %vm2795, %v2785, %v2788
    %v2808 = vsel %vm2798, %v2794, 1326507024
    %v2809 = vsel %vm2797, %v2791, %v2808
    %v2810 = vsel %vm2796, %v2807, %v2809
    %v2811 = vshll.u32 %v2771, 8
    %v2812 = vand.u32 %v2811, 65535
    %v2813 = vshrl.u32 %v2811, 16
    %v2814 = vand.u32 %v2810, 65535
    %v2815 = vshrl.u32 %v2810, 16
    %v2816 = vmul.u32 %v2812, %v2814
    %v2817 = vmul.u32 %v2812, %v2815
    %v2818 = vmul.u32 %v2813, %v2814
    %v2819 = vmul.u32 %v2813, %v2815
    %v2820 = vshll.u32 %v2817, 16
    %v2821 = vshrl.u32 %v2817, 16
    %v2822 = vshll.u32 %v2818, 16
    %v2823 = vshrl.u32 %v2818, 16
    %vm2824 = vc.u32 %v2816, %v2820
    %v2825 = vsel %vm2824, 1, 0
    %v2826 = vadd.s32 %v2816, %v2820
    %v2827 = vadd.s32 %v2819, %v2825
    %vm2828 = vc.u32 %v2826, %v2822
    %v2829 = vsel %vm2828, 1, 0
    %v2830 = vadd.s32 %v2826, %v2822
    %v2831 = vadd.s32 %v2827, %v2829
    %v2832 = vadd.s32 %v2831, %v2821
    %v2833 = vadd.s32 %v2832, %v2823
    %v2834 = vand.u32 %v2811, 65535
    %v2835 = vshrl.u32 %v2811, 16
    %v2836 = vand.u32 %v2806, 65535
    %v2837 = vshrl.u32 %v2806, 16
    %v2838 = vmul.u32 %v2834, %v2836
    %v2839 = vmul.u32 %v2834, %v2837
    %v2840 = vmul.u32 %v2835, %v2836
    %v2841 = vmul.u32 %v2835, %v2837
    %v2842 = vshll.u32 %v2839, 16
    %v2843 = vshrl.u32 %v2839, 16
    %v2844 = vshll.u32 %v2840, 16
    %v2845 = vshrl.u32 %v2840, 16
    %vm2846 = vc.u32 %v2838, %v2842
    %v2847 = vsel %vm2846, 1, 0
    %v2848 = vadd.s32 %v2838, %v2842
    %v2849 = vadd.s32 %v2841, %v2847
    %vm2850 = vc.u32 %v2848, %v2844
    %v2851 = vsel %vm2850, 1, 0
    %v2852 = vadd.s32 %v2848, %v2844
    %v2853 = vadd.s32 %v2849, %v2851
    %v2854 = vadd.s32 %v2853, %v2843
    %v2855 = vadd.s32 %v2854, %v2845
    %v2856 = vmul.u32 %v2811, %v2802
    %v2857 = vadd.s32 %v2833, %v2852
    %vm2858 = vc.u32 %v2833, %v2852
    %v2859 = vadd.s32 %v2855, 1
    %v2860 = vsel %vm2858, %v2859, %v2855
    %v2861 = vadd.s32 %v2856, %v2860
    %v2862 = vadd.s32 %v2861, 536870912
    %v2863 = vshrl.u32 %v2862, 30
    %v2864 = vshll.u32 %v2863, 30
    %v2865 = vsub.s32 %v2861, %v2864
    %vm2866 = vcmp.lt.s32.totalorder %v2865, 0
    %v2867 = vsub.s32 0, %v2865
    %v2868 = vsel %vm2866, %v2867, %v2865
    %v2869 = vclz %v2868
    %v2870 = vsub.s32 %v2869, 2
    %vm2871 = vcmp.gt.s32.totalorder 0, %v2870
    %v2872 = vsel %vm2871, 0, %v2870
    %v2873 = vsub.s32 32, %v2872
    %v2874 = vshll.u32 %v2865, %v2872
    %v2875 = vshrl.u32 %v2857, %v2873
    %v2876 = vor.u32 %v2874, %v2875
    %v2877 = vsub.s32 4294967266, %v2872
    %v2878 = vadd.s32 %v2877, 127
    %v2879 = vshll.u32 %v2878, 23
    %v2880 = vor.u32 4788187, %v2879
    %v2881 = vand.u32 2147483647, %v2880
    %v2883 = vcvt.s32.f32 %v2876
    %v2884 = vmul.f32 %v2883, %v2881
    %v2885 = vxor.u32 %v2884, 2147483648
    %v2886 = vsel %vm2765, %v2885, %v2884
    %v2887 = vsub.s32 4, %v2863
    %v2888 = vsel %vm2765, %v2887, %v2863
    %v2889 = vsel %vm2764, %v2340, %v2886
    %v2890 = vsel %vm2764, 0, %v2888
    %v2891 = vmul.f32 %v2889, %v2889
    %v2892 = vmul.f32 %v2891, -0.001358992
    %v2893 = vadd.f32 %v2892, 0.041655596
    %v2894 = vmul.f32 %v2891, %v2893
    %v2895 = vadd.f32 %v2894, -0.4999988
    %v2896 = vmul.f32 %v2891, %v2895
    %v2897 = vadd.f32 1.0, %v2896
    %v2898 = vmul.f32 %v2889, %v2889
    %v2899 = vmul.f32 %v2898, -0.00019511016
    %v2900 = vadd.f32 %v2899, 0.008332121
    %v2901 = vmul.f32 %v2898, %v2900
    %v2902 = vadd.f32 %v2901, -0.16666654
    %v2903 = vmul.f32 %v2898, %v2902
    %v2904 = vadd.f32 %v2903, 1.0
    %v2905 = vmul.f32 %v2904, %v2889
    %vm2906 = vweird.f32 %v2340
    %v2907 = vadd.s32 %v2890, 3
    %v2908 = vand.u32 %v2907, 3
    %vm2909 = vcmp.lt.s32.totalorder %v2908, 2
    %vm2910 = vcmp.eq.s32.totalorder %v2908, 0
    %v2911 = vxor.u32 %v2905, 2147483648
    %v2912 = vsel %vm2910, %v2897, %v2911
    %vm2913 = vcmp.eq.s32.totalorder %v2908, 2
    %v2914 = vxor.u32 %v2897, 2147483648
    %v2915 = vsel %vm2913, %v2914, %v2905
    %v2916 = vsel %vm2909, %v2912, %v2915
    %v2917 = vsel %vm2906, nan, %v2916
    %s2918 = sld [smem:[#allocation2 + $0x10e]]
    %v2919 = vstv %s2918
    %v2920 = vmul.f32 %v2919, %v2917
    %v2921 = vadd.f32 %v2754, %v2920
    %s2922 = sld [smem:[#allocation2 + $0x10f]]
    %v2923 = vstv %s2922
    %v2924 = vmul.f32 %v2923, %v2917
    %v2925 = vadd.f32 %v2758, %v2924
    %s2926 = sld [smem:[#allocation2 + $0x110]]
    %v2927 = vstv %s2926
    %v2928 = vmul.f32 %v2927, %v2917
    %v2929 = vadd.f32 %v2762, %v2928
    %v2930 = vand.u32 2147483647, %v2342
    %vm2931 = vcmp.le.f32.partialorder %v2930, 0.7853982
    %vm2932 = vcmp.lt.s32.totalorder %v2342, 0
    %v2933 = vand.u32 %v2342, 2139095040
    %v2934 = vshrl.u32 %v2933, 23
    %v2935 = vsub.s32 %v2934, 127
    %v2936 = vand.u32 2147483647, %v2342
    %v2937 = vand.u32 %v2936, 8388607
    %v2938 = vor.u32 %v2937, 8388608
    %v2939 = vsub.s32 0, %v2938
    %v2940 = vadd.s32 %v2935, 1
    %vm2941 = vcmp.gt.s32.totalorder %v2940, 0
    %v2942 = vsel %vm2941, %v2940, 0
    %v2943 = vshrl.u32 %v2942, 5
    %v2944 = vand.u32 %v2942, 31
    %v2945 = vsub.s32 32, %v2944
    %v2946 = vshrl.u32 683565275, %v2945
    %v2947 = vshll.u32 683565275, %v2944
    %v2948 = vshrl.u32 2475754826, %v2945
    %v2949 = vor.u32 %v2947, %v2948
    %v2950 = vshll.u32 2475754826, %v2944
    %v2951 = vshrl.u32 2131351028, %v2945
    %v2952 = vor.u32 %v2950, %v2951
    %v2953 = vshll.u32 2131351028, %v2944
    %v2954 = vshrl.u32 2102212464, %v2945
    %v2955 = vor.u32 %v2953, %v2954
    %v2956 = vshll.u32 2102212464, %v2944
    %v2957 = vshrl.u32 920167782, %v2945
    %v2958 = vor.u32 %v2956, %v2957
    %v2959 = vshll.u32 920167782, %v2944
    %v2960 = vshrl.u32 1326507024, %v2945
    %v2961 = vor.u32 %v2959, %v2960
    %vm2962 = vcmp.lt.s32.totalorder %v2943, 1
    %vm2963 = vcmp.lt.s32.totalorder %v2943, 2
    %vm2964 = vcmp.lt.s32.totalorder %v2943, 3
    %vm2965 = vcmp.lt.s32.totalorder %v2943, 4
    %v2966 = vsel %vm2962, %v2946, %v2949
    %v2967 = vsel %vm2965, %v2955, 2102212464
    %v2968 = vsel %vm2964, %v2952, %v2967
    %v2969 = vsel %vm2963, %v2966, %v2968
    %v2970 = vsel %vm2962, %v2949, %v2952
    %v2971 = vsel %vm2965, %v2958, 920167782
    %v2972 = vsel %vm2964, %v2955, %v2971
    %v2973 = vsel %vm2963, %v2970, %v2972
    %v2974 = vsel %vm2962, %v2952, %v2955
    %v2975 = vsel %vm2965, %v2961, 1326507024
    %v2976 = vsel %vm2964, %v2958, %v2975
    %v2977 = vsel %vm2963, %v2974, %v2976
    %v2978 = vshll.u32 %v2938, 8
    %v2979 = vand.u32 %v2978, 65535
    %v2980 = vshrl.u32 %v2978, 16
    %v2981 = vand.u32 %v2977, 65535
    %v2982 = vshrl.u32 %v2977, 16
    %v2983 = vmul.u32 %v2979, %v2981
    %v2984 = vmul.u32 %v2979, %v2982
    %v2985 = vmul.u32 %v2980, %v2981
    %v2986 = vmul.u32 %v2980, %v2982
    %v2987 = vshll.u32 %v2984, 16
    %v2988 = vshrl.u32 %v2984, 16
    %v2989 = vshll.u32 %v2985, 16
    %v2990 = vshrl.u32 %v2985, 16
    %vm2991 = vc.u32 %v2983, %v2987
    %v2992 = vsel %vm2991, 1, 0
    %v2993 = vadd.s32 %v2983, %v2987
    %v2994 = vadd.s32 %v2986, %v2992
    %vm2995 = vc.u32 %v2993, %v2989
    %v2996 = vsel %vm2995, 1, 0
    %v2997 = vadd.s32 %v2993, %v2989
    %v2998 = vadd.s32 %v2994, %v2996
    %v2999 = vadd.s32 %v2998, %v2988
    %v3000 = vadd.s32 %v2999, %v2990
    %v3001 = vand.u32 %v2978, 65535
    %v3002 = vshrl.u32 %v2978, 16
    %v3003 = vand.u32 %v2973, 65535
    %v3004 = vshrl.u32 %v2973, 16
    %v3005 = vmul.u32 %v3001, %v3003
    %v3006 = vmul.u32 %v3001, %v3004
    %v3007 = vmul.u32 %v3002, %v3003
    %v3008 = vmul.u32 %v3002, %v3004
    %v3009 = vshll.u32 %v3006, 16
    %v3010 = vshrl.u32 %v3006, 16
    %v3011 = vshll.u32 %v3007, 16
    %v3012 = vshrl.u32 %v3007, 16
    %vm3013 = vc.u32 %v3005, %v3009
    %v3014 = vsel %vm3013, 1, 0
    %v3015 = vadd.s32 %v3005, %v3009
    %v3016 = vadd.s32 %v3008, %v3014
    %vm3017 = vc.u32 %v3015, %v3011
    %v3018 = vsel %vm3017, 1, 0
    %v3019 = vadd.s32 %v3015, %v3011
    %v3020 = vadd.s32 %v3016, %v3018
    %v3021 = vadd.s32 %v3020, %v3010
    %v3022 = vadd.s32 %v3021, %v3012
    %v3023 = vmul.u32 %v2978, %v2969
    %v3024 = vadd.s32 %v3000, %v3019
    %vm3025 = vc.u32 %v3000, %v3019
    %v3026 = vadd.s32 %v3022, 1
    %v3027 = vsel %vm3025, %v3026, %v3022
    %v3028 = vadd.s32 %v3023, %v3027
    %v3029 = vadd.s32 %v3028, 536870912
    %v3030 = vshrl.u32 %v3029, 30
    %v3031 = vshll.u32 %v3030, 30
    %v3032 = vsub.s32 %v3028, %v3031
    %vm3033 = vcmp.lt.s32.totalorder %v3032, 0
    %v3034 = vsub.s32 0, %v3032
    %v3035 = vsel %vm3033, %v3034, %v3032
    %v3036 = vclz %v3035
    %v3037 = vsub.s32 %v3036, 2
    %vm3038 = vcmp.gt.s32.totalorder 0, %v3037
    %v3039 = vsel %vm3038, 0, %v3037
    %v3040 = vsub.s32 32, %v3039
    %v3041 = vshll.u32 %v3032, %v3039
    %v3042 = vshrl.u32 %v3024, %v3040
    %v3043 = vor.u32 %v3041, %v3042
    %v3044 = vsub.s32 4294967266, %v3039
    %v3045 = vadd.s32 %v3044, 127
    %v3046 = vshll.u32 %v3045, 23
    %v3047 = vor.u32 4788187, %v3046
    %v3048 = vand.u32 2147483647, %v3047
    %v3050 = vcvt.s32.f32 %v3043
    %v3051 = vmul.f32 %v3050, %v3048
    %v3052 = vxor.u32 %v3051, 2147483648
    %v3053 = vsel %vm2932, %v3052, %v3051
    %v3054 = vsub.s32 4, %v3030
    %v3055 = vsel %vm2932, %v3054, %v3030
    %v3056 = vsel %vm2931, %v2342, %v3053
    %v3057 = vsel %vm2931, 0, %v3055
    %v3058 = vmul.f32 %v3056, %v3056
    %v3059 = vmul.f32 %v3058, -0.001358992
    %v3060 = vadd.f32 %v3059, 0.041655596
    %v3061 = vmul.f32 %v3058, %v3060
    %v3062 = vadd.f32 %v3061, -0.4999988
    %v3063 = vmul.f32 %v3058, %v3062
    %v3064 = vadd.f32 1.0, %v3063
    %v3065 = vmul.f32 %v3056, %v3056
    %v3066 = vmul.f32 %v3065, -0.00019511016
    %v3067 = vadd.f32 %v3066, 0.008332121
    %v3068 = vmul.f32 %v3065, %v3067
    %v3069 = vadd.f32 %v3068, -0.16666654
    %v3070 = vmul.f32 %v3065, %v3069
    %v3071 = vadd.f32 %v3070, 1.0
    %v3072 = vmul.f32 %v3071, %v3056
    %vm3073 = vweird.f32 %v2342
    %v3074 = vadd.s32 %v3057, 3
    %v3075 = vand.u32 %v3074, 3
    %vm3076 = vcmp.lt.s32.totalorder %v3075, 2
    %vm3077 = vcmp.eq.s32.totalorder %v3075, 0
    %v3078 = vxor.u32 %v3072, 2147483648
    %v3079 = vsel %vm3077, %v3064, %v3078
    %vm3080 = vcmp.eq.s32.totalorder %v3075, 2
    %v3081 = vxor.u32 %v3064, 2147483648
    %v3082 = vsel %vm3080, %v3081, %v3072
    %v3083 = vsel %vm3076, %v3079, %v3082
    %v3084 = vsel %vm3073, nan, %v3083
    %s3085 = sld [smem:[#allocation2 + $0x111]]
    %v3086 = vstv %s3085
    %v3087 = vmul.f32 %v3086, %v3084
    %v3088 = vadd.f32 %v2921, %v3087
    %s3089 = sld [smem:[#allocation2 + $0x112]]
    %v3090 = vstv %s3089
    %v3091 = vmul.f32 %v3090, %v3084
    %v3092 = vadd.f32 %v2925, %v3091
    %s3093 = sld [smem:[#allocation2 + $0x113]]
    %v3094 = vstv %s3093
    %v3095 = vmul.f32 %v3094, %v3084
    %v3096 = vadd.f32 %v2929, %v3095
    %s3097 = scalar_lea.vmem [#allocation7], 72
    %3098 = vst [vmem:[%s3097] sm:$0xff] %v3088
    %s3099 = scalar_lea.vmem [#allocation7], 80
    %3100 = vst [vmem:[%s3099] sm:$0xff] %v3092
    %s3101 = scalar_lea.vmem [#allocation7], 88
    %3102 = vst [vmem:[%s3101] sm:$0xff] %v3096
    // Predicated region
    $region18: #{tpu_custom_call.1} parent=1 // pred_check
      _
    $region19: #{tpu_custom_call.1} parent=1 // pred_check_branch
      %3104 = sbr.rel (0) target = $region21
    $region20: #{tpu_custom_call.1} parent=1 // pred_region
      %3106 = vsyncadd [#allocation4], 0
      %s3107 = sshll.u32 [#allocation7], 4
      %s3108 = int_to_ptr.vmem [resolvable:$true] %s3107
      %s3109 = sshll.u32 %s2, 4
      %s3110 = int_to_ptr.hbm [resolvable:$true] %s3109
      %3115 = dma.vmem_to_hbm [thread:$0]  %s3108, 1536, %s3110, [#allocation4], 128, 128, 8
    $region21: #{tpu_custom_call.1} parent=1 // pred_fallthru
      _
    // Predicated region
    $region22: #{tpu_custom_call.1} parent=1 // pred_check
      _
    $region23: #{tpu_custom_call.1} parent=1 // pred_check_branch
      %3117 = sbr.rel (0) target = $region25
    $region24: #{tpu_custom_call.1} parent=1 // pred_region
      %3119 = dma.done [#allocation4], 1536
    $region25: #{tpu_custom_call.1} parent=1 // pred_fallthru
      _
    %3120 = vsyncpa [#allocation3], 1
    %3121 = vsyncpa [#allocation4], 1
    %3122 = vsyncpa [#allocation5], 1

</llo_original>
